<compile_context>
chip_gen: v6e
topology: v6e:2x2x1
jax: 0.10.0
libtpu: 0.0.40
codegen_flags: <defaults>
</compile_context>

<pallas_src>
import functools
import math

import jax
import jax.numpy as jnp
from jax import lax
from jax.experimental import pallas as pl
from jax.experimental.pallas import tpu as pltpu

EPS = 1e-5          # nn.LayerNorm default
MASK_VALUE = -1e6   # matches masked_softmax in the PyTorch reference


# ----------------------------------------------------------------------------
# small helpers
# ----------------------------------------------------------------------------
def _pick_block_rows(n_rows, target=512, align=8):
    """Largest sublane-aligned tile <= target that evenly divides n_rows and
    leaves at least 2 grid steps (so both v7x TensorCores get work and the
    BlockSpec pipeline can double-buffer). Falls back to a single full-extent
    block (always legal) when rows are ragged."""
    if n_rows % align != 0:
        return n_rows
    cap = min(target, max(align, (n_rows // 2 // align) * align))
    br = (cap // align) * align
    while br >= align:
        if n_rows % br == 0:
            return br
        br -= align
    return n_rows


def _mosaic_params(bytes_needed, semantics=("parallel",)):
    """Raise the scoped-VMEM limit only when the working set actually needs it.
    Cap per-generation at ~75% of physical VMEM (v7x: ~48 MiB, v5e/v6e: ~96 MiB)."""
    limit = None
    padded = int(bytes_needed * 1.25)
    if padded > 32 * 1024 * 1024:
        try:
            physical = pltpu.get_tpu_info().vmem_capacity_bytes
        except Exception:
            physical = 64 * 1024 * 1024  # conservative (v7x) fallback
        limit = min(padded, int(physical * 0.75))
    return pltpu.CompilerParams(dimension_semantics=semantics,
                                vmem_limit_bytes=limit)


def _layernorm_f32(z, g, b):
    """Two-pass LayerNorm on an f32 tile (resident; one extra VPU pass)."""
    mean = jnp.mean(z, axis=-1, keepdims=True)
    c = z - mean
    var = jnp.mean(c * c, axis=-1, keepdims=True)
    return c * lax.rsqrt(var + EPS) * g + b


# ----------------------------------------------------------------------------
# scale-by-sqrt(H) + positional-encoding add
# ----------------------------------------------------------------------------
def _scale_posenc_kernel(x_ref, p_ref, o_ref, *, scale):
    out = x_ref[...].astype(jnp.float32) * scale + p_ref[...].astype(jnp.float32)
    o_ref[...] = out.astype(o_ref.dtype)


def scale_and_add_pos_encoding(x, pos):
    """x: [B, S, H]; pos: [S, H]; returns x*sqrt(H) + pos."""
    B, S, H = x.shape
    kernel = functools.partial(_scale_posenc_kernel, scale=float(math.sqrt(H)))
    return pl.pallas_call(
        kernel,
        out_shape=jax.ShapeDtypeStruct((B, S, H), x.dtype),
        grid_spec=pltpu.PrefetchScalarGridSpec(
            num_scalar_prefetch=0,
            grid=(B,),
            in_specs=[
                pl.BlockSpec((1, S, H), lambda b: (b, 0, 0)),
                pl.BlockSpec((S, H), lambda b: (0, 0)),
            ],
            out_specs=pl.BlockSpec((1, S, H), lambda b: (b, 0, 0)),
        ),
        compiler_params=pltpu.CompilerParams(
            dimension_semantics=("parallel",)),
    )(x, pos)


# ----------------------------------------------------------------------------
# fused QKV projection: out = x @ [Wq | Wk | Wv]   ([R, 3H] lane-dense output)
# ----------------------------------------------------------------------------
def _qkv_kernel(x_ref, w_ref, o_ref):
    acc = jnp.dot(x_ref[...], w_ref[...], preferred_element_type=jnp.float32)
    o_ref[...] = acc.astype(o_ref.dtype)


def qkv_projection(x2, wqkv, *, block_rows=None):
    """x2: [R, H]; wqkv: [H, 3H] (concatenated Wq|Wk|Wv, no bias)."""
    R, IN = x2.shape
    OUT = wqkv.shape[1]
    if block_rows is None:
        block_rows = _pick_block_rows(R)
    assert R % block_rows == 0
    grid = (R // block_rows,)

    itemsize = x2.dtype.itemsize
    # row tiles (in + out) double-buffered + weight (count it double-buffered too)
    bytes_needed = 2 * block_rows * (IN + OUT) * itemsize + 2 * IN * OUT * itemsize

    return pl.pallas_call(
        _qkv_kernel,
        out_shape=jax.ShapeDtypeStruct((R, OUT), x2.dtype),
        grid_spec=pltpu.PrefetchScalarGridSpec(
            num_scalar_prefetch=0,
            grid=grid,
            in_specs=[
                pl.BlockSpec((block_rows, IN), lambda i: (i, 0)),
                pl.BlockSpec((IN, OUT), lambda i: (0, 0)),
            ],
            out_specs=pl.BlockSpec((block_rows, OUT), lambda i: (i, 0)),
        ),
        compiler_params=_mosaic_params(bytes_needed),
    )(x2, wqkv)


# ----------------------------------------------------------------------------
# head-aware masked attention, one batch per grid step, lane-dense output
# ----------------------------------------------------------------------------
def _attention_kernel(vl_ref, qkv_ref, o_ref, *, num_heads, head_dim, scale):
    b = pl.program_id(0)
    S = qkv_ref.shape[1]
    H = num_heads * head_dim
    qkv = qkv_ref[0]                                   # [S, 3H], native dtype
    vl = vl_ref[b]
    col = lax.broadcasted_iota(jnp.int32, (S, S), 1)
    mask = col < vl
    outs = []
    for h in range(num_heads):                          # static loop over heads
        q = qkv[:, h * head_dim:(h + 1) * head_dim]
        k = qkv[:, H + h * head_dim:H + (h + 1) * head_dim]
        v = qkv[:, 2 * H + h * head_dim:2 * H + (h + 1) * head_dim]
        # scores = (Q @ K^T) * scale, native-dtype operands, f32 accumulation
        s = lax.dot_general(q, k, (((1,), (1,)), ((), ())),
                            preferred_element_type=jnp.float32) * scale
        s = jnp.where(mask, s, MASK_VALUE)
        m = jnp.max(s, axis=-1, keepdims=True)
        p = jnp.exp(s - m)
        inv = pl.reciprocal(jnp.sum(p, axis=-1, keepdims=True), approx=True)
        w = (p * inv).astype(v.dtype)                   # probs back to v dtype
        outs.append(jnp.dot(w, v, preferred_element_type=jnp.float32))
    # heads concatenated along the lane dim -> one full [S, H] store
    o_ref[0] = jnp.concatenate(outs, axis=-1).astype(o_ref.dtype)


def masked_attention(qkv, valid_lens, num_heads):
    """qkv: [B, S, 3H] (Q|K|V concatenated); valid_lens: [B] int32.
    Returns [B, S, H] with heads concatenated along the feature dim
    (identical layout to transpose_results in the PyTorch reference)."""
    B, S, H3 = qkv.shape
    H = H3 // 3
    Dh = H // num_heads
    kernel = functools.partial(_attention_kernel, num_heads=num_heads,
                               head_dim=Dh, scale=1.0 / math.sqrt(Dh))
    return pl.pallas_call(
        kernel,
        out_shape=jax.ShapeDtypeStruct((B, S, H), qkv.dtype),
        grid_spec=pltpu.PrefetchScalarGridSpec(
            num_scalar_prefetch=1,                      # valid_lens -> SMEM
            grid=(B,),
            in_specs=[
                pl.BlockSpec((1, S, H3), lambda b, vl: (b, 0, 0)),
            ],
            out_specs=pl.BlockSpec((1, S, H), lambda b, vl: (b, 0, 0)),
        ),
        compiler_params=pltpu.CompilerParams(
            dimension_semantics=("parallel",)),
    )(valid_lens.astype(jnp.int32), qkv)


# ----------------------------------------------------------------------------
# fused: W_o projection + residual add + LayerNorm
# ----------------------------------------------------------------------------
def _wo_addnorm_kernel(a_ref, w_ref, res_ref, g_ref, b_ref, o_ref):
    y = jnp.dot(a_ref[...], w_ref[...], preferred_element_type=jnp.float32)
    z = res_ref[...].astype(jnp.float32) + y
    out = _layernorm_f32(z, g_ref[...].astype(jnp.float32),
                         b_ref[...].astype(jnp.float32))
    o_ref[...] = out.astype(o_ref.dtype)


def wo_addnorm(attn2, wo, res2, gamma, beta, *, block_rows=None):
    """attn2, res2: [R, H]; wo: [H, H]; gamma, beta: [H]."""
    R, H = attn2.shape
    if block_rows is None:
        block_rows = _pick_block_rows(R)
    assert R % block_rows == 0
    grid = (R // block_rows,)

    itemsize = attn2.dtype.itemsize
    bytes_needed = (2 * 3 * block_rows * H * itemsize    # attn, res, out tiles
                    + 2 * H * H * itemsize               # weight (double-buffered)
                    + 2 * 2 * H * 4)                     # gamma/beta

    return pl.pallas_call(
        _wo_addnorm_kernel,
        out_shape=jax.ShapeDtypeStruct((R, H), attn2.dtype),
        grid_spec=pltpu.PrefetchScalarGridSpec(
            num_scalar_prefetch=0,
            grid=grid,
            in_specs=[
                pl.BlockSpec((block_rows, H), lambda i: (i, 0)),
                pl.BlockSpec((H, H), lambda i: (0, 0)),
                pl.BlockSpec((block_rows, H), lambda i: (i, 0)),
                pl.BlockSpec((1, H), lambda i: (0, 0)),
                pl.BlockSpec((1, H), lambda i: (0, 0)),
            ],
            out_specs=pl.BlockSpec((block_rows, H), lambda i: (i, 0)),
        ),
        compiler_params=_mosaic_params(bytes_needed),
    )(attn2, wo, res2, gamma.reshape(1, H), beta.reshape(1, H))


# ----------------------------------------------------------------------------
# fused: PositionWiseFFN (dense1 -> ReLU -> dense2) + residual add + LayerNorm
# ----------------------------------------------------------------------------
def _ffn_addnorm_kernel(x_ref, w1_ref, b1_ref, w2_ref, b2_ref, g_ref, b_ref,
                        o_ref):
    x = x_ref[...]
    h = jnp.dot(x, w1_ref[...], preferred_element_type=jnp.float32)
    h = jnp.maximum(h + b1_ref[...].astype(jnp.float32), 0.0)
    # keep the second matmul on the fast native-dtype MXU path
    y = jnp.dot(h.astype(w2_ref.dtype), w2_ref[...],
                preferred_element_type=jnp.float32)
    y = y + b2_ref[...].astype(jnp.float32)
    z = x.astype(jnp.float32) + y
    out = _layernorm_f32(z, g_ref[...].astype(jnp.float32),
                         b_ref[...].astype(jnp.float32))
    o_ref[...] = out.astype(o_ref.dtype)


def ffn_addnorm(x2, w1, b1, w2, b2, gamma, beta, *, block_rows=None):
    """x2: [R, H]; w1: [H, HID]; w2: [HID, H]; gamma, beta: [H]."""
    R, H = x2.shape
    HID = w1.shape[1]
    if block_rows is None:
        block_rows = _pick_block_rows(R)
    assert R % block_rows == 0
    grid = (R // block_rows,)

    itemsize = x2.dtype.itemsize
    bytes_needed = (2 * 2 * block_rows * H * itemsize        # x, out tiles
                    + block_rows * HID * 4                   # f32 intermediate
                    + 2 * (H * HID + HID * H) * itemsize     # weights (dbl-buf)
                    + 2 * (HID + 3 * H) * 4)                 # biases + gamma/beta

    return pl.pallas_call(
        _ffn_addnorm_kernel,
        out_shape=jax.ShapeDtypeStruct((R, H), x2.dtype),
        grid_spec=pltpu.PrefetchScalarGridSpec(
            num_scalar_prefetch=0,
            grid=grid,
            in_specs=[
                pl.BlockSpec((block_rows, H), lambda i: (i, 0)),
                pl.BlockSpec((H, HID), lambda i: (0, 0)),
                pl.BlockSpec((1, HID), lambda i: (0, 0)),
                pl.BlockSpec((HID, H), lambda i: (0, 0)),
                pl.BlockSpec((1, H), lambda i: (0, 0)),
                pl.BlockSpec((1, H), lambda i: (0, 0)),
                pl.BlockSpec((1, H), lambda i: (0, 0)),
            ],
            out_specs=pl.BlockSpec((block_rows, H), lambda i: (i, 0)),
        ),
        compiler_params=_mosaic_params(bytes_needed),
    )(x2, w1, b1.reshape(1, HID), w2, b2.reshape(1, H),
      gamma.reshape(1, H), beta.reshape(1, H))


# ----------------------------------------------------------------------------
# Encoder forward (Pallas-composed)
# ----------------------------------------------------------------------------
def encoder_block(x, valid_lens, p, num_heads):
    B, S, H = x.shape
    x2 = x.reshape(B * S, H)
    wqkv = jnp.concatenate([p["wq"], p["wk"], p["wv"]], axis=1)   # [H, 3H]
    qkv = qkv_projection(x2, wqkv).reshape(B, S, 3 * H)
    attn = masked_attention(qkv, valid_lens, num_heads)            # [B, S, H]
    x2 = wo_addnorm(attn.reshape(B * S, H), p["wo"], x2,
                    p["ln1_g"], p["ln1_b"])
    x2 = ffn_addnorm(x2, p["w1"], p["b1"], p["w2"], p["b2"],
                     p["ln2_g"], p["ln2_b"])
    return x2.reshape(B, S, H)


def encoder_forward(params, tokens, valid_lens, *, num_heads):
    emb = params["embedding"][tokens]              # XLA gather (see TODO above)
    x = scale_and_add_pos_encoding(emb, params["pos"][: tokens.shape[1]])
    for layer in params["layers"]:
        x = encoder_block(x, valid_lens, layer, num_heads)
    return x


# ----------------------------------------------------------------------------
# Parameter construction + pure-JAX reference
# ----------------------------------------------------------------------------
def make_pos_encoding(max_steps, num_hiddens):
    i = jnp.arange(max_steps, dtype=jnp.float32)[:, None]
    j = jnp.arange(0, num_hiddens, 2, dtype=jnp.float32)[None, :]
    angles = i / jnp.power(10000.0, j / num_hiddens)
    P = jnp.zeros((max_steps, num_hiddens), jnp.float32)
    P = P.at[:, 0::2].set(jnp.sin(angles))
    P = P.at[:, 1::2].set(jnp.cos(angles))
    return P


def init_params(key, vocab, num_layers, num_hiddens, ffn_hiddens,
                max_steps=1000):
    keys = jax.random.split(key, 1 + num_layers)
    params = {
        "embedding": 0.1 * jax.random.normal(keys[0], (vocab, num_hiddens),
                                             jnp.float32),
        "pos": make_pos_encoding(max_steps, num_hiddens),
        "layers": [],
    }
    s_in = 1.0 / math.sqrt(num_hiddens)
    s_hid = 1.0 / math.sqrt(ffn_hiddens)
    for l in range(num_layers):
        ks = jax.random.split(keys[1 + l], 8)
        params["layers"].append({
            "wq": s_in * jax.random.normal(ks[0], (num_hiddens, num_hiddens)),
            "wk": s_in * jax.random.normal(ks[1], (num_hiddens, num_hiddens)),
            "wv": s_in * jax.random.normal(ks[2], (num_hiddens, num_hiddens)),
            "wo": s_in * jax.random.normal(ks[3], (num_hiddens, num_hiddens)),
            "ln1_g": jnp.ones((num_hiddens,), jnp.float32),
            "ln1_b": jnp.zeros((num_hiddens,), jnp.float32),
            "w1": s_in * jax.random.normal(ks[4], (num_hiddens, ffn_hiddens)),
            "b1": 0.01 * jax.random.normal(ks[5], (ffn_hiddens,)),
            "w2": s_hid * jax.random.normal(ks[6], (ffn_hiddens, num_hiddens)),
            "b2": 0.01 * jax.random.normal(ks[7], (num_hiddens,)),
            "ln2_g": jnp.ones((num_hiddens,), jnp.float32),
            "ln2_b": jnp.zeros((num_hiddens,), jnp.float32),
        })
    return params


def _transpose_qkv_ref(x, num_heads):
    B, S, H = x.shape
    x = x.reshape(B, S, num_heads, H // num_heads)
    x = jnp.transpose(x, (0, 2, 1, 3))
    return x.reshape(B * num_heads, S, H // num_heads)


def _transpose_results_ref(x, num_heads):
    BH, S, Dh = x.shape
    B = BH // num_heads
    x = x.reshape(B, num_heads, S, Dh)
    x = jnp.transpose(x, (0, 2, 1, 3))
    return x.reshape(B, S, num_heads * Dh)


def _layernorm_ref(z, g, b):
    z = z.astype(jnp.float32)
    mean = jnp.mean(z, axis=-1, keepdims=True)
    var = jnp.mean((z - mean) ** 2, axis=-1, keepdims=True)
    return (z - mean) / jnp.sqrt(var + EPS) * g + b


def encoder_ref(params, tokens, valid_lens, *, num_heads):
    H = params["embedding"].shape[1]
    x = (params["embedding"][tokens] * math.sqrt(H)
         + params["pos"][: tokens.shape[1]][None])
    for p in params["layers"]:
        B, S, _ = x.shape
        q = _transpose_qkv_ref(x @ p["wq"], num_heads)
        k = _transpose_qkv_ref(x @ p["wk"], num_heads)
        v = _transpose_qkv_ref(x @ p["wv"], num_heads)
        vl = jnp.repeat(valid_lens, num_heads)
        dh = q.shape[-1]
        scores = jnp.einsum("bqd,bkd->bqk", q, k) / math.sqrt(dh)
        col = jnp.arange(S)[None, None, :]
        scores = jnp.where(col < vl[:, None, None], scores, MASK_VALUE)
        w = jax.nn.softmax(scores, axis=-1)
        attn = _transpose_results_ref(jnp.einsum("bqk,bkd->bqd", w, v),
                                      num_heads)
        y = attn @ p["wo"]
        x = _layernorm_ref(x + y, p["ln1_g"], p["ln1_b"])
        h = jnp.maximum(x @ p["w1"] + p["b1"], 0.0)
        y = h @ p["w2"] + p["b2"]
        x = _layernorm_ref(x + y, p["ln2_g"], p["ln2_b"])
    return x


# ----------------------------------------------------------------------------
# demo / self-check
# ----------------------------------------------------------------------------
if __name__ == "__main__":
    VOCAB = 64
    NUM_LAYERS = 2
    NUM_HIDDENS = 128     # lane-dense (multiple of 128)
    NUM_HEADS = 4         # query/key/value size = 32 per head
    FFN_HIDDENS = 256
    BATCH = 2
    NUM_STEPS = 8

    key = jax.random.PRNGKey(0)
    k_params, k_tok = jax.random.split(key)
    params = init_params(k_params, VOCAB, NUM_LAYERS, NUM_HIDDENS, FFN_HIDDENS)
    tokens = jax.random.randint(k_tok, (BATCH, NUM_STEPS), 0, VOCAB,
                                dtype=jnp.int32)
    valid_lens = jnp.array([NUM_STEPS, 5], dtype=jnp.int32)

    fwd = jax.jit(functools.partial(encoder_forward, num_heads=NUM_HEADS))
    out = jax.block_until_ready(fwd(params, tokens, valid_lens))

    ref = encoder_ref(params, tokens, valid_lens, num_heads=NUM_HEADS)
    assert out.shape == (BATCH, NUM_STEPS, NUM_HIDDENS)
    assert jnp.allclose(out, ref, atol=2e-2, rtol=2e-2), (
        f"mismatch vs reference: max|diff|={jnp.max(jnp.abs(out - ref))}")

    print("KERNEL_OK")
</pallas_src>

<mosaic_0001>
module attributes {stable_mosaic.version = 11 : i64} {
  func.func @_wo_addnorm_kernel(%arg0: i32, %arg1: memref<8x128xf32, #tpu.memory_space<vmem>>, %arg2: memref<128x128xf32, #tpu.memory_space<vmem>>, %arg3: memref<8x128xf32, #tpu.memory_space<vmem>>, %arg4: memref<1x128xf32, #tpu.memory_space<vmem>>, %arg5: memref<1x128xf32, #tpu.memory_space<vmem>>, %arg6: memref<8x128xf32, #tpu.memory_space<vmem>>) attributes {dimension_semantics = [#tpu.dimension_semantics<parallel>], iteration_bounds = array<i64: 2>, scalar_prefetch = 0 : i64, scratch_operands = 0 : i64, tpu.core_type = #tpu.core_type<tc>, window_params = [{transform_indices = @transform_0, window_bounds = array<i64: 8, 128>}, {pipeline_mode = #tpu.pipeline_mode<synchronous>, transform_indices = @transform_1, window_bounds = array<i64: 128, 128>}, {transform_indices = @transform_2, window_bounds = array<i64: 8, 128>}, {pipeline_mode = #tpu.pipeline_mode<synchronous>, transform_indices = @transform_3, window_bounds = array<i64: 1, 128>}, {pipeline_mode = #tpu.pipeline_mode<synchronous>, transform_indices = @transform_4, window_bounds = array<i64: 1, 128>}, {transform_indices = @transform_5, window_bounds = array<i64: 8, 128>}]} {
    %c0 = arith.constant 0 : index
    %c0_0 = arith.constant 0 : index
    %0 = vector.load %arg1[%c0, %c0_0] : memref<8x128xf32, #tpu.memory_space<vmem>>, vector<8x128xf32>
    %c0_1 = arith.constant 0 : index
    %c0_2 = arith.constant 0 : index
    %1 = vector.load %arg2[%c0_1, %c0_2] : memref<128x128xf32, #tpu.memory_space<vmem>>, vector<128x128xf32>
    %cst = arith.constant dense<0.000000e+00> : vector<8x128xf32>
    %2 = tpu.matmul %0, %1, %cst {dimension_numbers = #tpu.dot_dimension_numbers<[1], [0], [0], [1], [0, 0, 1, 1], [], []>} : vector<8x128xf32>, vector<128x128xf32>, vector<8x128xf32> -> vector<8x128xf32>
    %c0_3 = arith.constant 0 : index
    %c0_4 = arith.constant 0 : index
    %3 = vector.load %arg3[%c0_3, %c0_4] : memref<8x128xf32, #tpu.memory_space<vmem>>, vector<8x128xf32>
    %4 = arith.addf %3, %2 : vector<8x128xf32>
    %c0_5 = arith.constant 0 : index
    %c0_6 = arith.constant 0 : index
    %5 = vector.load %arg4[%c0_5, %c0_6] : memref<1x128xf32, #tpu.memory_space<vmem>>, vector<1x128xf32>
    %c0_7 = arith.constant 0 : index
    %c0_8 = arith.constant 0 : index
    %6 = vector.load %arg5[%c0_7, %c0_8] : memref<1x128xf32, #tpu.memory_space<vmem>>, vector<1x128xf32>
    %cst_9 = arith.constant dense<0.000000e+00> : vector<8xf32>
    %7 = vector.multi_reduction <add>, %4, %cst_9 [1] : vector<8x128xf32> to vector<8xf32>
    %8 = vector.shape_cast %7 : vector<8xf32> to vector<8x1xf32>
    %cst_10 = arith.constant 1.280000e+02 : f32
    %9 = vector.broadcast %cst_10 : f32 to vector<8x1xf32>
    %10 = arith.divf %8, %9 : vector<8x1xf32>
    %11 = vector.broadcast %10 : vector<8x1xf32> to vector<8x128xf32>
    %12 = arith.subf %4, %11 : vector<8x128xf32>
    %13 = arith.mulf %12, %12 : vector<8x128xf32>
    %cst_11 = arith.constant dense<0.000000e+00> : vector<8xf32>
    %14 = vector.multi_reduction <add>, %13, %cst_11 [1] : vector<8x128xf32> to vector<8xf32>
    %15 = vector.shape_cast %14 : vector<8xf32> to vector<8x1xf32>
    %cst_12 = arith.constant 1.280000e+02 : f32
    %16 = vector.broadcast %cst_12 : f32 to vector<8x1xf32>
    %17 = arith.divf %15, %16 : vector<8x1xf32>
    %cst_13 = arith.constant 9.99999974E-6 : f32
    %18 = vector.broadcast %cst_13 : f32 to vector<8x1xf32>
    %19 = arith.addf %17, %18 : vector<8x1xf32>
    %20 = math.rsqrt %19 : vector<8x1xf32>
    %21 = vector.broadcast %20 : vector<8x1xf32> to vector<8x128xf32>
    %22 = arith.mulf %12, %21 : vector<8x128xf32>
    %23 = vector.broadcast %5 : vector<1x128xf32> to vector<8x128xf32>
    %24 = arith.mulf %22, %23 : vector<8x128xf32>
    %25 = vector.broadcast %6 : vector<1x128xf32> to vector<8x128xf32>
    %26 = arith.addf %24, %25 : vector<8x128xf32>
    %c0_14 = arith.constant 0 : index
    %c0_15 = arith.constant 0 : index
    %27 = vector.load %arg6[%c0_14, %c0_15] : memref<8x128xf32, #tpu.memory_space<vmem>>, vector<8x128xf32>
    tpu.vector_store %arg6[%c0_14, %c0_15], %26 {strides = array<i32>} : memref<8x128xf32, #tpu.memory_space<vmem>>, vector<8x128xf32>,
    return
  }
  func.func @transform_0(%arg0: i32) -> (i32, i32) {
    %c0_i32 = arith.constant 0 : i32
    %c0_i32_0 = arith.constant 0 : i32
    return %arg0, %c0_i32 : i32, i32
  }
  func.func @transform_1(%arg0: i32) -> (i32, i32) {
    %c0_i32 = arith.constant 0 : i32
    %c0_i32_0 = arith.constant 0 : i32
    %c0_i32_1 = arith.constant 0 : i32
    return %c0_i32, %c0_i32_0 : i32, i32
  }
  func.func @transform_2(%arg0: i32) -> (i32, i32) {
    %c0_i32 = arith.constant 0 : i32
    %c0_i32_0 = arith.constant 0 : i32
    return %arg0, %c0_i32 : i32, i32
  }
  func.func @transform_3(%arg0: i32) -> (i32, i32) {
    %c0_i32 = arith.constant 0 : i32
    %c0_i32_0 = arith.constant 0 : i32
    %c0_i32_1 = arith.constant 0 : i32
    return %c0_i32, %c0_i32_0 : i32, i32
  }
  func.func @transform_4(%arg0: i32) -> (i32, i32) {
    %c0_i32 = arith.constant 0 : i32
    %c0_i32_0 = arith.constant 0 : i32
    %c0_i32_1 = arith.constant 0 : i32
    return %c0_i32, %c0_i32_0 : i32, i32
  }
  func.func @transform_5(%arg0: i32) -> (i32, i32) {
    %c0_i32 = arith.constant 0 : i32
    %c0_i32_0 = arith.constant 0 : i32
    return %arg0, %c0_i32 : i32, i32
  }
}

module attributes {stable_mosaic.version = 11 : i64} {
  func.func @_scale_posenc_kernel(%arg0: i32, %arg1: memref<1x8x128xf32, #tpu.memory_space<vmem>>, %arg2: memref<8x128xf32, #tpu.memory_space<vmem>>, %arg3: memref<1x8x128xf32, #tpu.memory_space<vmem>>) attributes {dimension_semantics = [#tpu.dimension_semantics<parallel>], iteration_bounds = array<i64: 2>, scalar_prefetch = 0 : i64, scratch_operands = 0 : i64, tpu.core_type = #tpu.core_type<tc>, window_params = [{transform_indices = @transform_0, window_bounds = array<i64: 1, 8, 128>}, {pipeline_mode = #tpu.pipeline_mode<synchronous>, transform_indices = @transform_1, window_bounds = array<i64: 8, 128>}, {transform_indices = @transform_2, window_bounds = array<i64: 1, 8, 128>}]} {
    %c0 = arith.constant 0 : index
    %c0_0 = arith.constant 0 : index
    %c0_1 = arith.constant 0 : index
    %0 = vector.load %arg1[%c0, %c0_0, %c0_1] : memref<1x8x128xf32, #tpu.memory_space<vmem>>, vector<1x8x128xf32>
    %cst = arith.constant 11.3137083 : f32
    %1 = vector.broadcast %cst : f32 to vector<1x8x128xf32>
    %2 = arith.mulf %0, %1 : vector<1x8x128xf32>
    %c0_2 = arith.constant 0 : index
    %c0_3 = arith.constant 0 : index
    %3 = vector.load %arg2[%c0_2, %c0_3] : memref<8x128xf32, #tpu.memory_space<vmem>>, vector<8x128xf32>
    %4 = vector.shape_cast %3 : vector<8x128xf32> to vector<1x8x128xf32>
    %5 = arith.addf %2, %4 : vector<1x8x128xf32>
    %c0_4 = arith.constant 0 : index
    %c0_5 = arith.constant 0 : index
    %c0_6 = arith.constant 0 : index
    %6 = vector.load %arg3[%c0_4, %c0_5, %c0_6] : memref<1x8x128xf32, #tpu.memory_space<vmem>>, vector<1x8x128xf32>
    tpu.vector_store %arg3[%c0_4, %c0_5, %c0_6], %5 {strides = array<i32>} : memref<1x8x128xf32, #tpu.memory_space<vmem>>, vector<1x8x128xf32>,
    return
  }
  func.func @transform_0(%arg0: i32) -> (i32, i32, i32) {
    %c0_i32 = arith.constant 0 : i32
    %c0_i32_0 = arith.constant 0 : i32
    %c0_i32_1 = arith.constant 0 : i32
    return %arg0, %c0_i32, %c0_i32_0 : i32, i32, i32
  }
  func.func @transform_1(%arg0: i32) -> (i32, i32) {
    %c0_i32 = arith.constant 0 : i32
    %c0_i32_0 = arith.constant 0 : i32
    %c0_i32_1 = arith.constant 0 : i32
    return %c0_i32, %c0_i32_0 : i32, i32
  }
  func.func @transform_2(%arg0: i32) -> (i32, i32, i32) {
    %c0_i32 = arith.constant 0 : i32
    %c0_i32_0 = arith.constant 0 : i32
    %c0_i32_1 = arith.constant 0 : i32
    return %arg0, %c0_i32, %c0_i32_0 : i32, i32, i32
  }
}

module attributes {stable_mosaic.version = 11 : i64} {
  func.func @_qkv_kernel(%arg0: i32, %arg1: memref<8x128xf32, #tpu.memory_space<vmem>>, %arg2: memref<128x384xf32, #tpu.memory_space<vmem>>, %arg3: memref<8x384xf32, #tpu.memory_space<vmem>>) attributes {dimension_semantics = [#tpu.dimension_semantics<parallel>], iteration_bounds = array<i64: 2>, scalar_prefetch = 0 : i64, scratch_operands = 0 : i64, tpu.core_type = #tpu.core_type<tc>, window_params = [{transform_indices = @transform_0, window_bounds = array<i64: 8, 128>}, {pipeline_mode = #tpu.pipeline_mode<synchronous>, transform_indices = @transform_1, window_bounds = array<i64: 128, 384>}, {transform_indices = @transform_2, window_bounds = array<i64: 8, 384>}]} {
    %c0 = arith.constant 0 : index
    %c0_0 = arith.constant 0 : index
    %0 = vector.load %arg1[%c0, %c0_0] : memref<8x128xf32, #tpu.memory_space<vmem>>, vector<8x128xf32>
    %c0_1 = arith.constant 0 : index
    %c0_2 = arith.constant 0 : index
    %1 = vector.load %arg2[%c0_1, %c0_2] : memref<128x384xf32, #tpu.memory_space<vmem>>, vector<128x384xf32>
    %cst = arith.constant dense<0.000000e+00> : vector<8x384xf32>
    %2 = tpu.matmul %0, %1, %cst {dimension_numbers = #tpu.dot_dimension_numbers<[1], [0], [0], [1], [0, 0, 1, 1], [], []>} : vector<8x128xf32>, vector<128x384xf32>, vector<8x384xf32> -> vector<8x384xf32>
    %c0_3 = arith.constant 0 : index
    %c0_4 = arith.constant 0 : index
    %3 = vector.load %arg3[%c0_3, %c0_4] : memref<8x384xf32, #tpu.memory_space<vmem>>, vector<8x384xf32>
    tpu.vector_store %arg3[%c0_3, %c0_4], %2 {strides = array<i32>} : memref<8x384xf32, #tpu.memory_space<vmem>>, vector<8x384xf32>,
    return
  }
  func.func @transform_0(%arg0: i32) -> (i32, i32) {
    %c0_i32 = arith.constant 0 : i32
    %c0_i32_0 = arith.constant 0 : i32
    return %arg0, %c0_i32 : i32, i32
  }
  func.func @transform_1(%arg0: i32) -> (i32, i32) {
    %c0_i32 = arith.constant 0 : i32
    %c0_i32_0 = arith.constant 0 : i32
    %c0_i32_1 = arith.constant 0 : i32
    return %c0_i32, %c0_i32_0 : i32, i32
  }
  func.func @transform_2(%arg0: i32) -> (i32, i32) {
    %c0_i32 = arith.constant 0 : i32
    %c0_i32_0 = arith.constant 0 : i32
    return %arg0, %c0_i32 : i32, i32
  }
}

module attributes {stable_mosaic.version = 11 : i64} {
  func.func @_attention_kernel(%arg0: i32, %arg1: memref<2xi32, #tpu.memory_space<smem>>, %arg2: memref<1x8x384xf32, #tpu.memory_space<vmem>>, %arg3: memref<1x8x128xf32, #tpu.memory_space<vmem>>) attributes {dimension_semantics = [#tpu.dimension_semantics<parallel>], iteration_bounds = array<i64: 2>, scalar_prefetch = 1 : i64, scratch_operands = 0 : i64, tpu.core_type = #tpu.core_type<tc>, window_params = [{transform_indices = @transform_0, window_bounds = array<i64: 1, 8, 384>}, {transform_indices = @transform_1, window_bounds = array<i64: 1, 8, 128>}]} {
    %c0 = arith.constant 0 : index
    %c0_0 = arith.constant 0 : index
    %c0_1 = arith.constant 0 : index
    %0 = vector.load %arg2[%c0, %c0_0, %c0_1] : memref<1x8x384xf32, #tpu.memory_space<vmem>>, vector<1x8x384xf32>
    %1 = vector.shape_cast %0 : vector<1x8x384xf32> to vector<8x384xf32>
    %2 = arith.index_cast %arg0 : i32 to index
    %3 = memref.load %arg1[%2] : memref<2xi32, #tpu.memory_space<smem>>
    %4 = tpu.iota {dimensions = array<i32: 1>} : vector<8x8xi32>
    %5 = vector.broadcast %3 : i32 to vector<8x8xi32>
    %6 = arith.cmpi slt, %4, %5 : vector<8x8xi32>
    %7 = vector.extract_strided_slice %1 {offsets = [0, 0], sizes = [8, 32], strides = [1, 1]} : vector<8x384xf32> to vector<8x32xf32>
    %8 = vector.extract_strided_slice %1 {offsets = [0, 128], sizes = [8, 32], strides = [1, 1]} : vector<8x384xf32> to vector<8x32xf32>
    %9 = vector.extract_strided_slice %1 {offsets = [0, 256], sizes = [8, 32], strides = [1, 1]} : vector<8x384xf32> to vector<8x32xf32>
    %cst = arith.constant dense<0.000000e+00> : vector<8x8xf32>
    %10 = tpu.matmul %7, %8, %cst {dimension_numbers = #tpu.dot_dimension_numbers<[1], [1], [0], [0], [0, 0, 1, 0], [], []>} : vector<8x32xf32>, vector<8x32xf32>, vector<8x8xf32> -> vector<8x8xf32>
    %cst_2 = arith.constant 0.176776692 : f32
    %11 = vector.broadcast %cst_2 : f32 to vector<8x8xf32>
    %12 = arith.mulf %10, %11 : vector<8x8xf32>
    %cst_3 = arith.constant -1.000000e+06 : f32
    %13 = vector.broadcast %cst_3 : f32 to vector<8x8xf32>
    %14 = arith.select %6, %12, %13 : vector<8x8xi1>, vector<8x8xf32>
    %cst_4 = arith.constant dense<0xFF800000> : vector<8xf32>
    %15 = vector.multi_reduction <maximumf>, %14, %cst_4 [1] : vector<8x8xf32> to vector<8xf32>
    %16 = vector.shape_cast %15 : vector<8xf32> to vector<8x1xf32>
    %17 = vector.broadcast %16 : vector<8x1xf32> to vector<8x8xf32>
    %18 = arith.subf %14, %17 : vector<8x8xf32>
    %19 = math.exp %18 : vector<8x8xf32>
    %cst_5 = arith.constant dense<0.000000e+00> : vector<8xf32>
    %20 = vector.multi_reduction <add>, %19, %cst_5 [1] : vector<8x8xf32> to vector<8xf32>
    %21 = vector.shape_cast %20 : vector<8xf32> to vector<8x1xf32>
    %22 = tpu.reciprocal %21 {approx = true} : vector<8x1xf32> -> vector<8x1xf32>
    %23 = vector.broadcast %22 : vector<8x1xf32> to vector<8x8xf32>
    %24 = arith.mulf %19, %23 : vector<8x8xf32>
    %cst_6 = arith.constant dense<0.000000e+00> : vector<8x32xf32>
    %25 = tpu.matmul %24, %9, %cst_6 {dimension_numbers = #tpu.dot_dimension_numbers<[1], [0], [0], [1], [0, 0, 1, 1], [], []>} : vector<8x8xf32>, vector<8x32xf32>, vector<8x32xf32> -> vector<8x32xf32>
    %26 = vector.extract_strided_slice %1 {offsets = [0, 32], sizes = [8, 32], strides = [1, 1]} : vector<8x384xf32> to vector<8x32xf32>
    %27 = vector.extract_strided_slice %1 {offsets = [0, 160], sizes = [8, 32], strides = [1, 1]} : vector<8x384xf32> to vector<8x32xf32>
    %28 = vector.extract_strided_slice %1 {offsets = [0, 288], sizes = [8, 32], strides = [1, 1]} : vector<8x384xf32> to vector<8x32xf32>
    %cst_7 = arith.constant dense<0.000000e+00> : vector<8x8xf32>
    %29 = tpu.matmul %26, %27, %cst_7 {dimension_numbers = #tpu.dot_dimension_numbers<[1], [1], [0], [0], [0, 0, 1, 0], [], []>} : vector<8x32xf32>, vector<8x32xf32>, vector<8x8xf32> -> vector<8x8xf32>
    %cst_8 = arith.constant 0.176776692 : f32
    %30 = vector.broadcast %cst_8 : f32 to vector<8x8xf32>
    %31 = arith.mulf %29, %30 : vector<8x8xf32>
    %cst_9 = arith.constant -1.000000e+06 : f32
    %32 = vector.broadcast %cst_9 : f32 to vector<8x8xf32>
    %33 = arith.select %6, %31, %32 : vector<8x8xi1>, vector<8x8xf32>
    %cst_10 = arith.constant dense<0xFF800000> : vector<8xf32>
    %34 = vector.multi_reduction <maximumf>, %33, %cst_10 [1] : vector<8x8xf32> to vector<8xf32>
    %35 = vector.shape_cast %34 : vector<8xf32> to vector<8x1xf32>
    %36 = vector.broadcast %35 : vector<8x1xf32> to vector<8x8xf32>
    %37 = arith.subf %33, %36 : vector<8x8xf32>
    %38 = math.exp %37 : vector<8x8xf32>
    %cst_11 = arith.constant dense<0.000000e+00> : vector<8xf32>
    %39 = vector.multi_reduction <add>, %38, %cst_11 [1] : vector<8x8xf32> to vector<8xf32>
    %40 = vector.shape_cast %39 : vector<8xf32> to vector<8x1xf32>
    %41 = tpu.reciprocal %40 {approx = true} : vector<8x1xf32> -> vector<8x1xf32>
    %42 = vector.broadcast %41 : vector<8x1xf32> to vector<8x8xf32>
    %43 = arith.mulf %38, %42 : vector<8x8xf32>
    %cst_12 = arith.constant dense<0.000000e+00> : vector<8x32xf32>
    %44 = tpu.matmul %43, %28, %cst_12 {dimension_numbers = #tpu.dot_dimension_numbers<[1], [0], [0], [1], [0, 0, 1, 1], [], []>} : vector<8x8xf32>, vector<8x32xf32>, vector<8x32xf32> -> vector<8x32xf32>
    %45 = vector.extract_strided_slice %1 {offsets = [0, 64], sizes = [8, 32], strides = [1, 1]} : vector<8x384xf32> to vector<8x32xf32>
    %46 = vector.extract_strided_slice %1 {offsets = [0, 192], sizes = [8, 32], strides = [1, 1]} : vector<8x384xf32> to vector<8x32xf32>
    %47 = vector.extract_strided_slice %1 {offsets = [0, 320], sizes = [8, 32], strides = [1, 1]} : vector<8x384xf32> to vector<8x32xf32>
    %cst_13 = arith.constant dense<0.000000e+00> : vector<8x8xf32>
    %48 = tpu.matmul %45, %46, %cst_13 {dimension_numbers = #tpu.dot_dimension_numbers<[1], [1], [0], [0], [0, 0, 1, 0], [], []>} : vector<8x32xf32>, vector<8x32xf32>, vector<8x8xf32> -> vector<8x8xf32>
    %cst_14 = arith.constant 0.176776692 : f32
    %49 = vector.broadcast %cst_14 : f32 to vector<8x8xf32>
    %50 = arith.mulf %48, %49 : vector<8x8xf32>
    %cst_15 = arith.constant -1.000000e+06 : f32
    %51 = vector.broadcast %cst_15 : f32 to vector<8x8xf32>
    %52 = arith.select %6, %50, %51 : vector<8x8xi1>, vector<8x8xf32>
    %cst_16 = arith.constant dense<0xFF800000> : vector<8xf32>
    %53 = vector.multi_reduction <maximumf>, %52, %cst_16 [1] : vector<8x8xf32> to vector<8xf32>
    %54 = vector.shape_cast %53 : vector<8xf32> to vector<8x1xf32>
    %55 = vector.broadcast %54 : vector<8x1xf32> to vector<8x8xf32>
    %56 = arith.subf %52, %55 : vector<8x8xf32>
    %57 = math.exp %56 : vector<8x8xf32>
    %cst_17 = arith.constant dense<0.000000e+00> : vector<8xf32>
    %58 = vector.multi_reduction <add>, %57, %cst_17 [1] : vector<8x8xf32> to vector<8xf32>
    %59 = vector.shape_cast %58 : vector<8xf32> to vector<8x1xf32>
    %60 = tpu.reciprocal %59 {approx = true} : vector<8x1xf32> -> vector<8x1xf32>
    %61 = vector.broadcast %60 : vector<8x1xf32> to vector<8x8xf32>
    %62 = arith.mulf %57, %61 : vector<8x8xf32>
    %cst_18 = arith.constant dense<0.000000e+00> : vector<8x32xf32>
    %63 = tpu.matmul %62, %47, %cst_18 {dimension_numbers = #tpu.dot_dimension_numbers<[1], [0], [0], [1], [0, 0, 1, 1], [], []>} : vector<8x8xf32>, vector<8x32xf32>, vector<8x32xf32> -> vector<8x32xf32>
    %64 = vector.extract_strided_slice %1 {offsets = [0, 96], sizes = [8, 32], strides = [1, 1]} : vector<8x384xf32> to vector<8x32xf32>
    %65 = vector.extract_strided_slice %1 {offsets = [0, 224], sizes = [8, 32], strides = [1, 1]} : vector<8x384xf32> to vector<8x32xf32>
    %66 = vector.extract_strided_slice %1 {offsets = [0, 352], sizes = [8, 32], strides = [1, 1]} : vector<8x384xf32> to vector<8x32xf32>
    %cst_19 = arith.constant dense<0.000000e+00> : vector<8x8xf32>
    %67 = tpu.matmul %64, %65, %cst_19 {dimension_numbers = #tpu.dot_dimension_numbers<[1], [1], [0], [0], [0, 0, 1, 0], [], []>} : vector<8x32xf32>, vector<8x32xf32>, vector<8x8xf32> -> vector<8x8xf32>
    %cst_20 = arith.constant 0.176776692 : f32
    %68 = vector.broadcast %cst_20 : f32 to vector<8x8xf32>
    %69 = arith.mulf %67, %68 : vector<8x8xf32>
    %cst_21 = arith.constant -1.000000e+06 : f32
    %70 = vector.broadcast %cst_21 : f32 to vector<8x8xf32>
    %71 = arith.select %6, %69, %70 : vector<8x8xi1>, vector<8x8xf32>
    %cst_22 = arith.constant dense<0xFF800000> : vector<8xf32>
    %72 = vector.multi_reduction <maximumf>, %71, %cst_22 [1] : vector<8x8xf32> to vector<8xf32>
    %73 = vector.shape_cast %72 : vector<8xf32> to vector<8x1xf32>
    %74 = vector.broadcast %73 : vector<8x1xf32> to vector<8x8xf32>
    %75 = arith.subf %71, %74 : vector<8x8xf32>
    %76 = math.exp %75 : vector<8x8xf32>
    %cst_23 = arith.constant dense<0.000000e+00> : vector<8xf32>
    %77 = vector.multi_reduction <add>, %76, %cst_23 [1] : vector<8x8xf32> to vector<8xf32>
    %78 = vector.shape_cast %77 : vector<8xf32> to vector<8x1xf32>
    %79 = tpu.reciprocal %78 {approx = true} : vector<8x1xf32> -> vector<8x1xf32>
    %80 = vector.broadcast %79 : vector<8x1xf32> to vector<8x8xf32>
    %81 = arith.mulf %76, %80 : vector<8x8xf32>
    %cst_24 = arith.constant dense<0.000000e+00> : vector<8x32xf32>
    %82 = tpu.matmul %81, %66, %cst_24 {dimension_numbers = #tpu.dot_dimension_numbers<[1], [0], [0], [1], [0, 0, 1, 1], [], []>} : vector<8x8xf32>, vector<8x32xf32>, vector<8x32xf32> -> vector<8x32xf32>
    %83 = tpu.concatenate %25, %44, %63, %82 in 1 : vector<8x32xf32>, vector<8x32xf32>, vector<8x32xf32>, vector<8x32xf32> -> vector<8x128xf32>
    %c0_25 = arith.constant 0 : index
    %c0_26 = arith.constant 0 : index
    %c0_27 = arith.constant 0 : index
    %84 = vector.load %arg3[%c0_25, %c0_26, %c0_27] : memref<1x8x128xf32, #tpu.memory_space<vmem>>, vector<1x8x128xf32>
    %85 = vector.shape_cast %84 : vector<1x8x128xf32> to vector<8x128xf32>
    %86 = vector.shape_cast %83 : vector<8x128xf32> to vector<1x8x128xf32>
    tpu.vector_store %arg3[%c0_25, %c0_26, %c0_27], %86 {strides = array<i32>} : memref<1x8x128xf32, #tpu.memory_space<vmem>>, vector<1x8x128xf32>,
    return
  }
  func.func @transform_0(%arg0: i32, %arg1: memref<2xi32, #tpu.memory_space<smem>>) -> (i32, i32, i32) {
    %c0_i32 = arith.constant 0 : i32
    %c0_i32_0 = arith.constant 0 : i32
    %c0_i32_1 = arith.constant 0 : i32
    return %arg0, %c0_i32, %c0_i32_0 : i32, i32, i32
  }
  func.func @transform_1(%arg0: i32, %arg1: memref<2xi32, #tpu.memory_space<smem>>) -> (i32, i32, i32) {
    %c0_i32 = arith.constant 0 : i32
    %c0_i32_0 = arith.constant 0 : i32
    %c0_i32_1 = arith.constant 0 : i32
    return %arg0, %c0_i32, %c0_i32_0 : i32, i32, i32
  }
}

module attributes {stable_mosaic.version = 11 : i64} {
  func.func @_ffn_addnorm_kernel(%arg0: i32, %arg1: memref<8x128xf32, #tpu.memory_space<vmem>>, %arg2: memref<128x256xf32, #tpu.memory_space<vmem>>, %arg3: memref<1x256xf32, #tpu.memory_space<vmem>>, %arg4: memref<256x128xf32, #tpu.memory_space<vmem>>, %arg5: memref<1x128xf32, #tpu.memory_space<vmem>>, %arg6: memref<1x128xf32, #tpu.memory_space<vmem>>, %arg7: memref<1x128xf32, #tpu.memory_space<vmem>>, %arg8: memref<8x128xf32, #tpu.memory_space<vmem>>) attributes {dimension_semantics = [#tpu.dimension_semantics<parallel>], iteration_bounds = array<i64: 2>, scalar_prefetch = 0 : i64, scratch_operands = 0 : i64, tpu.core_type = #tpu.core_type<tc>, window_params = [{transform_indices = @transform_0, window_bounds = array<i64: 8, 128>}, {pipeline_mode = #tpu.pipeline_mode<synchronous>, transform_indices = @transform_1, window_bounds = array<i64: 128, 256>}, {pipeline_mode = #tpu.pipeline_mode<synchronous>, transform_indices = @transform_2, window_bounds = array<i64: 1, 256>}, {pipeline_mode = #tpu.pipeline_mode<synchronous>, transform_indices = @transform_3, window_bounds = array<i64: 256, 128>}, {pipeline_mode = #tpu.pipeline_mode<synchronous>, transform_indices = @transform_4, window_bounds = array<i64: 1, 128>}, {pipeline_mode = #tpu.pipeline_mode<synchronous>, transform_indices = @transform_5, window_bounds = array<i64: 1, 128>}, {pipeline_mode = #tpu.pipeline_mode<synchronous>, transform_indices = @transform_6, window_bounds = array<i64: 1, 128>}, {transform_indices = @transform_7, window_bounds = array<i64: 8, 128>}]} {
    %c0 = arith.constant 0 : index
    %c0_0 = arith.constant 0 : index
    %0 = vector.load %arg1[%c0, %c0_0] : memref<8x128xf32, #tpu.memory_space<vmem>>, vector<8x128xf32>
    %c0_1 = arith.constant 0 : index
    %c0_2 = arith.constant 0 : index
    %1 = vector.load %arg2[%c0_1, %c0_2] : memref<128x256xf32, #tpu.memory_space<vmem>>, vector<128x256xf32>
    %cst = arith.constant dense<0.000000e+00> : vector<8x256xf32>
    %2 = tpu.matmul %0, %1, %cst {dimension_numbers = #tpu.dot_dimension_numbers<[1], [0], [0], [1], [0, 0, 1, 1], [], []>} : vector<8x128xf32>, vector<128x256xf32>, vector<8x256xf32> -> vector<8x256xf32>
    %c0_3 = arith.constant 0 : index
    %c0_4 = arith.constant 0 : index
    %3 = vector.load %arg3[%c0_3, %c0_4] : memref<1x256xf32, #tpu.memory_space<vmem>>, vector<1x256xf32>
    %4 = vector.broadcast %3 : vector<1x256xf32> to vector<8x256xf32>
    %5 = arith.addf %2, %4 : vector<8x256xf32>
    %cst_5 = arith.constant 0.000000e+00 : f32
    %6 = vector.broadcast %cst_5 : f32 to vector<8x256xf32>
    %7 = arith.maximumf %5, %6 : vector<8x256xf32>
    %c0_6 = arith.constant 0 : index
    %c0_7 = arith.constant 0 : index
    %8 = vector.load %arg4[%c0_6, %c0_7] : memref<256x128xf32, #tpu.memory_space<vmem>>, vector<256x128xf32>
    %cst_8 = arith.constant dense<0.000000e+00> : vector<8x128xf32>
    %9 = tpu.matmul %7, %8, %cst_8 {dimension_numbers = #tpu.dot_dimension_numbers<[1], [0], [0], [1], [0, 0, 1, 1], [], []>} : vector<8x256xf32>, vector<256x128xf32>, vector<8x128xf32> -> vector<8x128xf32>
    %c0_9 = arith.constant 0 : index
    %c0_10 = arith.constant 0 : index
    %10 = vector.load %arg5[%c0_9, %c0_10] : memref<1x128xf32, #tpu.memory_space<vmem>>, vector<1x128xf32>
    %11 = vector.broadcast %10 : vector<1x128xf32> to vector<8x128xf32>
    %12 = arith.addf %9, %11 : vector<8x128xf32>
    %13 = arith.addf %0, %12 : vector<8x128xf32>
    %c0_11 = arith.constant 0 : index
    %c0_12 = arith.constant 0 : index
    %14 = vector.load %arg6[%c0_11, %c0_12] : memref<1x128xf32, #tpu.memory_space<vmem>>, vector<1x128xf32>
    %c0_13 = arith.constant 0 : index
    %c0_14 = arith.constant 0 : index
    %15 = vector.load %arg7[%c0_13, %c0_14] : memref<1x128xf32, #tpu.memory_space<vmem>>, vector<1x128xf32>
    %cst_15 = arith.constant dense<0.000000e+00> : vector<8xf32>
    %16 = vector.multi_reduction <add>, %13, %cst_15 [1] : vector<8x128xf32> to vector<8xf32>
    %17 = vector.shape_cast %16 : vector<8xf32> to vector<8x1xf32>
    %cst_16 = arith.constant 1.280000e+02 : f32
    %18 = vector.broadcast %cst_16 : f32 to vector<8x1xf32>
    %19 = arith.divf %17, %18 : vector<8x1xf32>
    %20 = vector.broadcast %19 : vector<8x1xf32> to vector<8x128xf32>
    %21 = arith.subf %13, %20 : vector<8x128xf32>
    %22 = arith.mulf %21, %21 : vector<8x128xf32>
    %cst_17 = arith.constant dense<0.000000e+00> : vector<8xf32>
    %23 = vector.multi_reduction <add>, %22, %cst_17 [1] : vector<8x128xf32> to vector<8xf32>
    %24 = vector.shape_cast %23 : vector<8xf32> to vector<8x1xf32>
    %cst_18 = arith.constant 1.280000e+02 : f32
    %25 = vector.broadcast %cst_18 : f32 to vector<8x1xf32>
    %26 = arith.divf %24, %25 : vector<8x1xf32>
    %cst_19 = arith.constant 9.99999974E-6 : f32
    %27 = vector.broadcast %cst_19 : f32 to vector<8x1xf32>
    %28 = arith.addf %26, %27 : vector<8x1xf32>
    %29 = math.rsqrt %28 : vector<8x1xf32>
    %30 = vector.broadcast %29 : vector<8x1xf32> to vector<8x128xf32>
    %31 = arith.mulf %21, %30 : vector<8x128xf32>
    %32 = vector.broadcast %14 : vector<1x128xf32> to vector<8x128xf32>
    %33 = arith.mulf %31, %32 : vector<8x128xf32>
    %34 = vector.broadcast %15 : vector<1x128xf32> to vector<8x128xf32>
    %35 = arith.addf %33, %34 : vector<8x128xf32>
    %c0_20 = arith.constant 0 : index
    %c0_21 = arith.constant 0 : index
    %36 = vector.load %arg8[%c0_20, %c0_21] : memref<8x128xf32, #tpu.memory_space<vmem>>, vector<8x128xf32>
    tpu.vector_store %arg8[%c0_20, %c0_21], %35 {strides = array<i32>} : memref<8x128xf32, #tpu.memory_space<vmem>>, vector<8x128xf32>,
    return
  }
  func.func @transform_0(%arg0: i32) -> (i32, i32) {
    %c0_i32 = arith.constant 0 : i32
    %c0_i32_0 = arith.constant 0 : i32
    return %arg0, %c0_i32 : i32, i32
  }
  func.func @transform_1(%arg0: i32) -> (i32, i32) {
    %c0_i32 = arith.constant 0 : i32
    %c0_i32_0 = arith.constant 0 : i32
    %c0_i32_1 = arith.constant 0 : i32
    return %c0_i32, %c0_i32_0 : i32, i32
  }
  func.func @transform_2(%arg0: i32) -> (i32, i32) {
    %c0_i32 = arith.constant 0 : i32
    %c0_i32_0 = arith.constant 0 : i32
    %c0_i32_1 = arith.constant 0 : i32
    return %c0_i32, %c0_i32_0 : i32, i32
  }
  func.func @transform_3(%arg0: i32) -> (i32, i32) {
    %c0_i32 = arith.constant 0 : i32
    %c0_i32_0 = arith.constant 0 : i32
    %c0_i32_1 = arith.constant 0 : i32
    return %c0_i32, %c0_i32_0 : i32, i32
  }
  func.func @transform_4(%arg0: i32) -> (i32, i32) {
    %c0_i32 = arith.constant 0 : i32
    %c0_i32_0 = arith.constant 0 : i32
    %c0_i32_1 = arith.constant 0 : i32
    return %c0_i32, %c0_i32_0 : i32, i32
  }
  func.func @transform_5(%arg0: i32) -> (i32, i32) {
    %c0_i32 = arith.constant 0 : i32
    %c0_i32_0 = arith.constant 0 : i32
    %c0_i32_1 = arith.constant 0 : i32
    return %c0_i32, %c0_i32_0 : i32, i32
  }
  func.func @transform_6(%arg0: i32) -> (i32, i32) {
    %c0_i32 = arith.constant 0 : i32
    %c0_i32_0 = arith.constant 0 : i32
    %c0_i32_1 = arith.constant 0 : i32
    return %c0_i32, %c0_i32_0 : i32, i32
  }
  func.func @transform_7(%arg0: i32) -> (i32, i32) {
    %c0_i32 = arith.constant 0 : i32
    %c0_i32_0 = arith.constant 0 : i32
    return %arg0, %c0_i32 : i32, i32
  }
}

module attributes {stable_mosaic.version = 11 : i64} {
  func.func @_ffn_addnorm_kernel(%arg0: i32, %arg1: memref<8x128xf32, #tpu.memory_space<vmem>>, %arg2: memref<128x256xf32, #tpu.memory_space<vmem>>, %arg3: memref<1x256xf32, #tpu.memory_space<vmem>>, %arg4: memref<256x128xf32, #tpu.memory_space<vmem>>, %arg5: memref<1x128xf32, #tpu.memory_space<vmem>>, %arg6: memref<1x128xf32, #tpu.memory_space<vmem>>, %arg7: memref<1x128xf32, #tpu.memory_space<vmem>>, %arg8: memref<8x128xf32, #tpu.memory_space<vmem>>) attributes {dimension_semantics = [#tpu.dimension_semantics<parallel>], iteration_bounds = array<i64: 2>, scalar_prefetch = 0 : i64, scratch_operands = 0 : i64, tpu.core_type = #tpu.core_type<tc>, window_params = [{transform_indices = @transform_0, window_bounds = array<i64: 8, 128>}, {pipeline_mode = #tpu.pipeline_mode<synchronous>, transform_indices = @transform_1, window_bounds = array<i64: 128, 256>}, {pipeline_mode = #tpu.pipeline_mode<synchronous>, transform_indices = @transform_2, window_bounds = array<i64: 1, 256>}, {pipeline_mode = #tpu.pipeline_mode<synchronous>, transform_indices = @transform_3, window_bounds = array<i64: 256, 128>}, {pipeline_mode = #tpu.pipeline_mode<synchronous>, transform_indices = @transform_4, window_bounds = array<i64: 1, 128>}, {pipeline_mode = #tpu.pipeline_mode<synchronous>, transform_indices = @transform_5, window_bounds = array<i64: 1, 128>}, {pipeline_mode = #tpu.pipeline_mode<synchronous>, transform_indices = @transform_6, window_bounds = array<i64: 1, 128>}, {transform_indices = @transform_7, window_bounds = array<i64: 8, 128>}]} {
    %c0 = arith.constant 0 : index
    %c0_0 = arith.constant 0 : index
    %0 = vector.load %arg1[%c0, %c0_0] : memref<8x128xf32, #tpu.memory_space<vmem>>, vector<8x128xf32>
    %c0_1 = arith.constant 0 : index
    %c0_2 = arith.constant 0 : index
    %1 = vector.load %arg2[%c0_1, %c0_2] : memref<128x256xf32, #tpu.memory_space<vmem>>, vector<128x256xf32>
    %cst = arith.constant dense<0.000000e+00> : vector<8x256xf32>
    %2 = tpu.matmul %0, %1, %cst {dimension_numbers = #tpu.dot_dimension_numbers<[1], [0], [0], [1], [0, 0, 1, 1], [], []>} : vector<8x128xf32>, vector<128x256xf32>, vector<8x256xf32> -> vector<8x256xf32>
    %c0_3 = arith.constant 0 : index
    %c0_4 = arith.constant 0 : index
    %3 = vector.load %arg3[%c0_3, %c0_4] : memref<1x256xf32, #tpu.memory_space<vmem>>, vector<1x256xf32>
    %4 = vector.broadcast %3 : vector<1x256xf32> to vector<8x256xf32>
    %5 = arith.addf %2, %4 : vector<8x256xf32>
    %cst_5 = arith.constant 0.000000e+00 : f32
    %6 = vector.broadcast %cst_5 : f32 to vector<8x256xf32>
    %7 = arith.maximumf %5, %6 : vector<8x256xf32>
    %c0_6 = arith.constant 0 : index
    %c0_7 = arith.constant 0 : index
    %8 = vector.load %arg4[%c0_6, %c0_7] : memref<256x128xf32, #tpu.memory_space<vmem>>, vector<256x128xf32>
    %cst_8 = arith.constant dense<0.000000e+00> : vector<8x128xf32>
    %9 = tpu.matmul %7, %8, %cst_8 {dimension_numbers = #tpu.dot_dimension_numbers<[1], [0], [0], [1], [0, 0, 1, 1], [], []>} : vector<8x256xf32>, vector<256x128xf32>, vector<8x128xf32> -> vector<8x128xf32>
    %c0_9 = arith.constant 0 : index
    %c0_10 = arith.constant 0 : index
    %10 = vector.load %arg5[%c0_9, %c0_10] : memref<1x128xf32, #tpu.memory_space<vmem>>, vector<1x128xf32>
    %11 = vector.broadcast %10 : vector<1x128xf32> to vector<8x128xf32>
    %12 = arith.addf %9, %11 : vector<8x128xf32>
    %13 = arith.addf %0, %12 : vector<8x128xf32>
    %c0_11 = arith.constant 0 : index
    %c0_12 = arith.constant 0 : index
    %14 = vector.load %arg6[%c0_11, %c0_12] : memref<1x128xf32, #tpu.memory_space<vmem>>, vector<1x128xf32>
    %c0_13 = arith.constant 0 : index
    %c0_14 = arith.constant 0 : index
    %15 = vector.load %arg7[%c0_13, %c0_14] : memref<1x128xf32, #tpu.memory_space<vmem>>, vector<1x128xf32>
    %cst_15 = arith.constant dense<0.000000e+00> : vector<8xf32>
    %16 = vector.multi_reduction <add>, %13, %cst_15 [1] : vector<8x128xf32> to vector<8xf32>
    %17 = vector.shape_cast %16 : vector<8xf32> to vector<8x1xf32>
    %cst_16 = arith.constant 1.280000e+02 : f32
    %18 = vector.broadcast %cst_16 : f32 to vector<8x1xf32>
    %19 = arith.divf %17, %18 : vector<8x1xf32>
    %20 = vector.broadcast %19 : vector<8x1xf32> to vector<8x128xf32>
    %21 = arith.subf %13, %20 : vector<8x128xf32>
    %22 = arith.mulf %21, %21 : vector<8x128xf32>
    %cst_17 = arith.constant dense<0.000000e+00> : vector<8xf32>
    %23 = vector.multi_reduction <add>, %22, %cst_17 [1] : vector<8x128xf32> to vector<8xf32>
    %24 = vector.shape_cast %23 : vector<8xf32> to vector<8x1xf32>
    %cst_18 = arith.constant 1.280000e+02 : f32
    %25 = vector.broadcast %cst_18 : f32 to vector<8x1xf32>
    %26 = arith.divf %24, %25 : vector<8x1xf32>
    %cst_19 = arith.constant 9.99999974E-6 : f32
    %27 = vector.broadcast %cst_19 : f32 to vector<8x1xf32>
    %28 = arith.addf %26, %27 : vector<8x1xf32>
    %29 = math.rsqrt %28 : vector<8x1xf32>
    %30 = vector.broadcast %29 : vector<8x1xf32> to vector<8x128xf32>
    %31 = arith.mulf %21, %30 : vector<8x128xf32>
    %32 = vector.broadcast %14 : vector<1x128xf32> to vector<8x128xf32>
    %33 = arith.mulf %31, %32 : vector<8x128xf32>
    %34 = vector.broadcast %15 : vector<1x128xf32> to vector<8x128xf32>
    %35 = arith.addf %33, %34 : vector<8x128xf32>
    %c0_20 = arith.constant 0 : index
    %c0_21 = arith.constant 0 : index
    %36 = vector.load %arg8[%c0_20, %c0_21] : memref<8x128xf32, #tpu.memory_space<vmem>>, vector<8x128xf32>
    tpu.vector_store %arg8[%c0_20, %c0_21], %35 {strides = array<i32>} : memref<8x128xf32, #tpu.memory_space<vmem>>, vector<8x128xf32>,
    return
  }
  func.func @transform_0(%arg0: i32) -> (i32, i32) {
    %c0_i32 = arith.constant 0 : i32
    %c0_i32_0 = arith.constant 0 : i32
    return %arg0, %c0_i32 : i32, i32
  }
  func.func @transform_1(%arg0: i32) -> (i32, i32) {
    %c0_i32 = arith.constant 0 : i32
    %c0_i32_0 = arith.constant 0 : i32
    %c0_i32_1 = arith.constant 0 : i32
    return %c0_i32, %c0_i32_0 : i32, i32
  }
  func.func @transform_2(%arg0: i32) -> (i32, i32) {
    %c0_i32 = arith.constant 0 : i32
    %c0_i32_0 = arith.constant 0 : i32
    %c0_i32_1 = arith.constant 0 : i32
    return %c0_i32, %c0_i32_0 : i32, i32
  }
  func.func @transform_3(%arg0: i32) -> (i32, i32) {
    %c0_i32 = arith.constant 0 : i32
    %c0_i32_0 = arith.constant 0 : i32
    %c0_i32_1 = arith.constant 0 : i32
    return %c0_i32, %c0_i32_0 : i32, i32
  }
  func.func @transform_4(%arg0: i32) -> (i32, i32) {
    %c0_i32 = arith.constant 0 : i32
    %c0_i32_0 = arith.constant 0 : i32
    %c0_i32_1 = arith.constant 0 : i32
    return %c0_i32, %c0_i32_0 : i32, i32
  }
  func.func @transform_5(%arg0: i32) -> (i32, i32) {
    %c0_i32 = arith.constant 0 : i32
    %c0_i32_0 = arith.constant 0 : i32
    %c0_i32_1 = arith.constant 0 : i32
    return %c0_i32, %c0_i32_0 : i32, i32
  }
  func.func @transform_6(%arg0: i32) -> (i32, i32) {
    %c0_i32 = arith.constant 0 : i32
    %c0_i32_0 = arith.constant 0 : i32
    %c0_i32_1 = arith.constant 0 : i32
    return %c0_i32, %c0_i32_0 : i32, i32
  }
  func.func @transform_7(%arg0: i32) -> (i32, i32) {
    %c0_i32 = arith.constant 0 : i32
    %c0_i32_0 = arith.constant 0 : i32
    return %arg0, %c0_i32 : i32, i32
  }
}

</mosaic_0001>

<llo_original>
// kernel: encoder_forward.9
$region0: #{encoder_forward.9}
  #allocation0 [shape = 'u32[]', space=smem, size = 0x4, offset = 0x4, fixed_abs, tag = 'smem constant byte address 0x4 - core index']
  #allocation1 [shape = 'u32[144,128]{1,0:T(1,128)}', space=vmem, size = 0x12000, scoped, tag = 'internal scratch']
  %s0 = inlined_call_operand.vmem [shape: f32[2,8,128], index: 0, kind: input, shape index: {}]
  %s1 = inlined_call_operand.vmem [shape: f32[8,128], index: 1, kind: input, shape index: {}]
  %s2 = inlined_call_operand.vmem [shape: f32[2,8,128], index: 2, kind: output, shape index: {}]
  %s3 = sld [smem:[#allocation0]]
  $region41: #{encoder_forward.9} parent=0
    _
  %s5 = ssub.s32 1, %s3
  %s6 = scalar_select 0, %s5, %s3
  loop: start=0, step=1, limit=4
  $region2: #{encoder_forward.9} parent=0 // loop_pre_header
    _
  $region3: #{encoder_forward.9} parent=0 // loop_header
    %s8 = sphi 0, %s12
    %p9 = scmp.ge.s32.totalorder %s8, 4
    %s18 = sphi 0, %s20
    %s21 = sphi 0, %s18
    %s22 = sphi 0, %s21
    %s38 = sphi 0, %s22
    %s42 = sphi 0, %s42
    %s44 = sphi 0, %s42
    %s45 = sphi 0, %s44
    %s59 = sphi 0, %s45
    %s65 = sphi 0, %s67
    %s68 = sphi 0, %s65
    %s69 = sphi 0, %s68
    %s85 = sphi 0, %s69
  $region4: #{encoder_forward.9} parent=0 // loop_header_branch
    %11 = sbr.rel (%p9) target = $region8
  $region5: #{encoder_forward.9} parent=0 // loop_body
    %s13 = ssub.s32 %s8, 1
    %s14 = ssub.s32 %s8, 2
    %s15 = sadd.s32 %s8, 1
    %s16 = ssub.s32 %s8, %s15
    %p17 = scmp.eq.s32.totalorder %s16, 0
    %s19 = sadd.s32 %s18, 1
    %s20 = scalar_select %p17, %s18, %s19
    %p23 = pneg %p17
    %p24 = scmp.eq.s32.totalorder %s8, 1
    %p25 = por %p23, %p24
    %p26 = scmp.ne.s32.totalorder %s18, %s21
    %p27 = scmp.eq.s32.totalorder %s8, 0
    %p28 = por %p26, %p27
    %p29 = scmp.ne.s32.totalorder %s18, %s21
    %p30 = scmp.eq.s32.totalorder %s13, 1
    %p31 = por %p29, %p30
    %p32 = scmp.ne.s32.totalorder %s21, %s22
    %p33 = scmp.eq.s32.totalorder %s13, 0
    %p34 = por %p32, %p33
    %p35 = scmp.ne.s32.totalorder %s21, %s22
    %p36 = scmp.eq.s32.totalorder %s14, 1
    %p37 = por %p35, %p36
    %p39 = scmp.ne.s32.totalorder %s22, %s38
    %p40 = scmp.eq.s32.totalorder %s14, 0
    %p41 = por %p39, %p40
    %s43 = sadd.s32 %s42, 1
    %p46 = scmp.eq.s32.totalorder %s8, 1
    %p47 = scmp.ne.s32.totalorder %s42, %s44
    %p48 = scmp.eq.s32.totalorder %s8, 0
    %p49 = por %p47, %p48
    %p50 = scmp.ne.s32.totalorder %s42, %s44
    %p51 = scmp.eq.s32.totalorder %s13, 1
    %p52 = por %p50, %p51
    %p53 = scmp.ne.s32.totalorder %s44, %s45
    %p54 = scmp.eq.s32.totalorder %s13, 0
    %p55 = por %p53, %p54
    %p56 = scmp.ne.s32.totalorder %s44, %s45
    %p57 = scmp.eq.s32.totalorder %s14, 1
    %p58 = por %p56, %p57
    %p60 = scmp.ne.s32.totalorder %s45, %s59
    %p61 = scmp.eq.s32.totalorder %s14, 0
    %p62 = por %p60, %p61
    %s63 = ssub.s32 %s8, %s15
    %p64 = scmp.eq.s32.totalorder %s63, 0
    %s66 = sadd.s32 %s65, 1
    %s67 = scalar_select %p64, %s65, %s66
    %p70 = pneg %p64
    %p71 = scmp.eq.s32.totalorder %s8, 1
    %p72 = por %p70, %p71
    %p73 = scmp.ne.s32.totalorder %s65, %s68
    %p74 = scmp.eq.s32.totalorder %s8, 0
    %p75 = por %p73, %p74
    %p76 = scmp.ne.s32.totalorder %s65, %s68
    %p77 = scmp.eq.s32.totalorder %s13, 1
    %p78 = por %p76, %p77
    %p79 = scmp.ne.s32.totalorder %s68, %s69
    %p80 = scmp.eq.s32.totalorder %s13, 0
    %p81 = por %p79, %p80
    %p82 = scmp.ne.s32.totalorder %s68, %s69
    %p83 = scmp.eq.s32.totalorder %s14, 1
    %p84 = por %p82, %p83
    %p86 = scmp.ne.s32.totalorder %s69, %s85
    %p87 = scmp.eq.s32.totalorder %s14, 0
    %p88 = por %p86, %p87
    %p89 = scmp.le.s32.totalorder 1, %s8
    %p90 = scmp.lt.s32.totalorder %s8, 3
    %p91 = pnand %p89, %p90
    %p92 = pneg %p91
    // Predicated region
    $region9: #{encoder_forward.9} parent=5 // pred_check
      _
    $region10: #{encoder_forward.9} parent=5 // pred_check_branch
      %94 = sbr.rel (%p91) target = $region12
    $region11: #{encoder_forward.9} parent=5 // pred_region
      %s95 = ssub.s32 %s8, 1
      // Predicated region
      $region13: #{encoder_forward.9} parent=11 // pred_check
        %p96 = pneg %p55
      $region14: #{encoder_forward.9} parent=11 // pred_check_branch
        %98 = sbr.rel (%p96) target = $region16
      $region15: #{encoder_forward.9} parent=11 // pred_region
        _
      $region16: #{encoder_forward.9} parent=11 // pred_fallthru
        _
    $region12: #{encoder_forward.9} parent=5 // pred_fallthru
      _
    %p99 = scmp.lt.s32.totalorder %s8, 2
    // Predicated region
    $region17: #{encoder_forward.9} parent=5 // pred_check
      %p100 = pneg %p99
    $region18: #{encoder_forward.9} parent=5 // pred_check_branch
      %102 = sbr.rel (%p100) target = $region20
    $region19: #{encoder_forward.9} parent=5 // pred_region
      // Predicated region
      $region21: #{encoder_forward.9} parent=19 // pred_check
        %p103 = pneg %p28
      $region22: #{encoder_forward.9} parent=19 // pred_check_branch
        %105 = sbr.rel (%p103) target = $region24
      $region23: #{encoder_forward.9} parent=19 // pred_region
        %p106 = scmp.lt.s32.totalorder %s8, 1
        %s107 = scalar_select %p106, %s8, 1
        %s108 = smul.addr %s107, 8
        %s109 = scalar_lea.vmem %s0, %s108
      $region24: #{encoder_forward.9} parent=19 // pred_fallthru
        _
    $region20: #{encoder_forward.9} parent=5 // pred_fallthru
      _
    %p110 = scmp.le.s32.totalorder 1, %s8
    %p111 = scmp.lt.s32.totalorder %s8, 3
    %p112 = pnand %p110, %p111
    %p113 = pneg %p112
    // Predicated region
    $region25: #{encoder_forward.9} parent=5 // pred_check
      _
    $region26: #{encoder_forward.9} parent=5 // pred_check_branch
      %115 = sbr.rel (%p112) target = $region28
    $region27: #{encoder_forward.9} parent=5 // pred_region
      %s116 = ssub.s32 %s8, 1
      %p117 = scmp.lt.s32.totalorder %s13, 1
      %s118 = scalar_select %p117, %s13, 1
      %s119 = smul.addr %s118, 8
      %s120 = scalar_lea.vmem %s0, %s119
      %p121 = pneg %p34
      %p122 = pneg %p31
      %p123 = pneg %p55
      %p124 = pneg %p52
      %p125 = pneg %p81
      %p126 = pneg %p78
      %p127 = scmp.lt.s32.totalorder %s13, 1
      %s128 = scalar_select %p127, %s13, 1
      %s129 = smul.addr %s128, 8
      %s130 = scalar_lea.vmem %s2, %s129
      %p131 = scmp.lt.s32.totalorder %s13, 1
      %s132 = scalar_select %p131, %s13, 1
      %s133 = smul.addr %s132, 8
      %s134 = scalar_lea.vmem %s0, %s133
      %p135 = scmp.lt.s32.totalorder %s13, 1
      %s136 = scalar_select %p135, %s13, 1
      %s137 = smul.addr %s136, 8
      %s138 = scalar_lea.vmem %s2, %s137
      %v139 = vld [vmem:[%s134] sm:$0xff]
      %v140 = vmul.f32 %v139, 11.313708
      %v141 = vld [vmem:[%s1] sm:$0xff]
      %v142 = vadd.f32 %v140, %v141
      %143 = vst [vmem:[%s138] sm:$0xff] %v142
      %p144 = scmp.lt.s32.totalorder %s13, 1
      %s145 = scalar_select %p144, %s13, 1
      %s146 = smul.addr %s145, 8
      %s147 = scalar_lea.vmem %s2, %s146
      // Predicated region
      $region29: #{encoder_forward.9} parent=27 // pred_check
        %p148 = pneg %p78
      $region30: #{encoder_forward.9} parent=27 // pred_check_branch
        %150 = sbr.rel (%p148) target = $region32
      $region31: #{encoder_forward.9} parent=27 // pred_region
        _
      $region32: #{encoder_forward.9} parent=27 // pred_fallthru
        _
    $region28: #{encoder_forward.9} parent=5 // pred_fallthru
      _
    %p151 = scmp.le.s32.totalorder 2, %s8
    // Predicated region
    $region33: #{encoder_forward.9} parent=5 // pred_check
      %p152 = pneg %p151
    $region34: #{encoder_forward.9} parent=5 // pred_check_branch
      %154 = sbr.rel (%p152) target = $region36
    $region35: #{encoder_forward.9} parent=5 // pred_region
      %s155 = ssub.s32 %s8, 2
      // Predicated region
      $region37: #{encoder_forward.9} parent=35 // pred_check
        %p156 = pneg %p84
      $region38: #{encoder_forward.9} parent=35 // pred_check_branch
        %158 = sbr.rel (%p156) target = $region40
      $region39: #{encoder_forward.9} parent=35 // pred_region
        %p159 = scmp.lt.s32.totalorder %s14, 1
        %s160 = scalar_select %p159, %s14, 1
        %s161 = smul.addr %s160, 8
        %s162 = scalar_lea.vmem %s2, %s161
      $region40: #{encoder_forward.9} parent=35 // pred_fallthru
        _
    $region36: #{encoder_forward.9} parent=5 // pred_fallthru
      _
  $region6: #{encoder_forward.9} parent=0 // loop_footer
    %s12 = sadd.s32 1, %s8
  $region7: #{encoder_forward.9} parent=0 // loop_footer_branch
    %7 = sbr.rel target = $region3
  $region8: #{encoder_forward.9} parent=0 // loop_exit
    _

// kernel: encoder_forward.12
$region0: #{encoder_forward.12}
  #allocation0 [shape = 'u32[]', space=smem, size = 0x4, offset = 0x4, fixed_abs, tag = 'smem constant byte address 0x4 - core index']
  #allocation1 [shape = 'u32[144,128]{1,0:T(1,128)}', space=vmem, size = 0x12000, scoped, tag = 'internal scratch']
  %s0 = inlined_call_operand.vmem [shape: f32[16,128], index: 0, kind: input, shape index: {}]
  %s1 = inlined_call_operand.vmem [shape: f32[128,128], index: 1, kind: input, shape index: {}]
  %s2 = inlined_call_operand.vmem [shape: f32[16,128], index: 2, kind: input, shape index: {}]
  %s3 = inlined_call_operand.vmem [shape: f32[1,128], index: 3, kind: input, shape index: {}]
  %s4 = inlined_call_operand.vmem [shape: f32[1,128], index: 4, kind: input, shape index: {}]
  %s5 = inlined_call_operand.vmem [shape: f32[16,128], index: 5, kind: output, shape index: {}]
  %s6 = sld [smem:[#allocation0]]
  $region53: #{encoder_forward.12} parent=0
    _
  %s8 = ssub.s32 1, %s6
  %s9 = scalar_select 0, %s8, %s6
  loop: start=0, step=1, limit=4
  $region2: #{encoder_forward.12} parent=0 // loop_pre_header
    _
  $region3: #{encoder_forward.12} parent=0 // loop_header
    %s11 = sphi 0, %s15
    %p12 = scmp.ge.s32.totalorder %s11, 4
    %s21 = sphi 0, %s23
    %s24 = sphi 0, %s21
    %s25 = sphi 0, %s24
    %s41 = sphi 0, %s25
    %s45 = sphi 0, %s45
    %s47 = sphi 0, %s45
    %s48 = sphi 0, %s47
    %s62 = sphi 0, %s48
    %s68 = sphi 0, %s70
    %s71 = sphi 0, %s68
    %s72 = sphi 0, %s71
    %s88 = sphi 0, %s72
    %s92 = sphi 0, %s92
    %s94 = sphi 0, %s92
    %s95 = sphi 0, %s94
    %s109 = sphi 0, %s95
    %s113 = sphi 0, %s113
    %s115 = sphi 0, %s113
    %s116 = sphi 0, %s115
    %s130 = sphi 0, %s116
    %s136 = sphi 0, %s138
    %s139 = sphi 0, %s136
    %s140 = sphi 0, %s139
    %s156 = sphi 0, %s140
  $region4: #{encoder_forward.12} parent=0 // loop_header_branch
    %14 = sbr.rel (%p12) target = $region8
  $region5: #{encoder_forward.12} parent=0 // loop_body
    %s16 = ssub.s32 %s11, 1
    %s17 = ssub.s32 %s11, 2
    %s18 = sadd.s32 %s11, 1
    %s19 = ssub.s32 %s11, %s18
    %p20 = scmp.eq.s32.totalorder %s19, 0
    %s22 = sadd.s32 %s21, 1
    %s23 = scalar_select %p20, %s21, %s22
    %p26 = pneg %p20
    %p27 = scmp.eq.s32.totalorder %s11, 1
    %p28 = por %p26, %p27
    %p29 = scmp.ne.s32.totalorder %s21, %s24
    %p30 = scmp.eq.s32.totalorder %s11, 0
    %p31 = por %p29, %p30
    %p32 = scmp.ne.s32.totalorder %s21, %s24
    %p33 = scmp.eq.s32.totalorder %s16, 1
    %p34 = por %p32, %p33
    %p35 = scmp.ne.s32.totalorder %s24, %s25
    %p36 = scmp.eq.s32.totalorder %s16, 0
    %p37 = por %p35, %p36
    %p38 = scmp.ne.s32.totalorder %s24, %s25
    %p39 = scmp.eq.s32.totalorder %s17, 1
    %p40 = por %p38, %p39
    %p42 = scmp.ne.s32.totalorder %s25, %s41
    %p43 = scmp.eq.s32.totalorder %s17, 0
    %p44 = por %p42, %p43
    %s46 = sadd.s32 %s45, 1
    %p49 = scmp.eq.s32.totalorder %s11, 1
    %p50 = scmp.ne.s32.totalorder %s45, %s47
    %p51 = scmp.eq.s32.totalorder %s11, 0
    %p52 = por %p50, %p51
    %p53 = scmp.ne.s32.totalorder %s45, %s47
    %p54 = scmp.eq.s32.totalorder %s16, 1
    %p55 = por %p53, %p54
    %p56 = scmp.ne.s32.totalorder %s47, %s48
    %p57 = scmp.eq.s32.totalorder %s16, 0
    %p58 = por %p56, %p57
    %p59 = scmp.ne.s32.totalorder %s47, %s48
    %p60 = scmp.eq.s32.totalorder %s17, 1
    %p61 = por %p59, %p60
    %p63 = scmp.ne.s32.totalorder %s48, %s62
    %p64 = scmp.eq.s32.totalorder %s17, 0
    %p65 = por %p63, %p64
    %s66 = ssub.s32 %s11, %s18
    %p67 = scmp.eq.s32.totalorder %s66, 0
    %s69 = sadd.s32 %s68, 1
    %s70 = scalar_select %p67, %s68, %s69
    %p73 = pneg %p67
    %p74 = scmp.eq.s32.totalorder %s11, 1
    %p75 = por %p73, %p74
    %p76 = scmp.ne.s32.totalorder %s68, %s71
    %p77 = scmp.eq.s32.totalorder %s11, 0
    %p78 = por %p76, %p77
    %p79 = scmp.ne.s32.totalorder %s68, %s71
    %p80 = scmp.eq.s32.totalorder %s16, 1
    %p81 = por %p79, %p80
    %p82 = scmp.ne.s32.totalorder %s71, %s72
    %p83 = scmp.eq.s32.totalorder %s16, 0
    %p84 = por %p82, %p83
    %p85 = scmp.ne.s32.totalorder %s71, %s72
    %p86 = scmp.eq.s32.totalorder %s17, 1
    %p87 = por %p85, %p86
    %p89 = scmp.ne.s32.totalorder %s72, %s88
    %p90 = scmp.eq.s32.totalorder %s17, 0
    %p91 = por %p89, %p90
    %s93 = sadd.s32 %s92, 1
    %p96 = scmp.eq.s32.totalorder %s11, 1
    %p97 = scmp.ne.s32.totalorder %s92, %s94
    %p98 = scmp.eq.s32.totalorder %s11, 0
    %p99 = por %p97, %p98
    %p100 = scmp.ne.s32.totalorder %s92, %s94
    %p101 = scmp.eq.s32.totalorder %s16, 1
    %p102 = por %p100, %p101
    %p103 = scmp.ne.s32.totalorder %s94, %s95
    %p104 = scmp.eq.s32.totalorder %s16, 0
    %p105 = por %p103, %p104
    %p106 = scmp.ne.s32.totalorder %s94, %s95
    %p107 = scmp.eq.s32.totalorder %s17, 1
    %p108 = por %p106, %p107
    %p110 = scmp.ne.s32.totalorder %s95, %s109
    %p111 = scmp.eq.s32.totalorder %s17, 0
    %p112 = por %p110, %p111
    %s114 = sadd.s32 %s113, 1
    %p117 = scmp.eq.s32.totalorder %s11, 1
    %p118 = scmp.ne.s32.totalorder %s113, %s115
    %p119 = scmp.eq.s32.totalorder %s11, 0
    %p120 = por %p118, %p119
    %p121 = scmp.ne.s32.totalorder %s113, %s115
    %p122 = scmp.eq.s32.totalorder %s16, 1
    %p123 = por %p121, %p122
    %p124 = scmp.ne.s32.totalorder %s115, %s116
    %p125 = scmp.eq.s32.totalorder %s16, 0
    %p126 = por %p124, %p125
    %p127 = scmp.ne.s32.totalorder %s115, %s116
    %p128 = scmp.eq.s32.totalorder %s17, 1
    %p129 = por %p127, %p128
    %p131 = scmp.ne.s32.totalorder %s116, %s130
    %p132 = scmp.eq.s32.totalorder %s17, 0
    %p133 = por %p131, %p132
    %s134 = ssub.s32 %s11, %s18
    %p135 = scmp.eq.s32.totalorder %s134, 0
    %s137 = sadd.s32 %s136, 1
    %s138 = scalar_select %p135, %s136, %s137
    %p141 = pneg %p135
    %p142 = scmp.eq.s32.totalorder %s11, 1
    %p143 = por %p141, %p142
    %p144 = scmp.ne.s32.totalorder %s136, %s139
    %p145 = scmp.eq.s32.totalorder %s11, 0
    %p146 = por %p144, %p145
    %p147 = scmp.ne.s32.totalorder %s136, %s139
    %p148 = scmp.eq.s32.totalorder %s16, 1
    %p149 = por %p147, %p148
    %p150 = scmp.ne.s32.totalorder %s139, %s140
    %p151 = scmp.eq.s32.totalorder %s16, 0
    %p152 = por %p150, %p151
    %p153 = scmp.ne.s32.totalorder %s139, %s140
    %p154 = scmp.eq.s32.totalorder %s17, 1
    %p155 = por %p153, %p154
    %p157 = scmp.ne.s32.totalorder %s140, %s156
    %p158 = scmp.eq.s32.totalorder %s17, 0
    %p159 = por %p157, %p158
    %p160 = scmp.le.s32.totalorder 1, %s11
    %p161 = scmp.lt.s32.totalorder %s11, 3
    %p162 = pnand %p160, %p161
    %p163 = pneg %p162
    // Predicated region
    $region9: #{encoder_forward.12} parent=5 // pred_check
      _
    $region10: #{encoder_forward.12} parent=5 // pred_check_branch
      %165 = sbr.rel (%p162) target = $region12
    $region11: #{encoder_forward.12} parent=5 // pred_region
      %s166 = ssub.s32 %s11, 1
      // Predicated region
      $region13: #{encoder_forward.12} parent=11 // pred_check
        %p167 = pneg %p58
      $region14: #{encoder_forward.12} parent=11 // pred_check_branch
        %169 = sbr.rel (%p167) target = $region16
      $region15: #{encoder_forward.12} parent=11 // pred_region
        _
      $region16: #{encoder_forward.12} parent=11 // pred_fallthru
        _
      // Predicated region
      $region17: #{encoder_forward.12} parent=11 // pred_check
        %p170 = pneg %p105
      $region18: #{encoder_forward.12} parent=11 // pred_check_branch
        %172 = sbr.rel (%p170) target = $region20
      $region19: #{encoder_forward.12} parent=11 // pred_region
        _
      $region20: #{encoder_forward.12} parent=11 // pred_fallthru
        _
      // Predicated region
      $region21: #{encoder_forward.12} parent=11 // pred_check
        %p173 = pneg %p126
      $region22: #{encoder_forward.12} parent=11 // pred_check_branch
        %175 = sbr.rel (%p173) target = $region24
      $region23: #{encoder_forward.12} parent=11 // pred_region
        _
      $region24: #{encoder_forward.12} parent=11 // pred_fallthru
        _
    $region12: #{encoder_forward.12} parent=5 // pred_fallthru
      _
    %p176 = scmp.lt.s32.totalorder %s11, 2
    // Predicated region
    $region25: #{encoder_forward.12} parent=5 // pred_check
      %p177 = pneg %p176
    $region26: #{encoder_forward.12} parent=5 // pred_check_branch
      %179 = sbr.rel (%p177) target = $region28
    $region27: #{encoder_forward.12} parent=5 // pred_region
      // Predicated region
      $region29: #{encoder_forward.12} parent=27 // pred_check
        %p180 = pneg %p31
      $region30: #{encoder_forward.12} parent=27 // pred_check_branch
        %182 = sbr.rel (%p180) target = $region32
      $region31: #{encoder_forward.12} parent=27 // pred_region
        %p183 = scmp.lt.s32.totalorder %s11, 1
        %s184 = scalar_select %p183, %s11, 1
        %s185 = smul.addr %s184, 8
        %s186 = scalar_lea.vmem %s0, %s185
      $region32: #{encoder_forward.12} parent=27 // pred_fallthru
        _
      // Predicated region
      $region33: #{encoder_forward.12} parent=27 // pred_check
        %p187 = pneg %p78
      $region34: #{encoder_forward.12} parent=27 // pred_check_branch
        %189 = sbr.rel (%p187) target = $region36
      $region35: #{encoder_forward.12} parent=27 // pred_region
        %p190 = scmp.lt.s32.totalorder %s11, 1
        %s191 = scalar_select %p190, %s11, 1
        %s192 = smul.addr %s191, 8
        %s193 = scalar_lea.vmem %s2, %s192
      $region36: #{encoder_forward.12} parent=27 // pred_fallthru
        _
    $region28: #{encoder_forward.12} parent=5 // pred_fallthru
      _
    %p194 = scmp.le.s32.totalorder 1, %s11
    %p195 = scmp.lt.s32.totalorder %s11, 3
    %p196 = pnand %p194, %p195
    %p197 = pneg %p196
    // Predicated region
    $region37: #{encoder_forward.12} parent=5 // pred_check
      _
    $region38: #{encoder_forward.12} parent=5 // pred_check_branch
      %199 = sbr.rel (%p196) target = $region40
    $region39: #{encoder_forward.12} parent=5 // pred_region
      %s200 = ssub.s32 %s11, 1
      %p201 = scmp.lt.s32.totalorder %s16, 1
      %s202 = scalar_select %p201, %s16, 1
      %s203 = smul.addr %s202, 8
      %s204 = scalar_lea.vmem %s0, %s203
      %p205 = pneg %p37
      %p206 = pneg %p34
      %p207 = pneg %p58
      %p208 = pneg %p55
      %p209 = scmp.lt.s32.totalorder %s16, 1
      %s210 = scalar_select %p209, %s16, 1
      %s211 = smul.addr %s210, 8
      %s212 = scalar_lea.vmem %s2, %s211
      %p213 = pneg %p84
      %p214 = pneg %p81
      %p215 = pneg %p105
      %p216 = pneg %p102
      %p217 = pneg %p126
      %p218 = pneg %p123
      %p219 = pneg %p152
      %p220 = pneg %p149
      %p221 = scmp.lt.s32.totalorder %s16, 1
      %s222 = scalar_select %p221, %s16, 1
      %s223 = smul.addr %s222, 8
      %s224 = scalar_lea.vmem %s5, %s223
      %p225 = scmp.lt.s32.totalorder %s16, 1
      %s226 = scalar_select %p225, %s16, 1
      %s227 = smul.addr %s226, 8
      %s228 = scalar_lea.vmem %s0, %s227
      %p229 = scmp.lt.s32.totalorder %s16, 1
      %s230 = scalar_select %p229, %s16, 1
      %s231 = smul.addr %s230, 8
      %s232 = scalar_lea.vmem %s2, %s231
      %p233 = scmp.lt.s32.totalorder %s16, 1
      %s234 = scalar_select %p233, %s16, 1
      %s235 = smul.addr %s234, 8
      %s236 = scalar_lea.vmem %s5, %s235
      %v237 = vld [vmem:[%s228] sm:$0xff]
      %v238 = vld [vmem:[%s1] sm:$0xff]
      %v239 = vld [vmem:[%s1 + $0x8] sm:$0xff]
      %v240 = vld [vmem:[%s1 + $0x10] sm:$0xff]
      %v241 = vld [vmem:[%s1 + $0x18] sm:$0xff]
      %v242 = vld [vmem:[%s1 + $0x20] sm:$0xff]
      %v243 = vld [vmem:[%s1 + $0x28] sm:$0xff]
      %v244 = vld [vmem:[%s1 + $0x30] sm:$0xff]
      %v245 = vld [vmem:[%s1 + $0x38] sm:$0xff]
      %v246 = vld [vmem:[%s1 + $0x40] sm:$0xff]
      %v247 = vld [vmem:[%s1 + $0x48] sm:$0xff]
      %v248 = vld [vmem:[%s1 + $0x50] sm:$0xff]
      %v249 = vld [vmem:[%s1 + $0x58] sm:$0xff]
      %v250 = vld [vmem:[%s1 + $0x60] sm:$0xff]
      %v251 = vld [vmem:[%s1 + $0x68] sm:$0xff]
      %v252 = vld [vmem:[%s1 + $0x70] sm:$0xff]
      %v253 = vld [vmem:[%s1 + $0x78] sm:$0xff]
      %254 = vmatprep.subr.mxu0 0.0
      %255 = vmatpush1.msra.mxu0 %v253
      %256 = vmatprep.subr.mxu0 0.0
      %257 = vmatpush1.msra.mxu0 %v252
      %258 = vmatprep.subr.mxu0 0.0
      %259 = vmatpush1.msra.mxu0 %v251
      %260 = vmatprep.subr.mxu0 0.0
      %261 = vmatpush1.msra.mxu0 %v250
      %262 = vmatprep.subr.mxu0 0.0
      %263 = vmatpush1.msra.mxu0 %v249
      %264 = vmatprep.subr.mxu0 0.0
      %265 = vmatpush1.msra.mxu0 %v248
      %266 = vmatprep.subr.mxu0 0.0
      %267 = vmatpush1.msra.mxu0 %v247
      %268 = vmatprep.subr.mxu0 0.0
      %269 = vmatpush1.msra.mxu0 %v246
      %270 = vmatprep.subr.mxu0 0.0
      %271 = vmatpush1.msra.mxu0 %v245
      %272 = vmatprep.subr.mxu0 0.0
      %273 = vmatpush1.msra.mxu0 %v244
      %274 = vmatprep.subr.mxu0 0.0
      %275 = vmatpush1.msra.mxu0 %v243
      %276 = vmatprep.subr.mxu0 0.0
      %277 = vmatpush1.msra.mxu0 %v242
      %278 = vmatprep.subr.mxu0 0.0
      %279 = vmatpush1.msra.mxu0 %v241
      %280 = vmatprep.subr.mxu0 0.0
      %281 = vmatpush1.msra.mxu0 %v240
      %282 = vmatprep.subr.mxu0 0.0
      %283 = vmatpush1.msra.mxu0 %v239
      %284 = vmatprep.subr.mxu0 0.0
      %285 = vmatpush1.msra.mxu0 %v238
      %286 = vmatprep.subr.mxu0 0.0
      %287 = vmatpush2.msra.mxu0 0.0
      %288 = vmatprep.subr.mxu0 0.0
      %289 = vmatpush2.msra.mxu0 0.0
      %290 = vmatprep.subr.mxu0 0.0
      %291 = vmatpush2.msra.mxu0 0.0
      %292 = vmatprep.subr.mxu0 0.0
      %293 = vmatpush2.msra.mxu0 0.0
      %294 = vmatprep.subr.mxu0 0.0
      %295 = vmatpush2.msra.mxu0 0.0
      %296 = vmatprep.subr.mxu0 0.0
      %297 = vmatpush2.msra.mxu0 0.0
      %298 = vmatprep.subr.mxu0 0.0
      %299 = vmatpush2.msra.mxu0 0.0
      %300 = vmatprep.subr.mxu0 0.0
      %301 = vmatpush2.msra.mxu0 0.0
      %302 = vmatprep.subr.mxu0 0.0
      %303 = vmatpush2.msra.mxu0 0.0
      %304 = vmatprep.subr.mxu0 0.0
      %305 = vmatpush2.msra.mxu0 0.0
      %306 = vmatprep.subr.mxu0 0.0
      %307 = vmatpush2.msra.mxu0 0.0
      %308 = vmatprep.subr.mxu0 0.0
      %309 = vmatpush2.msra.mxu0 0.0
      %310 = vmatprep.subr.mxu0 0.0
      %311 = vmatpush2.msra.mxu0 0.0
      %312 = vmatprep.subr.mxu0 0.0
      %313 = vmatpush2.msra.mxu0 0.0
      %314 = vmatprep.subr.mxu0 0.0
      %315 = vmatpush2.msra.mxu0 0.0
      %316 = vmatprep.subr.mxu0 0.0
      %317 = vmatpush2.msra.mxu0 0.0
      %318 = vmatprep.mubr.f32.mxu0 0.0
      %319 = vmatmul.mubr.f32.gmra.mxu0 %v237
      %v320 = vpop.f32.mrf.mxu0
      %v321 = vadd.f32 0.0, %v320
      %v322 = vpop.f32.mrf.mxu0
      %323 = vdwg.mxu0
      %v324 = vld [vmem:[%s232] sm:$0xff]
      %v325 = vadd.f32 %v324, %v321
      %v326 = vld [vmem:[%s3] sm:$0x1]
      %v327 = vld [vmem:[%s4] sm:$0x1]
      %328 = vadd.xlane.f32.xlu0 %v325
      %v329 = vpop.xlane.xlu0 %328
      %v330 = vrcp.pop 128.0
      %v331 = vmul.f32 %v329, %v330
      %v332 = vsub.f32 %v325, %v331
      %v333 = vmul.f32 %v332, %v332
      %334 = vadd.xlane.f32.xlu0 %v333
      %v335 = vpop.xlane.xlu0 %334
      %v336 = vmul.f32 %v335, %v330
      %v337 = vadd.f32 %v336, 1e-05
      %v338 = vrsqrt.pop %v337
      %v339 = vmul.f32 %v332, %v338
      %v341 = vlaneseq
      %v342 = vshrl.u32 %v341, 7
      %v343 = vsub.s32 0, %v342
      %v344 = vrot.slane %v326, %v343
      %v346 = vmul.f32 %v339, %v344
      %v348 = vlaneseq
      %v349 = vshrl.u32 %v348, 7
      %v350 = vsub.s32 0, %v349
      %v351 = vrot.slane %v327, %v350
      %v353 = vadd.f32 %v346, %v351
      %354 = vst [vmem:[%s236] sm:$0xff] %v353
      %p355 = scmp.lt.s32.totalorder %s16, 1
      %s356 = scalar_select %p355, %s16, 1
      %s357 = smul.addr %s356, 8
      %s358 = scalar_lea.vmem %s5, %s357
      // Predicated region
      $region41: #{encoder_forward.12} parent=39 // pred_check
        %p359 = pneg %p149
      $region42: #{encoder_forward.12} parent=39 // pred_check_branch
        %361 = sbr.rel (%p359) target = $region44
      $region43: #{encoder_forward.12} parent=39 // pred_region
        _
      $region44: #{encoder_forward.12} parent=39 // pred_fallthru
        _
    $region40: #{encoder_forward.12} parent=5 // pred_fallthru
      _
    %p362 = scmp.le.s32.totalorder 2, %s11
    // Predicated region
    $region45: #{encoder_forward.12} parent=5 // pred_check
      %p363 = pneg %p362
    $region46: #{encoder_forward.12} parent=5 // pred_check_branch
      %365 = sbr.rel (%p363) target = $region48
    $region47: #{encoder_forward.12} parent=5 // pred_region
      %s366 = ssub.s32 %s11, 2
      // Predicated region
      $region49: #{encoder_forward.12} parent=47 // pred_check
        %p367 = pneg %p155
      $region50: #{encoder_forward.12} parent=47 // pred_check_branch
        %369 = sbr.rel (%p367) target = $region52
      $region51: #{encoder_forward.12} parent=47 // pred_region
        %p370 = scmp.lt.s32.totalorder %s17, 1
        %s371 = scalar_select %p370, %s17, 1
        %s372 = smul.addr %s371, 8
        %s373 = scalar_lea.vmem %s5, %s372
      $region52: #{encoder_forward.12} parent=47 // pred_fallthru
        _
    $region48: #{encoder_forward.12} parent=5 // pred_fallthru
      _
  $region6: #{encoder_forward.12} parent=0 // loop_footer
    %s15 = sadd.s32 1, %s11
  $region7: #{encoder_forward.12} parent=0 // loop_footer_branch
    %10 = sbr.rel target = $region3
  $region8: #{encoder_forward.12} parent=0 // loop_exit
    _

// kernel: encoder_forward.10
$region0: #{encoder_forward.10}
  #allocation0 [shape = 'u32[]', space=smem, size = 0x4, offset = 0x4, fixed_abs, tag = 'smem constant byte address 0x4 - core index']
  #allocation1 [shape = 'u32[144,128]{1,0:T(1,128)}', space=vmem, size = 0x12000, scoped, tag = 'internal scratch']
  %s0 = inlined_call_operand.vmem [shape: f32[16,128], index: 0, kind: input, shape index: {}]
  %s1 = inlined_call_operand.vmem [shape: f32[128,384], index: 1, kind: input, shape index: {}]
  %s2 = inlined_call_operand.vmem [shape: f32[16,384], index: 2, kind: output, shape index: {}]
  %s3 = sld [smem:[#allocation0]]
  $region41: #{encoder_forward.10} parent=0
    _
  %s5 = ssub.s32 1, %s3
  %s6 = scalar_select 0, %s5, %s3
  loop: start=0, step=1, limit=4
  $region2: #{encoder_forward.10} parent=0 // loop_pre_header
    _
  $region3: #{encoder_forward.10} parent=0 // loop_header
    %s8 = sphi 0, %s12
    %p9 = scmp.ge.s32.totalorder %s8, 4
    %s18 = sphi 0, %s20
    %s21 = sphi 0, %s18
    %s22 = sphi 0, %s21
    %s38 = sphi 0, %s22
    %s42 = sphi 0, %s42
    %s44 = sphi 0, %s42
    %s45 = sphi 0, %s44
    %s59 = sphi 0, %s45
    %s65 = sphi 0, %s67
    %s68 = sphi 0, %s65
    %s69 = sphi 0, %s68
    %s85 = sphi 0, %s69
  $region4: #{encoder_forward.10} parent=0 // loop_header_branch
    %11 = sbr.rel (%p9) target = $region8
  $region5: #{encoder_forward.10} parent=0 // loop_body
    %s13 = ssub.s32 %s8, 1
    %s14 = ssub.s32 %s8, 2
    %s15 = sadd.s32 %s8, 1
    %s16 = ssub.s32 %s8, %s15
    %p17 = scmp.eq.s32.totalorder %s16, 0
    %s19 = sadd.s32 %s18, 1
    %s20 = scalar_select %p17, %s18, %s19
    %p23 = pneg %p17
    %p24 = scmp.eq.s32.totalorder %s8, 1
    %p25 = por %p23, %p24
    %p26 = scmp.ne.s32.totalorder %s18, %s21
    %p27 = scmp.eq.s32.totalorder %s8, 0
    %p28 = por %p26, %p27
    %p29 = scmp.ne.s32.totalorder %s18, %s21
    %p30 = scmp.eq.s32.totalorder %s13, 1
    %p31 = por %p29, %p30
    %p32 = scmp.ne.s32.totalorder %s21, %s22
    %p33 = scmp.eq.s32.totalorder %s13, 0
    %p34 = por %p32, %p33
    %p35 = scmp.ne.s32.totalorder %s21, %s22
    %p36 = scmp.eq.s32.totalorder %s14, 1
    %p37 = por %p35, %p36
    %p39 = scmp.ne.s32.totalorder %s22, %s38
    %p40 = scmp.eq.s32.totalorder %s14, 0
    %p41 = por %p39, %p40
    %s43 = sadd.s32 %s42, 1
    %p46 = scmp.eq.s32.totalorder %s8, 1
    %p47 = scmp.ne.s32.totalorder %s42, %s44
    %p48 = scmp.eq.s32.totalorder %s8, 0
    %p49 = por %p47, %p48
    %p50 = scmp.ne.s32.totalorder %s42, %s44
    %p51 = scmp.eq.s32.totalorder %s13, 1
    %p52 = por %p50, %p51
    %p53 = scmp.ne.s32.totalorder %s44, %s45
    %p54 = scmp.eq.s32.totalorder %s13, 0
    %p55 = por %p53, %p54
    %p56 = scmp.ne.s32.totalorder %s44, %s45
    %p57 = scmp.eq.s32.totalorder %s14, 1
    %p58 = por %p56, %p57
    %p60 = scmp.ne.s32.totalorder %s45, %s59
    %p61 = scmp.eq.s32.totalorder %s14, 0
    %p62 = por %p60, %p61
    %s63 = ssub.s32 %s8, %s15
    %p64 = scmp.eq.s32.totalorder %s63, 0
    %s66 = sadd.s32 %s65, 1
    %s67 = scalar_select %p64, %s65, %s66
    %p70 = pneg %p64
    %p71 = scmp.eq.s32.totalorder %s8, 1
    %p72 = por %p70, %p71
    %p73 = scmp.ne.s32.totalorder %s65, %s68
    %p74 = scmp.eq.s32.totalorder %s8, 0
    %p75 = por %p73, %p74
    %p76 = scmp.ne.s32.totalorder %s65, %s68
    %p77 = scmp.eq.s32.totalorder %s13, 1
    %p78 = por %p76, %p77
    %p79 = scmp.ne.s32.totalorder %s68, %s69
    %p80 = scmp.eq.s32.totalorder %s13, 0
    %p81 = por %p79, %p80
    %p82 = scmp.ne.s32.totalorder %s68, %s69
    %p83 = scmp.eq.s32.totalorder %s14, 1
    %p84 = por %p82, %p83
    %p86 = scmp.ne.s32.totalorder %s69, %s85
    %p87 = scmp.eq.s32.totalorder %s14, 0
    %p88 = por %p86, %p87
    %p89 = scmp.le.s32.totalorder 1, %s8
    %p90 = scmp.lt.s32.totalorder %s8, 3
    %p91 = pnand %p89, %p90
    %p92 = pneg %p91
    // Predicated region
    $region9: #{encoder_forward.10} parent=5 // pred_check
      _
    $region10: #{encoder_forward.10} parent=5 // pred_check_branch
      %94 = sbr.rel (%p91) target = $region12
    $region11: #{encoder_forward.10} parent=5 // pred_region
      %s95 = ssub.s32 %s8, 1
      // Predicated region
      $region13: #{encoder_forward.10} parent=11 // pred_check
        %p96 = pneg %p55
      $region14: #{encoder_forward.10} parent=11 // pred_check_branch
        %98 = sbr.rel (%p96) target = $region16
      $region15: #{encoder_forward.10} parent=11 // pred_region
        _
      $region16: #{encoder_forward.10} parent=11 // pred_fallthru
        _
    $region12: #{encoder_forward.10} parent=5 // pred_fallthru
      _
    %p99 = scmp.lt.s32.totalorder %s8, 2
    // Predicated region
    $region17: #{encoder_forward.10} parent=5 // pred_check
      %p100 = pneg %p99
    $region18: #{encoder_forward.10} parent=5 // pred_check_branch
      %102 = sbr.rel (%p100) target = $region20
    $region19: #{encoder_forward.10} parent=5 // pred_region
      // Predicated region
      $region21: #{encoder_forward.10} parent=19 // pred_check
        %p103 = pneg %p28
      $region22: #{encoder_forward.10} parent=19 // pred_check_branch
        %105 = sbr.rel (%p103) target = $region24
      $region23: #{encoder_forward.10} parent=19 // pred_region
        %p106 = scmp.lt.s32.totalorder %s8, 1
        %s107 = scalar_select %p106, %s8, 1
        %s108 = smul.addr %s107, 8
        %s109 = scalar_lea.vmem %s0, %s108
      $region24: #{encoder_forward.10} parent=19 // pred_fallthru
        _
    $region20: #{encoder_forward.10} parent=5 // pred_fallthru
      _
    %p110 = scmp.le.s32.totalorder 1, %s8
    %p111 = scmp.lt.s32.totalorder %s8, 3
    %p112 = pnand %p110, %p111
    %p113 = pneg %p112
    // Predicated region
    $region25: #{encoder_forward.10} parent=5 // pred_check
      _
    $region26: #{encoder_forward.10} parent=5 // pred_check_branch
      %115 = sbr.rel (%p112) target = $region28
    $region27: #{encoder_forward.10} parent=5 // pred_region
      %s116 = ssub.s32 %s8, 1
      %p117 = scmp.lt.s32.totalorder %s13, 1
      %s118 = scalar_select %p117, %s13, 1
      %s119 = smul.addr %s118, 8
      %s120 = scalar_lea.vmem %s0, %s119
      %p121 = pneg %p34
      %p122 = pneg %p31
      %p123 = pneg %p55
      %p124 = pneg %p52
      %p125 = pneg %p81
      %p126 = pneg %p78
      %p127 = scmp.lt.s32.totalorder %s13, 1
      %s128 = scalar_select %p127, %s13, 1
      %s129 = smul.addr %s128, 3
      %s130 = smul.addr %s129, 8
      %s131 = scalar_lea.vmem %s2, %s130
      %p132 = scmp.lt.s32.totalorder %s13, 1
      %s133 = scalar_select %p132, %s13, 1
      %s134 = smul.addr %s133, 8
      %s135 = scalar_lea.vmem %s0, %s134
      %p136 = scmp.lt.s32.totalorder %s13, 1
      %s137 = scalar_select %p136, %s13, 1
      %s138 = smul.addr %s137, 3
      %s139 = smul.addr %s138, 8
      %s140 = scalar_lea.vmem %s2, %s139
      %v141 = vld [vmem:[%s135] sm:$0xff]
      %v142 = vld [vmem:[%s1] sm:$0xff]
      %v143 = vld [vmem:[%s1 + $0x8] sm:$0xff]
      %v144 = vld [vmem:[%s1 + $0x10] sm:$0xff]
      %v145 = vld [vmem:[%s1 + $0x18] sm:$0xff]
      %v146 = vld [vmem:[%s1 + $0x20] sm:$0xff]
      %v147 = vld [vmem:[%s1 + $0x28] sm:$0xff]
      %v148 = vld [vmem:[%s1 + $0x30] sm:$0xff]
      %v149 = vld [vmem:[%s1 + $0x38] sm:$0xff]
      %v150 = vld [vmem:[%s1 + $0x40] sm:$0xff]
      %v151 = vld [vmem:[%s1 + $0x48] sm:$0xff]
      %v152 = vld [vmem:[%s1 + $0x50] sm:$0xff]
      %v153 = vld [vmem:[%s1 + $0x58] sm:$0xff]
      %v154 = vld [vmem:[%s1 + $0x60] sm:$0xff]
      %v155 = vld [vmem:[%s1 + $0x68] sm:$0xff]
      %v156 = vld [vmem:[%s1 + $0x70] sm:$0xff]
      %v157 = vld [vmem:[%s1 + $0x78] sm:$0xff]
      %v158 = vld [vmem:[%s1 + $0x80] sm:$0xff]
      %v159 = vld [vmem:[%s1 + $0x88] sm:$0xff]
      %v160 = vld [vmem:[%s1 + $0x90] sm:$0xff]
      %v161 = vld [vmem:[%s1 + $0x98] sm:$0xff]
      %v162 = vld [vmem:[%s1 + $0xa0] sm:$0xff]
      %v163 = vld [vmem:[%s1 + $0xa8] sm:$0xff]
      %v164 = vld [vmem:[%s1 + $0xb0] sm:$0xff]
      %v165 = vld [vmem:[%s1 + $0xb8] sm:$0xff]
      %v166 = vld [vmem:[%s1 + $0xc0] sm:$0xff]
      %v167 = vld [vmem:[%s1 + $0xc8] sm:$0xff]
      %v168 = vld [vmem:[%s1 + $0xd0] sm:$0xff]
      %v169 = vld [vmem:[%s1 + $0xd8] sm:$0xff]
      %v170 = vld [vmem:[%s1 + $0xe0] sm:$0xff]
      %v171 = vld [vmem:[%s1 + $0xe8] sm:$0xff]
      %v172 = vld [vmem:[%s1 + $0xf0] sm:$0xff]
      %v173 = vld [vmem:[%s1 + $0xf8] sm:$0xff]
      %v174 = vld [vmem:[%s1 + $0x100] sm:$0xff]
      %v175 = vld [vmem:[%s1 + $0x108] sm:$0xff]
      %v176 = vld [vmem:[%s1 + $0x110] sm:$0xff]
      %v177 = vld [vmem:[%s1 + $0x118] sm:$0xff]
      %v178 = vld [vmem:[%s1 + $0x120] sm:$0xff]
      %v179 = vld [vmem:[%s1 + $0x128] sm:$0xff]
      %v180 = vld [vmem:[%s1 + $0x130] sm:$0xff]
      %v181 = vld [vmem:[%s1 + $0x138] sm:$0xff]
      %v182 = vld [vmem:[%s1 + $0x140] sm:$0xff]
      %v183 = vld [vmem:[%s1 + $0x148] sm:$0xff]
      %v184 = vld [vmem:[%s1 + $0x150] sm:$0xff]
      %v185 = vld [vmem:[%s1 + $0x158] sm:$0xff]
      %v186 = vld [vmem:[%s1 + $0x160] sm:$0xff]
      %v187 = vld [vmem:[%s1 + $0x168] sm:$0xff]
      %v188 = vld [vmem:[%s1 + $0x170] sm:$0xff]
      %v189 = vld [vmem:[%s1 + $0x178] sm:$0xff]
      %190 = vmatprep.subr.mxu0 %v188
      %191 = vmatpush1.msra.mxu0 %v187
      %192 = vmatprep.subr.mxu0 %v185
      %193 = vmatpush1.msra.mxu0 %v184
      %194 = vmatprep.subr.mxu0 %v182
      %195 = vmatpush1.msra.mxu0 %v181
      %196 = vmatprep.subr.mxu0 %v179
      %197 = vmatpush1.msra.mxu0 %v178
      %198 = vmatprep.subr.mxu0 %v176
      %199 = vmatpush1.msra.mxu0 %v175
      %200 = vmatprep.subr.mxu0 %v173
      %201 = vmatpush1.msra.mxu0 %v172
      %202 = vmatprep.subr.mxu0 %v170
      %203 = vmatpush1.msra.mxu0 %v169
      %204 = vmatprep.subr.mxu0 %v167
      %205 = vmatpush1.msra.mxu0 %v166
      %206 = vmatprep.subr.mxu0 %v164
      %207 = vmatpush1.msra.mxu0 %v163
      %208 = vmatprep.subr.mxu0 %v161
      %209 = vmatpush1.msra.mxu0 %v160
      %210 = vmatprep.subr.mxu0 %v158
      %211 = vmatpush1.msra.mxu0 %v157
      %212 = vmatprep.subr.mxu0 %v155
      %213 = vmatpush1.msra.mxu0 %v154
      %214 = vmatprep.subr.mxu0 %v152
      %215 = vmatpush1.msra.mxu0 %v151
      %216 = vmatprep.subr.mxu0 %v149
      %217 = vmatpush1.msra.mxu0 %v148
      %218 = vmatprep.subr.mxu0 %v146
      %219 = vmatpush1.msra.mxu0 %v145
      %220 = vmatprep.subr.mxu0 %v143
      %221 = vmatpush1.msra.mxu0 %v142
      %222 = vmatprep.subr.mxu0 0.0
      %223 = vmatpush2.msra.mxu0 0.0
      %224 = vmatprep.subr.mxu0 0.0
      %225 = vmatpush2.msra.mxu0 0.0
      %226 = vmatprep.subr.mxu0 0.0
      %227 = vmatpush2.msra.mxu0 0.0
      %228 = vmatprep.subr.mxu0 0.0
      %229 = vmatpush2.msra.mxu0 0.0
      %230 = vmatprep.subr.mxu0 0.0
      %231 = vmatpush2.msra.mxu0 0.0
      %232 = vmatprep.subr.mxu0 0.0
      %233 = vmatpush2.msra.mxu0 0.0
      %234 = vmatprep.subr.mxu0 0.0
      %235 = vmatpush2.msra.mxu0 0.0
      %236 = vmatprep.subr.mxu0 0.0
      %237 = vmatpush2.msra.mxu0 0.0
      %238 = vmatprep.subr.mxu0 0.0
      %239 = vmatpush2.msra.mxu0 0.0
      %240 = vmatprep.subr.mxu0 0.0
      %241 = vmatpush2.msra.mxu0 0.0
      %242 = vmatprep.subr.mxu0 0.0
      %243 = vmatpush2.msra.mxu0 0.0
      %244 = vmatprep.subr.mxu0 0.0
      %245 = vmatpush2.msra.mxu0 0.0
      %246 = vmatprep.subr.mxu0 0.0
      %247 = vmatpush2.msra.mxu0 0.0
      %248 = vmatprep.subr.mxu0 0.0
      %249 = vmatpush2.msra.mxu0 0.0
      %250 = vmatprep.subr.mxu0 0.0
      %251 = vmatpush2.msra.mxu0 0.0
      %252 = vmatprep.subr.mxu0 0.0
      %253 = vmatpush2.msra.mxu0 0.0
      %254 = vmatprep.mubr.f32.mxu0 0.0
      %255 = vmatmul.mubr.f32.gmra.mxu0 %v141
      %v256 = vpop.f32.mrf.mxu0
      %v257 = vadd.f32 0.0, %v256
      %v258 = vpop.f32.mrf.mxu0
      %v259 = vadd.f32 0.0, %v258
      %260 = vdwg.mxu0
      %261 = vmatprep.subr.mxu0 0.0
      %262 = vmatpush1.msra.mxu0 %v189
      %263 = vmatprep.subr.mxu0 0.0
      %264 = vmatpush1.msra.mxu0 %v186
      %265 = vmatprep.subr.mxu0 0.0
      %266 = vmatpush1.msra.mxu0 %v183
      %267 = vmatprep.subr.mxu0 0.0
      %268 = vmatpush1.msra.mxu0 %v180
      %269 = vmatprep.subr.mxu0 0.0
      %270 = vmatpush1.msra.mxu0 %v177
      %271 = vmatprep.subr.mxu0 0.0
      %272 = vmatpush1.msra.mxu0 %v174
      %273 = vmatprep.subr.mxu0 0.0
      %274 = vmatpush1.msra.mxu0 %v171
      %275 = vmatprep.subr.mxu0 0.0
      %276 = vmatpush1.msra.mxu0 %v168
      %277 = vmatprep.subr.mxu0 0.0
      %278 = vmatpush1.msra.mxu0 %v165
      %279 = vmatprep.subr.mxu0 0.0
      %280 = vmatpush1.msra.mxu0 %v162
      %281 = vmatprep.subr.mxu0 0.0
      %282 = vmatpush1.msra.mxu0 %v159
      %283 = vmatprep.subr.mxu0 0.0
      %284 = vmatpush1.msra.mxu0 %v156
      %285 = vmatprep.subr.mxu0 0.0
      %286 = vmatpush1.msra.mxu0 %v153
      %287 = vmatprep.subr.mxu0 0.0
      %288 = vmatpush1.msra.mxu0 %v150
      %289 = vmatprep.subr.mxu0 0.0
      %290 = vmatpush1.msra.mxu0 %v147
      %291 = vmatprep.subr.mxu0 0.0
      %292 = vmatpush1.msra.mxu0 %v144
      %293 = vmatprep.subr.mxu0 0.0
      %294 = vmatpush2.msra.mxu0 0.0
      %295 = vmatprep.subr.mxu0 0.0
      %296 = vmatpush2.msra.mxu0 0.0
      %297 = vmatprep.subr.mxu0 0.0
      %298 = vmatpush2.msra.mxu0 0.0
      %299 = vmatprep.subr.mxu0 0.0
      %300 = vmatpush2.msra.mxu0 0.0
      %301 = vmatprep.subr.mxu0 0.0
      %302 = vmatpush2.msra.mxu0 0.0
      %303 = vmatprep.subr.mxu0 0.0
      %304 = vmatpush2.msra.mxu0 0.0
      %305 = vmatprep.subr.mxu0 0.0
      %306 = vmatpush2.msra.mxu0 0.0
      %307 = vmatprep.subr.mxu0 0.0
      %308 = vmatpush2.msra.mxu0 0.0
      %309 = vmatprep.subr.mxu0 0.0
      %310 = vmatpush2.msra.mxu0 0.0
      %311 = vmatprep.subr.mxu0 0.0
      %312 = vmatpush2.msra.mxu0 0.0
      %313 = vmatprep.subr.mxu0 0.0
      %314 = vmatpush2.msra.mxu0 0.0
      %315 = vmatprep.subr.mxu0 0.0
      %316 = vmatpush2.msra.mxu0 0.0
      %317 = vmatprep.subr.mxu0 0.0
      %318 = vmatpush2.msra.mxu0 0.0
      %319 = vmatprep.subr.mxu0 0.0
      %320 = vmatpush2.msra.mxu0 0.0
      %321 = vmatprep.subr.mxu0 0.0
      %322 = vmatpush2.msra.mxu0 0.0
      %323 = vmatprep.subr.mxu0 0.0
      %324 = vmatpush2.msra.mxu0 0.0
      %325 = vmatprep.mubr.f32.mxu0 0.0
      %326 = vmatmul.mubr.f32.gmra.mxu0 %v141
      %v327 = vpop.f32.mrf.mxu0
      %v328 = vadd.f32 0.0, %v327
      %v329 = vpop.f32.mrf.mxu0
      %330 = vdwg.mxu0
      %331 = vst [vmem:[%s140] sm:$0xff] %v257
      %332 = vst [vmem:[%s140 + $0x8] sm:$0xff] %v259
      %333 = vst [vmem:[%s140 + $0x10] sm:$0xff] %v328
      %p334 = scmp.lt.s32.totalorder %s13, 1
      %s335 = scalar_select %p334, %s13, 1
      %s336 = smul.addr %s335, 3
      %s337 = smul.addr %s336, 8
      %s338 = scalar_lea.vmem %s2, %s337
      // Predicated region
      $region29: #{encoder_forward.10} parent=27 // pred_check
        %p339 = pneg %p78
      $region30: #{encoder_forward.10} parent=27 // pred_check_branch
        %341 = sbr.rel (%p339) target = $region32
      $region31: #{encoder_forward.10} parent=27 // pred_region
        _
      $region32: #{encoder_forward.10} parent=27 // pred_fallthru
        _
    $region28: #{encoder_forward.10} parent=5 // pred_fallthru
      _
    %p342 = scmp.le.s32.totalorder 2, %s8
    // Predicated region
    $region33: #{encoder_forward.10} parent=5 // pred_check
      %p343 = pneg %p342
    $region34: #{encoder_forward.10} parent=5 // pred_check_branch
      %345 = sbr.rel (%p343) target = $region36
    $region35: #{encoder_forward.10} parent=5 // pred_region
      %s346 = ssub.s32 %s8, 2
      // Predicated region
      $region37: #{encoder_forward.10} parent=35 // pred_check
        %p347 = pneg %p84
      $region38: #{encoder_forward.10} parent=35 // pred_check_branch
        %349 = sbr.rel (%p347) target = $region40
      $region39: #{encoder_forward.10} parent=35 // pred_region
        %p350 = scmp.lt.s32.totalorder %s14, 1
        %s351 = scalar_select %p350, %s14, 1
        %s352 = smul.addr %s351, 3
        %s353 = smul.addr %s352, 8
        %s354 = scalar_lea.vmem %s2, %s353
      $region40: #{encoder_forward.10} parent=35 // pred_fallthru
        _
    $region36: #{encoder_forward.10} parent=5 // pred_fallthru
      _
  $region6: #{encoder_forward.10} parent=0 // loop_footer
    %s12 = sadd.s32 1, %s8
  $region7: #{encoder_forward.10} parent=0 // loop_footer_branch
    %7 = sbr.rel target = $region3
  $region8: #{encoder_forward.10} parent=0 // loop_exit
    _

// kernel: encoder_forward.11
$region0: #{encoder_forward.11}
  #allocation0 [shape = 'u32[]', space=smem, size = 0x4, offset = 0x4, fixed_abs, tag = 'smem constant byte address 0x4 - core index']
  #allocation1 [shape = 'u32[144,128]{1,0:T(1,128)}', space=vmem, size = 0x12000, scoped, tag = 'internal scratch']
  #allocation2 [shape = 's32[1]{0}', space=sflag, size = 0x4, scoped, tag = 'scoped memory for encoder_forward.11']
  #allocation3 [shape = 'u8[512]{0}', space=smem, size = 0x200, scoped, tag = 'prefetched SMEM operand 0']
  %s0 = inlined_call_operand.vmem [shape: s32[2], index: 0, kind: input, shape index: {}]
  %s1 = inlined_call_operand.vmem [shape: f32[2,8,384], index: 1, kind: input, shape index: {}]
  %s2 = inlined_call_operand.vmem [shape: f32[2,8,128], index: 2, kind: output, shape index: {}]
  %s3 = sld [smem:[#allocation0]]
  $region37: #{encoder_forward.11} parent=0
    _
  %s5 = ssub.s32 1, %s3
  %s6 = scalar_select 0, %s5, %s3
  %s7 = sshll.u32 %s0, 4
  %s8 = int_to_ptr.vmem [resolvable:$true] %s7
  %10 = dma.vmem_to_smem %s8, 16, [#allocation3], [#allocation2]
  %11 = dma.done [#allocation2], 16
  %12 = sfence
  loop: start=0, step=1, limit=4
  $region2: #{encoder_forward.11} parent=0 // loop_pre_header
    _
  $region3: #{encoder_forward.11} parent=0 // loop_header
    %s14 = sphi 0, %s18
    %p15 = scmp.ge.s32.totalorder %s14, 4
    %s24 = sphi 0, %s26
    %s27 = sphi 0, %s24
    %s28 = sphi 0, %s27
    %s44 = sphi 0, %s28
    %s50 = sphi 0, %s52
    %s53 = sphi 0, %s50
    %s54 = sphi 0, %s53
    %s70 = sphi 0, %s54
  $region4: #{encoder_forward.11} parent=0 // loop_header_branch
    %17 = sbr.rel (%p15) target = $region8
  $region5: #{encoder_forward.11} parent=0 // loop_body
    %s19 = ssub.s32 %s14, 1
    %s20 = ssub.s32 %s14, 2
    %s21 = sadd.s32 %s14, 1
    %s22 = ssub.s32 %s14, %s21
    %p23 = scmp.eq.s32.totalorder %s22, 0
    %s25 = sadd.s32 %s24, 1
    %s26 = scalar_select %p23, %s24, %s25
    %p29 = pneg %p23
    %p30 = scmp.eq.s32.totalorder %s14, 1
    %p31 = por %p29, %p30
    %p32 = scmp.ne.s32.totalorder %s24, %s27
    %p33 = scmp.eq.s32.totalorder %s14, 0
    %p34 = por %p32, %p33
    %p35 = scmp.ne.s32.totalorder %s24, %s27
    %p36 = scmp.eq.s32.totalorder %s19, 1
    %p37 = por %p35, %p36
    %p38 = scmp.ne.s32.totalorder %s27, %s28
    %p39 = scmp.eq.s32.totalorder %s19, 0
    %p40 = por %p38, %p39
    %p41 = scmp.ne.s32.totalorder %s27, %s28
    %p42 = scmp.eq.s32.totalorder %s20, 1
    %p43 = por %p41, %p42
    %p45 = scmp.ne.s32.totalorder %s28, %s44
    %p46 = scmp.eq.s32.totalorder %s20, 0
    %p47 = por %p45, %p46
    %s48 = ssub.s32 %s14, %s21
    %p49 = scmp.eq.s32.totalorder %s48, 0
    %s51 = sadd.s32 %s50, 1
    %s52 = scalar_select %p49, %s50, %s51
    %p55 = pneg %p49
    %p56 = scmp.eq.s32.totalorder %s14, 1
    %p57 = por %p55, %p56
    %p58 = scmp.ne.s32.totalorder %s50, %s53
    %p59 = scmp.eq.s32.totalorder %s14, 0
    %p60 = por %p58, %p59
    %p61 = scmp.ne.s32.totalorder %s50, %s53
    %p62 = scmp.eq.s32.totalorder %s19, 1
    %p63 = por %p61, %p62
    %p64 = scmp.ne.s32.totalorder %s53, %s54
    %p65 = scmp.eq.s32.totalorder %s19, 0
    %p66 = por %p64, %p65
    %p67 = scmp.ne.s32.totalorder %s53, %s54
    %p68 = scmp.eq.s32.totalorder %s20, 1
    %p69 = por %p67, %p68
    %p71 = scmp.ne.s32.totalorder %s54, %s70
    %p72 = scmp.eq.s32.totalorder %s20, 0
    %p73 = por %p71, %p72
    %p74 = scmp.le.s32.totalorder 1, %s14
    %p75 = scmp.lt.s32.totalorder %s14, 3
    %p76 = pnand %p74, %p75
    %p77 = pneg %p76
    // Predicated region
    $region9: #{encoder_forward.11} parent=5 // pred_check
      _
    $region10: #{encoder_forward.11} parent=5 // pred_check_branch
      %79 = sbr.rel (%p76) target = $region12
    $region11: #{encoder_forward.11} parent=5 // pred_region
      %s80 = ssub.s32 %s14, 1
    $region12: #{encoder_forward.11} parent=5 // pred_fallthru
      _
    %p81 = scmp.lt.s32.totalorder %s14, 2
    // Predicated region
    $region13: #{encoder_forward.11} parent=5 // pred_check
      %p82 = pneg %p81
    $region14: #{encoder_forward.11} parent=5 // pred_check_branch
      %84 = sbr.rel (%p82) target = $region16
    $region15: #{encoder_forward.11} parent=5 // pred_region
      // Predicated region
      $region17: #{encoder_forward.11} parent=15 // pred_check
        %p85 = pneg %p34
      $region18: #{encoder_forward.11} parent=15 // pred_check_branch
        %87 = sbr.rel (%p85) target = $region20
      $region19: #{encoder_forward.11} parent=15 // pred_region
        %p88 = scmp.lt.s32.totalorder %s14, 1
        %s89 = scalar_select %p88, %s14, 1
        %s90 = smul.addr %s89, 3
        %s91 = smul.addr %s90, 8
        %s92 = scalar_lea.vmem %s1, %s91
      $region20: #{encoder_forward.11} parent=15 // pred_fallthru
        _
    $region16: #{encoder_forward.11} parent=5 // pred_fallthru
      _
    %p93 = scmp.le.s32.totalorder 1, %s14
    %p94 = scmp.lt.s32.totalorder %s14, 3
    %p95 = pnand %p93, %p94
    %p96 = pneg %p95
    // Predicated region
    $region21: #{encoder_forward.11} parent=5 // pred_check
      _
    $region22: #{encoder_forward.11} parent=5 // pred_check_branch
      %98 = sbr.rel (%p95) target = $region24
    $region23: #{encoder_forward.11} parent=5 // pred_region
      %s99 = ssub.s32 %s14, 1
      %p100 = scmp.lt.s32.totalorder %s19, 1
      %s101 = scalar_select %p100, %s19, 1
      %s102 = smul.addr %s101, 3
      %s103 = smul.addr %s102, 8
      %s104 = scalar_lea.vmem %s1, %s103
      %p105 = pneg %p40
      %p106 = pneg %p37
      %p107 = pneg %p66
      %p108 = pneg %p63
      %p109 = scmp.lt.s32.totalorder %s19, 1
      %s110 = scalar_select %p109, %s19, 1
      %s111 = smul.addr %s110, 8
      %s112 = scalar_lea.vmem %s2, %s111
      %p113 = scmp.lt.s32.totalorder %s19, 1
      %s114 = scalar_select %p113, %s19, 1
      %s115 = smul.addr %s114, 3
      %s116 = smul.addr %s115, 8
      %s117 = scalar_lea.vmem %s1, %s116
      %p118 = scmp.lt.s32.totalorder %s19, 1
      %s119 = scalar_select %p118, %s19, 1
      %s120 = smul.addr %s119, 8
      %s121 = scalar_lea.vmem %s2, %s120
      %v122 = vld [vmem:[%s117] sm:$0xff]
      %v123 = vld [vmem:[%s117 + $0x8] sm:$0xff]
      %v124 = vld [vmem:[%s117 + $0x10] sm:$0xff]
      %s125 = sld [smem:[#allocation3 + %s19]]
      %v126 = vlaneseq
      %v127 = vand.u32 %v126, 127
      %v128 = vstv %s125
      %vm129 = vcmp.lt.s32.totalorder %v127, %v128
      %vm130 = vcmask 261120
      %v132 = vsel %vm130, %v122, 0
      %v135 = vsel %vm130, %v123, 0
      %137 = vmatprep.subr.mxu0 0.0
      %138 = vmatpush1.xpose.msra.mxu0 0.0
      %139 = vmatprep.subr.mxu0 0.0
      %140 = vmatpush1.xpose.msra.mxu0 0.0
      %141 = vmatprep.subr.mxu0 0.0
      %142 = vmatpush1.xpose.msra.mxu0 0.0
      %143 = vmatprep.subr.mxu0 0.0
      %144 = vmatpush1.xpose.msra.mxu0 0.0
      %145 = vmatprep.subr.mxu0 0.0
      %146 = vmatpush1.xpose.msra.mxu0 0.0
      %147 = vmatprep.subr.mxu0 0.0
      %148 = vmatpush1.xpose.msra.mxu0 0.0
      %149 = vmatprep.subr.mxu0 0.0
      %150 = vmatpush1.xpose.msra.mxu0 0.0
      %151 = vmatprep.subr.mxu0 0.0
      %152 = vmatpush1.xpose.msra.mxu0 0.0
      %153 = vmatprep.subr.mxu0 0.0
      %154 = vmatpush1.xpose.msra.mxu0 0.0
      %155 = vmatprep.subr.mxu0 0.0
      %156 = vmatpush1.xpose.msra.mxu0 0.0
      %157 = vmatprep.subr.mxu0 0.0
      %158 = vmatpush1.xpose.msra.mxu0 0.0
      %159 = vmatprep.subr.mxu0 0.0
      %160 = vmatpush1.xpose.msra.mxu0 0.0
      %161 = vmatprep.subr.mxu0 0.0
      %162 = vmatpush1.xpose.msra.mxu0 0.0
      %163 = vmatprep.subr.mxu0 0.0
      %164 = vmatpush1.xpose.msra.mxu0 0.0
      %165 = vmatprep.subr.mxu0 0.0
      %166 = vmatpush1.xpose.msra.mxu0 0.0
      %167 = vmatprep.subr.mxu0 0.0
      %168 = vmatpush1.xpose.msra.mxu0 %v135
      %169 = vmatprep.subr.mxu0 0.0
      %170 = vmatpush2.xpose.msra.mxu0 0.0
      %171 = vmatprep.subr.mxu0 0.0
      %172 = vmatpush2.xpose.msra.mxu0 0.0
      %173 = vmatprep.subr.mxu0 0.0
      %174 = vmatpush2.xpose.msra.mxu0 0.0
      %175 = vmatprep.subr.mxu0 0.0
      %176 = vmatpush2.xpose.msra.mxu0 0.0
      %177 = vmatprep.subr.mxu0 0.0
      %178 = vmatpush2.xpose.msra.mxu0 0.0
      %179 = vmatprep.subr.mxu0 0.0
      %180 = vmatpush2.xpose.msra.mxu0 0.0
      %181 = vmatprep.subr.mxu0 0.0
      %182 = vmatpush2.xpose.msra.mxu0 0.0
      %183 = vmatprep.subr.mxu0 0.0
      %184 = vmatpush2.xpose.msra.mxu0 0.0
      %185 = vmatprep.subr.mxu0 0.0
      %186 = vmatpush2.xpose.msra.mxu0 0.0
      %187 = vmatprep.subr.mxu0 0.0
      %188 = vmatpush2.xpose.msra.mxu0 0.0
      %189 = vmatprep.subr.mxu0 0.0
      %190 = vmatpush2.xpose.msra.mxu0 0.0
      %191 = vmatprep.subr.mxu0 0.0
      %192 = vmatpush2.xpose.msra.mxu0 0.0
      %193 = vmatprep.subr.mxu0 0.0
      %194 = vmatpush2.xpose.msra.mxu0 0.0
      %195 = vmatprep.subr.mxu0 0.0
      %196 = vmatpush2.xpose.msra.mxu0 0.0
      %197 = vmatprep.subr.mxu0 0.0
      %198 = vmatpush2.xpose.msra.mxu0 0.0
      %199 = vmatprep.subr.mxu0 0.0
      %200 = vmatpush2.xpose.msra.mxu0 0.0
      %201 = vmatprep.mubr.f32.mxu0 0.0
      %202 = vmatmul.mubr.f32.gmra.mxu0 %v132
      %v203 = vpop.f32.mrf.mxu0
      %v204 = vadd.f32 0.0, %v203
      %v205 = vpop.f32.mrf.mxu0
      %206 = vdwg.mxu0
      %v207 = vmul.f32 %v204, 0.17677669
      %v208 = vsel %vm129, %v207, -1000000.0
      %vm209 = vcmask 64512
      %v210 = vsel %vm209, %v208, -inf
      %211 = vmax.xlane.f32.xlu0 %v210
      %v212 = vpop.xlane.xlu0 %211
      %v213 = vsub.f32 %v208, %v212
      %v214 = vmul.f32 %v213, 1.442695
      %v215 = vpow.pop %v214
      %v216 = vsel %vm209, %v215, 0.0
      %217 = vadd.xlane.f32.xlu0 %v216
      %v218 = vpop.xlane.xlu0 %217
      %v219 = vrcp.pop %v218
      %v220 = vmul.f32 %v215, %v219
      %v222 = vsel %vm209, %v220, 0
      %224 = vmatprep.subr.mxu0 0.0
      %225 = vmatpush1.msra.mxu0 0.0
      %226 = vmatprep.subr.mxu0 0.0
      %227 = vmatpush1.msra.mxu0 0.0
      %228 = vmatprep.subr.mxu0 0.0
      %229 = vmatpush1.msra.mxu0 0.0
      %230 = vmatprep.subr.mxu0 0.0
      %231 = vmatpush1.msra.mxu0 0.0
      %232 = vmatprep.subr.mxu0 0.0
      %233 = vmatpush1.msra.mxu0 0.0
      %234 = vmatprep.subr.mxu0 0.0
      %235 = vmatpush1.msra.mxu0 0.0
      %236 = vmatprep.subr.mxu0 0.0
      %237 = vmatpush1.msra.mxu0 0.0
      %238 = vmatprep.subr.mxu0 0.0
      %239 = vmatpush1.msra.mxu0 0.0
      %240 = vmatprep.subr.mxu0 0.0
      %241 = vmatpush1.msra.mxu0 0.0
      %242 = vmatprep.subr.mxu0 0.0
      %243 = vmatpush1.msra.mxu0 0.0
      %244 = vmatprep.subr.mxu0 0.0
      %245 = vmatpush1.msra.mxu0 0.0
      %246 = vmatprep.subr.mxu0 0.0
      %247 = vmatpush1.msra.mxu0 0.0
      %248 = vmatprep.subr.mxu0 0.0
      %249 = vmatpush1.msra.mxu0 0.0
      %250 = vmatprep.subr.mxu0 0.0
      %251 = vmatpush1.msra.mxu0 0.0
      %252 = vmatprep.subr.mxu0 0.0
      %253 = vmatpush1.msra.mxu0 0.0
      %254 = vmatprep.subr.mxu0 0.0
      %255 = vmatpush1.msra.mxu0 %v124
      %256 = vmatprep.subr.mxu0 0.0
      %257 = vmatpush2.msra.mxu0 0.0
      %258 = vmatprep.subr.mxu0 0.0
      %259 = vmatpush2.msra.mxu0 0.0
      %260 = vmatprep.subr.mxu0 0.0
      %261 = vmatpush2.msra.mxu0 0.0
      %262 = vmatprep.subr.mxu0 0.0
      %263 = vmatpush2.msra.mxu0 0.0
      %264 = vmatprep.subr.mxu0 0.0
      %265 = vmatpush2.msra.mxu0 0.0
      %266 = vmatprep.subr.mxu0 0.0
      %267 = vmatpush2.msra.mxu0 0.0
      %268 = vmatprep.subr.mxu0 0.0
      %269 = vmatpush2.msra.mxu0 0.0
      %270 = vmatprep.subr.mxu0 0.0
      %271 = vmatpush2.msra.mxu0 0.0
      %272 = vmatprep.subr.mxu0 0.0
      %273 = vmatpush2.msra.mxu0 0.0
      %274 = vmatprep.subr.mxu0 0.0
      %275 = vmatpush2.msra.mxu0 0.0
      %276 = vmatprep.subr.mxu0 0.0
      %277 = vmatpush2.msra.mxu0 0.0
      %278 = vmatprep.subr.mxu0 0.0
      %279 = vmatpush2.msra.mxu0 0.0
      %280 = vmatprep.subr.mxu0 0.0
      %281 = vmatpush2.msra.mxu0 0.0
      %282 = vmatprep.subr.mxu0 0.0
      %283 = vmatpush2.msra.mxu0 0.0
      %284 = vmatprep.subr.mxu0 0.0
      %285 = vmatpush2.msra.mxu0 0.0
      %286 = vmatprep.subr.mxu0 0.0
      %287 = vmatpush2.msra.mxu0 0.0
      %288 = vmatprep.mubr.f32.mxu0 0.0
      %289 = vmatmul.mubr.f32.gmra.mxu0 %v222
      %v290 = vpop.f32.mrf.mxu0
      %v291 = vadd.f32 0.0, %v290
      %v292 = vpop.f32.mrf.mxu0
      %293 = vdwg.mxu0
      %294 = vrot.lane.b32.xlu0 %v122, 96
      %v295 = vpop.permute.xlu0 %294
      %296 = vrot.lane.b32.xlu0 %v123, 96
      %v297 = vpop.permute.xlu0 %296
      %v298 = vsel %vm130, %v295, 0
      %v300 = vsel %vm130, %v297, 0
      %302 = vmatprep.subr.mxu0 0.0
      %303 = vmatpush1.xpose.msra.mxu0 0.0
      %304 = vmatprep.subr.mxu0 0.0
      %305 = vmatpush1.xpose.msra.mxu0 0.0
      %306 = vmatprep.subr.mxu0 0.0
      %307 = vmatpush1.xpose.msra.mxu0 0.0
      %308 = vmatprep.subr.mxu0 0.0
      %309 = vmatpush1.xpose.msra.mxu0 0.0
      %310 = vmatprep.subr.mxu0 0.0
      %311 = vmatpush1.xpose.msra.mxu0 0.0
      %312 = vmatprep.subr.mxu0 0.0
      %313 = vmatpush1.xpose.msra.mxu0 0.0
      %314 = vmatprep.subr.mxu0 0.0
      %315 = vmatpush1.xpose.msra.mxu0 0.0
      %316 = vmatprep.subr.mxu0 0.0
      %317 = vmatpush1.xpose.msra.mxu0 0.0
      %318 = vmatprep.subr.mxu0 0.0
      %319 = vmatpush1.xpose.msra.mxu0 0.0
      %320 = vmatprep.subr.mxu0 0.0
      %321 = vmatpush1.xpose.msra.mxu0 0.0
      %322 = vmatprep.subr.mxu0 0.0
      %323 = vmatpush1.xpose.msra.mxu0 0.0
      %324 = vmatprep.subr.mxu0 0.0
      %325 = vmatpush1.xpose.msra.mxu0 0.0
      %326 = vmatprep.subr.mxu0 0.0
      %327 = vmatpush1.xpose.msra.mxu0 0.0
      %328 = vmatprep.subr.mxu0 0.0
      %329 = vmatpush1.xpose.msra.mxu0 0.0
      %330 = vmatprep.subr.mxu0 0.0
      %331 = vmatpush1.xpose.msra.mxu0 0.0
      %332 = vmatprep.subr.mxu0 0.0
      %333 = vmatpush1.xpose.msra.mxu0 %v300
      %334 = vmatprep.subr.mxu0 0.0
      %335 = vmatpush2.xpose.msra.mxu0 0.0
      %336 = vmatprep.subr.mxu0 0.0
      %337 = vmatpush2.xpose.msra.mxu0 0.0
      %338 = vmatprep.subr.mxu0 0.0
      %339 = vmatpush2.xpose.msra.mxu0 0.0
      %340 = vmatprep.subr.mxu0 0.0
      %341 = vmatpush2.xpose.msra.mxu0 0.0
      %342 = vmatprep.subr.mxu0 0.0
      %343 = vmatpush2.xpose.msra.mxu0 0.0
      %344 = vmatprep.subr.mxu0 0.0
      %345 = vmatpush2.xpose.msra.mxu0 0.0
      %346 = vmatprep.subr.mxu0 0.0
      %347 = vmatpush2.xpose.msra.mxu0 0.0
      %348 = vmatprep.subr.mxu0 0.0
      %349 = vmatpush2.xpose.msra.mxu0 0.0
      %350 = vmatprep.subr.mxu0 0.0
      %351 = vmatpush2.xpose.msra.mxu0 0.0
      %352 = vmatprep.subr.mxu0 0.0
      %353 = vmatpush2.xpose.msra.mxu0 0.0
      %354 = vmatprep.subr.mxu0 0.0
      %355 = vmatpush2.xpose.msra.mxu0 0.0
      %356 = vmatprep.subr.mxu0 0.0
      %357 = vmatpush2.xpose.msra.mxu0 0.0
      %358 = vmatprep.subr.mxu0 0.0
      %359 = vmatpush2.xpose.msra.mxu0 0.0
      %360 = vmatprep.subr.mxu0 0.0
      %361 = vmatpush2.xpose.msra.mxu0 0.0
      %362 = vmatprep.subr.mxu0 0.0
      %363 = vmatpush2.xpose.msra.mxu0 0.0
      %364 = vmatprep.subr.mxu0 0.0
      %365 = vmatpush2.xpose.msra.mxu0 0.0
      %366 = vmatprep.mubr.f32.mxu0 0.0
      %367 = vmatmul.mubr.f32.gmra.mxu0 %v298
      %v368 = vpop.f32.mrf.mxu0
      %v369 = vadd.f32 0.0, %v368
      %v370 = vpop.f32.mrf.mxu0
      %371 = vdwg.mxu0
      %v372 = vmul.f32 %v369, 0.17677669
      %v373 = vsel %vm129, %v372, -1000000.0
      %v374 = vsel %vm209, %v373, -inf
      %375 = vmax.xlane.f32.xlu0 %v374
      %v376 = vpop.xlane.xlu0 %375
      %v377 = vsub.f32 %v373, %v376
      %v378 = vmul.f32 %v377, 1.442695
      %v379 = vpow.pop %v378
      %v380 = vsel %vm209, %v379, 0.0
      %381 = vadd.xlane.f32.xlu0 %v380
      %v382 = vpop.xlane.xlu0 %381
      %v383 = vrcp.pop %v382
      %v384 = vmul.f32 %v379, %v383
      %386 = vrot.lane.b32.xlu0 %v124, 96
      %v387 = vpop.permute.xlu0 %386
      %v390 = vsel %vm209, %v384, 0
      %392 = vmatprep.subr.mxu0 0.0
      %393 = vmatpush1.msra.mxu0 0.0
      %394 = vmatprep.subr.mxu0 0.0
      %395 = vmatpush1.msra.mxu0 0.0
      %396 = vmatprep.subr.mxu0 0.0
      %397 = vmatpush1.msra.mxu0 0.0
      %398 = vmatprep.subr.mxu0 0.0
      %399 = vmatpush1.msra.mxu0 0.0
      %400 = vmatprep.subr.mxu0 0.0
      %401 = vmatpush1.msra.mxu0 0.0
      %402 = vmatprep.subr.mxu0 0.0
      %403 = vmatpush1.msra.mxu0 0.0
      %404 = vmatprep.subr.mxu0 0.0
      %405 = vmatpush1.msra.mxu0 0.0
      %406 = vmatprep.subr.mxu0 0.0
      %407 = vmatpush1.msra.mxu0 0.0
      %408 = vmatprep.subr.mxu0 0.0
      %409 = vmatpush1.msra.mxu0 0.0
      %410 = vmatprep.subr.mxu0 0.0
      %411 = vmatpush1.msra.mxu0 0.0
      %412 = vmatprep.subr.mxu0 0.0
      %413 = vmatpush1.msra.mxu0 0.0
      %414 = vmatprep.subr.mxu0 0.0
      %415 = vmatpush1.msra.mxu0 0.0
      %416 = vmatprep.subr.mxu0 0.0
      %417 = vmatpush1.msra.mxu0 0.0
      %418 = vmatprep.subr.mxu0 0.0
      %419 = vmatpush1.msra.mxu0 0.0
      %420 = vmatprep.subr.mxu0 0.0
      %421 = vmatpush1.msra.mxu0 0.0
      %422 = vmatprep.subr.mxu0 0.0
      %423 = vmatpush1.msra.mxu0 %v387
      %424 = vmatprep.subr.mxu0 0.0
      %425 = vmatpush2.msra.mxu0 0.0
      %426 = vmatprep.subr.mxu0 0.0
      %427 = vmatpush2.msra.mxu0 0.0
      %428 = vmatprep.subr.mxu0 0.0
      %429 = vmatpush2.msra.mxu0 0.0
      %430 = vmatprep.subr.mxu0 0.0
      %431 = vmatpush2.msra.mxu0 0.0
      %432 = vmatprep.subr.mxu0 0.0
      %433 = vmatpush2.msra.mxu0 0.0
      %434 = vmatprep.subr.mxu0 0.0
      %435 = vmatpush2.msra.mxu0 0.0
      %436 = vmatprep.subr.mxu0 0.0
      %437 = vmatpush2.msra.mxu0 0.0
      %438 = vmatprep.subr.mxu0 0.0
      %439 = vmatpush2.msra.mxu0 0.0
      %440 = vmatprep.subr.mxu0 0.0
      %441 = vmatpush2.msra.mxu0 0.0
      %442 = vmatprep.subr.mxu0 0.0
      %443 = vmatpush2.msra.mxu0 0.0
      %444 = vmatprep.subr.mxu0 0.0
      %445 = vmatpush2.msra.mxu0 0.0
      %446 = vmatprep.subr.mxu0 0.0
      %447 = vmatpush2.msra.mxu0 0.0
      %448 = vmatprep.subr.mxu0 0.0
      %449 = vmatpush2.msra.mxu0 0.0
      %450 = vmatprep.subr.mxu0 0.0
      %451 = vmatpush2.msra.mxu0 0.0
      %452 = vmatprep.subr.mxu0 0.0
      %453 = vmatpush2.msra.mxu0 0.0
      %454 = vmatprep.subr.mxu0 0.0
      %455 = vmatpush2.msra.mxu0 0.0
      %456 = vmatprep.mubr.f32.mxu0 0.0
      %457 = vmatmul.mubr.f32.gmra.mxu0 %v390
      %v458 = vpop.f32.mrf.mxu0
      %v459 = vadd.f32 0.0, %v458
      %v460 = vpop.f32.mrf.mxu0
      %461 = vdwg.mxu0
      %462 = vrot.lane.b32.xlu0 %v122, 64
      %v463 = vpop.permute.xlu0 %462
      %464 = vrot.lane.b32.xlu0 %v123, 64
      %v465 = vpop.permute.xlu0 %464
      %v466 = vsel %vm130, %v463, 0
      %v468 = vsel %vm130, %v465, 0
      %470 = vmatprep.subr.mxu0 0.0
      %471 = vmatpush1.xpose.msra.mxu0 0.0
      %472 = vmatprep.subr.mxu0 0.0
      %473 = vmatpush1.xpose.msra.mxu0 0.0
      %474 = vmatprep.subr.mxu0 0.0
      %475 = vmatpush1.xpose.msra.mxu0 0.0
      %476 = vmatprep.subr.mxu0 0.0
      %477 = vmatpush1.xpose.msra.mxu0 0.0
      %478 = vmatprep.subr.mxu0 0.0
      %479 = vmatpush1.xpose.msra.mxu0 0.0
      %480 = vmatprep.subr.mxu0 0.0
      %481 = vmatpush1.xpose.msra.mxu0 0.0
      %482 = vmatprep.subr.mxu0 0.0
      %483 = vmatpush1.xpose.msra.mxu0 0.0
      %484 = vmatprep.subr.mxu0 0.0
      %485 = vmatpush1.xpose.msra.mxu0 0.0
      %486 = vmatprep.subr.mxu0 0.0
      %487 = vmatpush1.xpose.msra.mxu0 0.0
      %488 = vmatprep.subr.mxu0 0.0
      %489 = vmatpush1.xpose.msra.mxu0 0.0
      %490 = vmatprep.subr.mxu0 0.0
      %491 = vmatpush1.xpose.msra.mxu0 0.0
      %492 = vmatprep.subr.mxu0 0.0
      %493 = vmatpush1.xpose.msra.mxu0 0.0
      %494 = vmatprep.subr.mxu0 0.0
      %495 = vmatpush1.xpose.msra.mxu0 0.0
      %496 = vmatprep.subr.mxu0 0.0
      %497 = vmatpush1.xpose.msra.mxu0 0.0
      %498 = vmatprep.subr.mxu0 0.0
      %499 = vmatpush1.xpose.msra.mxu0 0.0
      %500 = vmatprep.subr.mxu0 0.0
      %501 = vmatpush1.xpose.msra.mxu0 %v468
      %502 = vmatprep.subr.mxu0 0.0
      %503 = vmatpush2.xpose.msra.mxu0 0.0
      %504 = vmatprep.subr.mxu0 0.0
      %505 = vmatpush2.xpose.msra.mxu0 0.0
      %506 = vmatprep.subr.mxu0 0.0
      %507 = vmatpush2.xpose.msra.mxu0 0.0
      %508 = vmatprep.subr.mxu0 0.0
      %509 = vmatpush2.xpose.msra.mxu0 0.0
      %510 = vmatprep.subr.mxu0 0.0
      %511 = vmatpush2.xpose.msra.mxu0 0.0
      %512 = vmatprep.subr.mxu0 0.0
      %513 = vmatpush2.xpose.msra.mxu0 0.0
      %514 = vmatprep.subr.mxu0 0.0
      %515 = vmatpush2.xpose.msra.mxu0 0.0
      %516 = vmatprep.subr.mxu0 0.0
      %517 = vmatpush2.xpose.msra.mxu0 0.0
      %518 = vmatprep.subr.mxu0 0.0
      %519 = vmatpush2.xpose.msra.mxu0 0.0
      %520 = vmatprep.subr.mxu0 0.0
      %521 = vmatpush2.xpose.msra.mxu0 0.0
      %522 = vmatprep.subr.mxu0 0.0
      %523 = vmatpush2.xpose.msra.mxu0 0.0
      %524 = vmatprep.subr.mxu0 0.0
      %525 = vmatpush2.xpose.msra.mxu0 0.0
      %526 = vmatprep.subr.mxu0 0.0
      %527 = vmatpush2.xpose.msra.mxu0 0.0
      %528 = vmatprep.subr.mxu0 0.0
      %529 = vmatpush2.xpose.msra.mxu0 0.0
      %530 = vmatprep.subr.mxu0 0.0
      %531 = vmatpush2.xpose.msra.mxu0 0.0
      %532 = vmatprep.subr.mxu0 0.0
      %533 = vmatpush2.xpose.msra.mxu0 0.0
      %534 = vmatprep.mubr.f32.mxu0 0.0
      %535 = vmatmul.mubr.f32.gmra.mxu0 %v466
      %v536 = vpop.f32.mrf.mxu0
      %v537 = vadd.f32 0.0, %v536
      %v538 = vpop.f32.mrf.mxu0
      %539 = vdwg.mxu0
      %v540 = vmul.f32 %v537, 0.17677669
      %v541 = vsel %vm129, %v540, -1000000.0
      %v542 = vsel %vm209, %v541, -inf
      %543 = vmax.xlane.f32.xlu0 %v542
      %v544 = vpop.xlane.xlu0 %543
      %v545 = vsub.f32 %v541, %v544
      %v546 = vmul.f32 %v545, 1.442695
      %v547 = vpow.pop %v546
      %v548 = vsel %vm209, %v547, 0.0
      %549 = vadd.xlane.f32.xlu0 %v548
      %v550 = vpop.xlane.xlu0 %549
      %v551 = vrcp.pop %v550
      %v552 = vmul.f32 %v547, %v551
      %553 = vrot.lane.b32.xlu0 %v124, 64
      %v554 = vpop.permute.xlu0 %553
      %v557 = vsel %vm209, %v552, 0
      %559 = vmatprep.subr.mxu0 0.0
      %560 = vmatpush1.msra.mxu0 0.0
      %561 = vmatprep.subr.mxu0 0.0
      %562 = vmatpush1.msra.mxu0 0.0
      %563 = vmatprep.subr.mxu0 0.0
      %564 = vmatpush1.msra.mxu0 0.0
      %565 = vmatprep.subr.mxu0 0.0
      %566 = vmatpush1.msra.mxu0 0.0
      %567 = vmatprep.subr.mxu0 0.0
      %568 = vmatpush1.msra.mxu0 0.0
      %569 = vmatprep.subr.mxu0 0.0
      %570 = vmatpush1.msra.mxu0 0.0
      %571 = vmatprep.subr.mxu0 0.0
      %572 = vmatpush1.msra.mxu0 0.0
      %573 = vmatprep.subr.mxu0 0.0
      %574 = vmatpush1.msra.mxu0 0.0
      %575 = vmatprep.subr.mxu0 0.0
      %576 = vmatpush1.msra.mxu0 0.0
      %577 = vmatprep.subr.mxu0 0.0
      %578 = vmatpush1.msra.mxu0 0.0
      %579 = vmatprep.subr.mxu0 0.0
      %580 = vmatpush1.msra.mxu0 0.0
      %581 = vmatprep.subr.mxu0 0.0
      %582 = vmatpush1.msra.mxu0 0.0
      %583 = vmatprep.subr.mxu0 0.0
      %584 = vmatpush1.msra.mxu0 0.0
      %585 = vmatprep.subr.mxu0 0.0
      %586 = vmatpush1.msra.mxu0 0.0
      %587 = vmatprep.subr.mxu0 0.0
      %588 = vmatpush1.msra.mxu0 0.0
      %589 = vmatprep.subr.mxu0 0.0
      %590 = vmatpush1.msra.mxu0 %v554
      %591 = vmatprep.subr.mxu0 0.0
      %592 = vmatpush2.msra.mxu0 0.0
      %593 = vmatprep.subr.mxu0 0.0
      %594 = vmatpush2.msra.mxu0 0.0
      %595 = vmatprep.subr.mxu0 0.0
      %596 = vmatpush2.msra.mxu0 0.0
      %597 = vmatprep.subr.mxu0 0.0
      %598 = vmatpush2.msra.mxu0 0.0
      %599 = vmatprep.subr.mxu0 0.0
      %600 = vmatpush2.msra.mxu0 0.0
      %601 = vmatprep.subr.mxu0 0.0
      %602 = vmatpush2.msra.mxu0 0.0
      %603 = vmatprep.subr.mxu0 0.0
      %604 = vmatpush2.msra.mxu0 0.0
      %605 = vmatprep.subr.mxu0 0.0
      %606 = vmatpush2.msra.mxu0 0.0
      %607 = vmatprep.subr.mxu0 0.0
      %608 = vmatpush2.msra.mxu0 0.0
      %609 = vmatprep.subr.mxu0 0.0
      %610 = vmatpush2.msra.mxu0 0.0
      %611 = vmatprep.subr.mxu0 0.0
      %612 = vmatpush2.msra.mxu0 0.0
      %613 = vmatprep.subr.mxu0 0.0
      %614 = vmatpush2.msra.mxu0 0.0
      %615 = vmatprep.subr.mxu0 0.0
      %616 = vmatpush2.msra.mxu0 0.0
      %617 = vmatprep.subr.mxu0 0.0
      %618 = vmatpush2.msra.mxu0 0.0
      %619 = vmatprep.subr.mxu0 0.0
      %620 = vmatpush2.msra.mxu0 0.0
      %621 = vmatprep.subr.mxu0 0.0
      %622 = vmatpush2.msra.mxu0 0.0
      %623 = vmatprep.mubr.f32.mxu0 0.0
      %624 = vmatmul.mubr.f32.gmra.mxu0 %v557
      %v625 = vpop.f32.mrf.mxu0
      %v626 = vadd.f32 0.0, %v625
      %v627 = vpop.f32.mrf.mxu0
      %628 = vdwg.mxu0
      %629 = vrot.lane.b32.xlu0 %v122, 32
      %v630 = vpop.permute.xlu0 %629
      %631 = vrot.lane.b32.xlu0 %v123, 32
      %v632 = vpop.permute.xlu0 %631
      %v633 = vsel %vm130, %v630, 0
      %v635 = vsel %vm130, %v632, 0
      %637 = vmatprep.subr.mxu0 0.0
      %638 = vmatpush1.xpose.msra.mxu0 0.0
      %639 = vmatprep.subr.mxu0 0.0
      %640 = vmatpush1.xpose.msra.mxu0 0.0
      %641 = vmatprep.subr.mxu0 0.0
      %642 = vmatpush1.xpose.msra.mxu0 0.0
      %643 = vmatprep.subr.mxu0 0.0
      %644 = vmatpush1.xpose.msra.mxu0 0.0
      %645 = vmatprep.subr.mxu0 0.0
      %646 = vmatpush1.xpose.msra.mxu0 0.0
      %647 = vmatprep.subr.mxu0 0.0
      %648 = vmatpush1.xpose.msra.mxu0 0.0
      %649 = vmatprep.subr.mxu0 0.0
      %650 = vmatpush1.xpose.msra.mxu0 0.0
      %651 = vmatprep.subr.mxu0 0.0
      %652 = vmatpush1.xpose.msra.mxu0 0.0
      %653 = vmatprep.subr.mxu0 0.0
      %654 = vmatpush1.xpose.msra.mxu0 0.0
      %655 = vmatprep.subr.mxu0 0.0
      %656 = vmatpush1.xpose.msra.mxu0 0.0
      %657 = vmatprep.subr.mxu0 0.0
      %658 = vmatpush1.xpose.msra.mxu0 0.0
      %659 = vmatprep.subr.mxu0 0.0
      %660 = vmatpush1.xpose.msra.mxu0 0.0
      %661 = vmatprep.subr.mxu0 0.0
      %662 = vmatpush1.xpose.msra.mxu0 0.0
      %663 = vmatprep.subr.mxu0 0.0
      %664 = vmatpush1.xpose.msra.mxu0 0.0
      %665 = vmatprep.subr.mxu0 0.0
      %666 = vmatpush1.xpose.msra.mxu0 0.0
      %667 = vmatprep.subr.mxu0 0.0
      %668 = vmatpush1.xpose.msra.mxu0 %v635
      %669 = vmatprep.subr.mxu0 0.0
      %670 = vmatpush2.xpose.msra.mxu0 0.0
      %671 = vmatprep.subr.mxu0 0.0
      %672 = vmatpush2.xpose.msra.mxu0 0.0
      %673 = vmatprep.subr.mxu0 0.0
      %674 = vmatpush2.xpose.msra.mxu0 0.0
      %675 = vmatprep.subr.mxu0 0.0
      %676 = vmatpush2.xpose.msra.mxu0 0.0
      %677 = vmatprep.subr.mxu0 0.0
      %678 = vmatpush2.xpose.msra.mxu0 0.0
      %679 = vmatprep.subr.mxu0 0.0
      %680 = vmatpush2.xpose.msra.mxu0 0.0
      %681 = vmatprep.subr.mxu0 0.0
      %682 = vmatpush2.xpose.msra.mxu0 0.0
      %683 = vmatprep.subr.mxu0 0.0
      %684 = vmatpush2.xpose.msra.mxu0 0.0
      %685 = vmatprep.subr.mxu0 0.0
      %686 = vmatpush2.xpose.msra.mxu0 0.0
      %687 = vmatprep.subr.mxu0 0.0
      %688 = vmatpush2.xpose.msra.mxu0 0.0
      %689 = vmatprep.subr.mxu0 0.0
      %690 = vmatpush2.xpose.msra.mxu0 0.0
      %691 = vmatprep.subr.mxu0 0.0
      %692 = vmatpush2.xpose.msra.mxu0 0.0
      %693 = vmatprep.subr.mxu0 0.0
      %694 = vmatpush2.xpose.msra.mxu0 0.0
      %695 = vmatprep.subr.mxu0 0.0
      %696 = vmatpush2.xpose.msra.mxu0 0.0
      %697 = vmatprep.subr.mxu0 0.0
      %698 = vmatpush2.xpose.msra.mxu0 0.0
      %699 = vmatprep.subr.mxu0 0.0
      %700 = vmatpush2.xpose.msra.mxu0 0.0
      %701 = vmatprep.mubr.f32.mxu0 0.0
      %702 = vmatmul.mubr.f32.gmra.mxu0 %v633
      %v703 = vpop.f32.mrf.mxu0
      %v704 = vadd.f32 0.0, %v703
      %v705 = vpop.f32.mrf.mxu0
      %706 = vdwg.mxu0
      %v707 = vmul.f32 %v704, 0.17677669
      %v708 = vsel %vm129, %v707, -1000000.0
      %v709 = vsel %vm209, %v708, -inf
      %710 = vmax.xlane.f32.xlu0 %v709
      %v711 = vpop.xlane.xlu0 %710
      %v712 = vsub.f32 %v708, %v711
      %v713 = vmul.f32 %v712, 1.442695
      %v714 = vpow.pop %v713
      %v715 = vsel %vm209, %v714, 0.0
      %716 = vadd.xlane.f32.xlu0 %v715
      %v717 = vpop.xlane.xlu0 %716
      %v718 = vrcp.pop %v717
      %v719 = vmul.f32 %v714, %v718
      %720 = vrot.lane.b32.xlu0 %v124, 32
      %v721 = vpop.permute.xlu0 %720
      %v724 = vsel %vm209, %v719, 0
      %726 = vmatprep.subr.mxu0 0.0
      %727 = vmatpush1.msra.mxu0 0.0
      %728 = vmatprep.subr.mxu0 0.0
      %729 = vmatpush1.msra.mxu0 0.0
      %730 = vmatprep.subr.mxu0 0.0
      %731 = vmatpush1.msra.mxu0 0.0
      %732 = vmatprep.subr.mxu0 0.0
      %733 = vmatpush1.msra.mxu0 0.0
      %734 = vmatprep.subr.mxu0 0.0
      %735 = vmatpush1.msra.mxu0 0.0
      %736 = vmatprep.subr.mxu0 0.0
      %737 = vmatpush1.msra.mxu0 0.0
      %738 = vmatprep.subr.mxu0 0.0
      %739 = vmatpush1.msra.mxu0 0.0
      %740 = vmatprep.subr.mxu0 0.0
      %741 = vmatpush1.msra.mxu0 0.0
      %742 = vmatprep.subr.mxu0 0.0
      %743 = vmatpush1.msra.mxu0 0.0
      %744 = vmatprep.subr.mxu0 0.0
      %745 = vmatpush1.msra.mxu0 0.0
      %746 = vmatprep.subr.mxu0 0.0
      %747 = vmatpush1.msra.mxu0 0.0
      %748 = vmatprep.subr.mxu0 0.0
      %749 = vmatpush1.msra.mxu0 0.0
      %750 = vmatprep.subr.mxu0 0.0
      %751 = vmatpush1.msra.mxu0 0.0
      %752 = vmatprep.subr.mxu0 0.0
      %753 = vmatpush1.msra.mxu0 0.0
      %754 = vmatprep.subr.mxu0 0.0
      %755 = vmatpush1.msra.mxu0 0.0
      %756 = vmatprep.subr.mxu0 0.0
      %757 = vmatpush1.msra.mxu0 %v721
      %758 = vmatprep.subr.mxu0 0.0
      %759 = vmatpush2.msra.mxu0 0.0
      %760 = vmatprep.subr.mxu0 0.0
      %761 = vmatpush2.msra.mxu0 0.0
      %762 = vmatprep.subr.mxu0 0.0
      %763 = vmatpush2.msra.mxu0 0.0
      %764 = vmatprep.subr.mxu0 0.0
      %765 = vmatpush2.msra.mxu0 0.0
      %766 = vmatprep.subr.mxu0 0.0
      %767 = vmatpush2.msra.mxu0 0.0
      %768 = vmatprep.subr.mxu0 0.0
      %769 = vmatpush2.msra.mxu0 0.0
      %770 = vmatprep.subr.mxu0 0.0
      %771 = vmatpush2.msra.mxu0 0.0
      %772 = vmatprep.subr.mxu0 0.0
      %773 = vmatpush2.msra.mxu0 0.0
      %774 = vmatprep.subr.mxu0 0.0
      %775 = vmatpush2.msra.mxu0 0.0
      %776 = vmatprep.subr.mxu0 0.0
      %777 = vmatpush2.msra.mxu0 0.0
      %778 = vmatprep.subr.mxu0 0.0
      %779 = vmatpush2.msra.mxu0 0.0
      %780 = vmatprep.subr.mxu0 0.0
      %781 = vmatpush2.msra.mxu0 0.0
      %782 = vmatprep.subr.mxu0 0.0
      %783 = vmatpush2.msra.mxu0 0.0
      %784 = vmatprep.subr.mxu0 0.0
      %785 = vmatpush2.msra.mxu0 0.0
      %786 = vmatprep.subr.mxu0 0.0
      %787 = vmatpush2.msra.mxu0 0.0
      %788 = vmatprep.subr.mxu0 0.0
      %789 = vmatpush2.msra.mxu0 0.0
      %790 = vmatprep.mubr.f32.mxu0 0.0
      %791 = vmatmul.mubr.f32.gmra.mxu0 %v724
      %v792 = vpop.f32.mrf.mxu0
      %v793 = vadd.f32 0.0, %v792
      %v794 = vpop.f32.mrf.mxu0
      %795 = vdwg.mxu0
      %797 = vrot.lane.b32.xlu0 %v459, 32
      %v798 = vpop.permute.xlu0 %797
      %801 = vrot.lane.b32.xlu0 %v626, 64
      %v802 = vpop.permute.xlu0 %801
      %805 = vrot.lane.b32.xlu0 %v793, 96
      %v806 = vpop.permute.xlu0 %805
      %v808 = vsel %vm130, %v291, %v798
      %vm809 = vcmask 523264
      %v810 = vsel %vm809, %v808, %v802
      %vm811 = vcmask 785408
      %v812 = vsel %vm811, %v810, %v806
      %813 = vst [vmem:[%s121] sm:$0xff] %v812
      %p814 = scmp.lt.s32.totalorder %s19, 1
      %s815 = scalar_select %p814, %s19, 1
      %s816 = smul.addr %s815, 8
      %s817 = scalar_lea.vmem %s2, %s816
      // Predicated region
      $region25: #{encoder_forward.11} parent=23 // pred_check
        %p818 = pneg %p63
      $region26: #{encoder_forward.11} parent=23 // pred_check_branch
        %820 = sbr.rel (%p818) target = $region28
      $region27: #{encoder_forward.11} parent=23 // pred_region
        _
      $region28: #{encoder_forward.11} parent=23 // pred_fallthru
        _
    $region24: #{encoder_forward.11} parent=5 // pred_fallthru
      _
    %p821 = scmp.le.s32.totalorder 2, %s14
    // Predicated region
    $region29: #{encoder_forward.11} parent=5 // pred_check
      %p822 = pneg %p821
    $region30: #{encoder_forward.11} parent=5 // pred_check_branch
      %824 = sbr.rel (%p822) target = $region32
    $region31: #{encoder_forward.11} parent=5 // pred_region
      %s825 = ssub.s32 %s14, 2
      // Predicated region
      $region33: #{encoder_forward.11} parent=31 // pred_check
        %p826 = pneg %p69
      $region34: #{encoder_forward.11} parent=31 // pred_check_branch
        %828 = sbr.rel (%p826) target = $region36
      $region35: #{encoder_forward.11} parent=31 // pred_region
        %p829 = scmp.lt.s32.totalorder %s20, 1
        %s830 = scalar_select %p829, %s20, 1
        %s831 = smul.addr %s830, 8
        %s832 = scalar_lea.vmem %s2, %s831
      $region36: #{encoder_forward.11} parent=31 // pred_fallthru
        _
    $region32: #{encoder_forward.11} parent=5 // pred_fallthru
      _
  $region6: #{encoder_forward.11} parent=0 // loop_footer
    %s18 = sadd.s32 1, %s14
  $region7: #{encoder_forward.11} parent=0 // loop_footer_branch
    %13 = sbr.rel target = $region3
  $region8: #{encoder_forward.11} parent=0 // loop_exit
    _

// kernel: encoder_forward.13
$region0: #{encoder_forward.13}
  #allocation0 [shape = 'u32[]', space=smem, size = 0x4, offset = 0x4, fixed_abs, tag = 'smem constant byte address 0x4 - core index']
  #allocation1 [shape = 'u32[144,128]{1,0:T(1,128)}', space=vmem, size = 0x12000, scoped, tag = 'internal scratch']
  %s0 = inlined_call_operand.vmem [shape: f32[16,128], index: 0, kind: input, shape index: {}]
  %s1 = inlined_call_operand.vmem [shape: f32[128,256], index: 1, kind: input, shape index: {}]
  %s2 = inlined_call_operand.vmem [shape: f32[1,256], index: 2, kind: input, shape index: {}]
  %s3 = inlined_call_operand.vmem [shape: f32[256,128], index: 3, kind: input, shape index: {}]
  %s4 = inlined_call_operand.vmem [shape: f32[1,128], index: 4, kind: input, shape index: {}]
  %s5 = inlined_call_operand.vmem [shape: f32[1,128], index: 5, kind: input, shape index: {}]
  %s6 = inlined_call_operand.vmem [shape: f32[1,128], index: 6, kind: input, shape index: {}]
  %s7 = inlined_call_operand.vmem [shape: f32[16,128], index: 7, kind: output, shape index: {}]
  %s8 = sld [smem:[#allocation0]]
  $region61: #{encoder_forward.13} parent=0
    _
  %s10 = ssub.s32 1, %s8
  %s11 = scalar_select 0, %s10, %s8
  loop: start=0, step=1, limit=4
  $region2: #{encoder_forward.13} parent=0 // loop_pre_header
    _
  $region3: #{encoder_forward.13} parent=0 // loop_header
    %s13 = sphi 0, %s17
    %p14 = scmp.ge.s32.totalorder %s13, 4
    %s23 = sphi 0, %s25
    %s26 = sphi 0, %s23
    %s27 = sphi 0, %s26
    %s43 = sphi 0, %s27
    %s47 = sphi 0, %s47
    %s49 = sphi 0, %s47
    %s50 = sphi 0, %s49
    %s64 = sphi 0, %s50
    %s68 = sphi 0, %s68
    %s70 = sphi 0, %s68
    %s71 = sphi 0, %s70
    %s85 = sphi 0, %s71
    %s89 = sphi 0, %s89
    %s91 = sphi 0, %s89
    %s92 = sphi 0, %s91
    %s106 = sphi 0, %s92
    %s110 = sphi 0, %s110
    %s112 = sphi 0, %s110
    %s113 = sphi 0, %s112
    %s127 = sphi 0, %s113
    %s131 = sphi 0, %s131
    %s133 = sphi 0, %s131
    %s134 = sphi 0, %s133
    %s148 = sphi 0, %s134
    %s152 = sphi 0, %s152
    %s154 = sphi 0, %s152
    %s155 = sphi 0, %s154
    %s169 = sphi 0, %s155
    %s175 = sphi 0, %s177
    %s178 = sphi 0, %s175
    %s179 = sphi 0, %s178
    %s195 = sphi 0, %s179
  $region4: #{encoder_forward.13} parent=0 // loop_header_branch
    %16 = sbr.rel (%p14) target = $region8
  $region5: #{encoder_forward.13} parent=0 // loop_body
    %s18 = ssub.s32 %s13, 1
    %s19 = ssub.s32 %s13, 2
    %s20 = sadd.s32 %s13, 1
    %s21 = ssub.s32 %s13, %s20
    %p22 = scmp.eq.s32.totalorder %s21, 0
    %s24 = sadd.s32 %s23, 1
    %s25 = scalar_select %p22, %s23, %s24
    %p28 = pneg %p22
    %p29 = scmp.eq.s32.totalorder %s13, 1
    %p30 = por %p28, %p29
    %p31 = scmp.ne.s32.totalorder %s23, %s26
    %p32 = scmp.eq.s32.totalorder %s13, 0
    %p33 = por %p31, %p32
    %p34 = scmp.ne.s32.totalorder %s23, %s26
    %p35 = scmp.eq.s32.totalorder %s18, 1
    %p36 = por %p34, %p35
    %p37 = scmp.ne.s32.totalorder %s26, %s27
    %p38 = scmp.eq.s32.totalorder %s18, 0
    %p39 = por %p37, %p38
    %p40 = scmp.ne.s32.totalorder %s26, %s27
    %p41 = scmp.eq.s32.totalorder %s19, 1
    %p42 = por %p40, %p41
    %p44 = scmp.ne.s32.totalorder %s27, %s43
    %p45 = scmp.eq.s32.totalorder %s19, 0
    %p46 = por %p44, %p45
    %s48 = sadd.s32 %s47, 1
    %p51 = scmp.eq.s32.totalorder %s13, 1
    %p52 = scmp.ne.s32.totalorder %s47, %s49
    %p53 = scmp.eq.s32.totalorder %s13, 0
    %p54 = por %p52, %p53
    %p55 = scmp.ne.s32.totalorder %s47, %s49
    %p56 = scmp.eq.s32.totalorder %s18, 1
    %p57 = por %p55, %p56
    %p58 = scmp.ne.s32.totalorder %s49, %s50
    %p59 = scmp.eq.s32.totalorder %s18, 0
    %p60 = por %p58, %p59
    %p61 = scmp.ne.s32.totalorder %s49, %s50
    %p62 = scmp.eq.s32.totalorder %s19, 1
    %p63 = por %p61, %p62
    %p65 = scmp.ne.s32.totalorder %s50, %s64
    %p66 = scmp.eq.s32.totalorder %s19, 0
    %p67 = por %p65, %p66
    %s69 = sadd.s32 %s68, 1
    %p72 = scmp.eq.s32.totalorder %s13, 1
    %p73 = scmp.ne.s32.totalorder %s68, %s70
    %p74 = scmp.eq.s32.totalorder %s13, 0
    %p75 = por %p73, %p74
    %p76 = scmp.ne.s32.totalorder %s68, %s70
    %p77 = scmp.eq.s32.totalorder %s18, 1
    %p78 = por %p76, %p77
    %p79 = scmp.ne.s32.totalorder %s70, %s71
    %p80 = scmp.eq.s32.totalorder %s18, 0
    %p81 = por %p79, %p80
    %p82 = scmp.ne.s32.totalorder %s70, %s71
    %p83 = scmp.eq.s32.totalorder %s19, 1
    %p84 = por %p82, %p83
    %p86 = scmp.ne.s32.totalorder %s71, %s85
    %p87 = scmp.eq.s32.totalorder %s19, 0
    %p88 = por %p86, %p87
    %s90 = sadd.s32 %s89, 1
    %p93 = scmp.eq.s32.totalorder %s13, 1
    %p94 = scmp.ne.s32.totalorder %s89, %s91
    %p95 = scmp.eq.s32.totalorder %s13, 0
    %p96 = por %p94, %p95
    %p97 = scmp.ne.s32.totalorder %s89, %s91
    %p98 = scmp.eq.s32.totalorder %s18, 1
    %p99 = por %p97, %p98
    %p100 = scmp.ne.s32.totalorder %s91, %s92
    %p101 = scmp.eq.s32.totalorder %s18, 0
    %p102 = por %p100, %p101
    %p103 = scmp.ne.s32.totalorder %s91, %s92
    %p104 = scmp.eq.s32.totalorder %s19, 1
    %p105 = por %p103, %p104
    %p107 = scmp.ne.s32.totalorder %s92, %s106
    %p108 = scmp.eq.s32.totalorder %s19, 0
    %p109 = por %p107, %p108
    %s111 = sadd.s32 %s110, 1
    %p114 = scmp.eq.s32.totalorder %s13, 1
    %p115 = scmp.ne.s32.totalorder %s110, %s112
    %p116 = scmp.eq.s32.totalorder %s13, 0
    %p117 = por %p115, %p116
    %p118 = scmp.ne.s32.totalorder %s110, %s112
    %p119 = scmp.eq.s32.totalorder %s18, 1
    %p120 = por %p118, %p119
    %p121 = scmp.ne.s32.totalorder %s112, %s113
    %p122 = scmp.eq.s32.totalorder %s18, 0
    %p123 = por %p121, %p122
    %p124 = scmp.ne.s32.totalorder %s112, %s113
    %p125 = scmp.eq.s32.totalorder %s19, 1
    %p126 = por %p124, %p125
    %p128 = scmp.ne.s32.totalorder %s113, %s127
    %p129 = scmp.eq.s32.totalorder %s19, 0
    %p130 = por %p128, %p129
    %s132 = sadd.s32 %s131, 1
    %p135 = scmp.eq.s32.totalorder %s13, 1
    %p136 = scmp.ne.s32.totalorder %s131, %s133
    %p137 = scmp.eq.s32.totalorder %s13, 0
    %p138 = por %p136, %p137
    %p139 = scmp.ne.s32.totalorder %s131, %s133
    %p140 = scmp.eq.s32.totalorder %s18, 1
    %p141 = por %p139, %p140
    %p142 = scmp.ne.s32.totalorder %s133, %s134
    %p143 = scmp.eq.s32.totalorder %s18, 0
    %p144 = por %p142, %p143
    %p145 = scmp.ne.s32.totalorder %s133, %s134
    %p146 = scmp.eq.s32.totalorder %s19, 1
    %p147 = por %p145, %p146
    %p149 = scmp.ne.s32.totalorder %s134, %s148
    %p150 = scmp.eq.s32.totalorder %s19, 0
    %p151 = por %p149, %p150
    %s153 = sadd.s32 %s152, 1
    %p156 = scmp.eq.s32.totalorder %s13, 1
    %p157 = scmp.ne.s32.totalorder %s152, %s154
    %p158 = scmp.eq.s32.totalorder %s13, 0
    %p159 = por %p157, %p158
    %p160 = scmp.ne.s32.totalorder %s152, %s154
    %p161 = scmp.eq.s32.totalorder %s18, 1
    %p162 = por %p160, %p161
    %p163 = scmp.ne.s32.totalorder %s154, %s155
    %p164 = scmp.eq.s32.totalorder %s18, 0
    %p165 = por %p163, %p164
    %p166 = scmp.ne.s32.totalorder %s154, %s155
    %p167 = scmp.eq.s32.totalorder %s19, 1
    %p168 = por %p166, %p167
    %p170 = scmp.ne.s32.totalorder %s155, %s169
    %p171 = scmp.eq.s32.totalorder %s19, 0
    %p172 = por %p170, %p171
    %s173 = ssub.s32 %s13, %s20
    %p174 = scmp.eq.s32.totalorder %s173, 0
    %s176 = sadd.s32 %s175, 1
    %s177 = scalar_select %p174, %s175, %s176
    %p180 = pneg %p174
    %p181 = scmp.eq.s32.totalorder %s13, 1
    %p182 = por %p180, %p181
    %p183 = scmp.ne.s32.totalorder %s175, %s178
    %p184 = scmp.eq.s32.totalorder %s13, 0
    %p185 = por %p183, %p184
    %p186 = scmp.ne.s32.totalorder %s175, %s178
    %p187 = scmp.eq.s32.totalorder %s18, 1
    %p188 = por %p186, %p187
    %p189 = scmp.ne.s32.totalorder %s178, %s179
    %p190 = scmp.eq.s32.totalorder %s18, 0
    %p191 = por %p189, %p190
    %p192 = scmp.ne.s32.totalorder %s178, %s179
    %p193 = scmp.eq.s32.totalorder %s19, 1
    %p194 = por %p192, %p193
    %p196 = scmp.ne.s32.totalorder %s179, %s195
    %p197 = scmp.eq.s32.totalorder %s19, 0
    %p198 = por %p196, %p197
    %p199 = scmp.le.s32.totalorder 1, %s13
    %p200 = scmp.lt.s32.totalorder %s13, 3
    %p201 = pnand %p199, %p200
    %p202 = pneg %p201
    // Predicated region
    $region9: #{encoder_forward.13} parent=5 // pred_check
      _
    $region10: #{encoder_forward.13} parent=5 // pred_check_branch
      %204 = sbr.rel (%p201) target = $region12
    $region11: #{encoder_forward.13} parent=5 // pred_region
      %s205 = ssub.s32 %s13, 1
      // Predicated region
      $region13: #{encoder_forward.13} parent=11 // pred_check
        %p206 = pneg %p60
      $region14: #{encoder_forward.13} parent=11 // pred_check_branch
        %208 = sbr.rel (%p206) target = $region16
      $region15: #{encoder_forward.13} parent=11 // pred_region
        _
      $region16: #{encoder_forward.13} parent=11 // pred_fallthru
        _
      // Predicated region
      $region17: #{encoder_forward.13} parent=11 // pred_check
        %p209 = pneg %p81
      $region18: #{encoder_forward.13} parent=11 // pred_check_branch
        %211 = sbr.rel (%p209) target = $region20
      $region19: #{encoder_forward.13} parent=11 // pred_region
        _
      $region20: #{encoder_forward.13} parent=11 // pred_fallthru
        _
      // Predicated region
      $region21: #{encoder_forward.13} parent=11 // pred_check
        %p212 = pneg %p102
      $region22: #{encoder_forward.13} parent=11 // pred_check_branch
        %214 = sbr.rel (%p212) target = $region24
      $region23: #{encoder_forward.13} parent=11 // pred_region
        _
      $region24: #{encoder_forward.13} parent=11 // pred_fallthru
        _
      // Predicated region
      $region25: #{encoder_forward.13} parent=11 // pred_check
        %p215 = pneg %p123
      $region26: #{encoder_forward.13} parent=11 // pred_check_branch
        %217 = sbr.rel (%p215) target = $region28
      $region27: #{encoder_forward.13} parent=11 // pred_region
        _
      $region28: #{encoder_forward.13} parent=11 // pred_fallthru
        _
      // Predicated region
      $region29: #{encoder_forward.13} parent=11 // pred_check
        %p218 = pneg %p144
      $region30: #{encoder_forward.13} parent=11 // pred_check_branch
        %220 = sbr.rel (%p218) target = $region32
      $region31: #{encoder_forward.13} parent=11 // pred_region
        _
      $region32: #{encoder_forward.13} parent=11 // pred_fallthru
        _
      // Predicated region
      $region33: #{encoder_forward.13} parent=11 // pred_check
        %p221 = pneg %p165
      $region34: #{encoder_forward.13} parent=11 // pred_check_branch
        %223 = sbr.rel (%p221) target = $region36
      $region35: #{encoder_forward.13} parent=11 // pred_region
        _
      $region36: #{encoder_forward.13} parent=11 // pred_fallthru
        _
    $region12: #{encoder_forward.13} parent=5 // pred_fallthru
      _
    %p224 = scmp.lt.s32.totalorder %s13, 2
    // Predicated region
    $region37: #{encoder_forward.13} parent=5 // pred_check
      %p225 = pneg %p224
    $region38: #{encoder_forward.13} parent=5 // pred_check_branch
      %227 = sbr.rel (%p225) target = $region40
    $region39: #{encoder_forward.13} parent=5 // pred_region
      // Predicated region
      $region41: #{encoder_forward.13} parent=39 // pred_check
        %p228 = pneg %p33
      $region42: #{encoder_forward.13} parent=39 // pred_check_branch
        %230 = sbr.rel (%p228) target = $region44
      $region43: #{encoder_forward.13} parent=39 // pred_region
        %p231 = scmp.lt.s32.totalorder %s13, 1
        %s232 = scalar_select %p231, %s13, 1
        %s233 = smul.addr %s232, 8
        %s234 = scalar_lea.vmem %s0, %s233
      $region44: #{encoder_forward.13} parent=39 // pred_fallthru
        _
    $region40: #{encoder_forward.13} parent=5 // pred_fallthru
      _
    %p235 = scmp.le.s32.totalorder 1, %s13
    %p236 = scmp.lt.s32.totalorder %s13, 3
    %p237 = pnand %p235, %p236
    %p238 = pneg %p237
    // Predicated region
    $region45: #{encoder_forward.13} parent=5 // pred_check
      _
    $region46: #{encoder_forward.13} parent=5 // pred_check_branch
      %240 = sbr.rel (%p237) target = $region48
    $region47: #{encoder_forward.13} parent=5 // pred_region
      %s241 = ssub.s32 %s13, 1
      %p242 = scmp.lt.s32.totalorder %s18, 1
      %s243 = scalar_select %p242, %s18, 1
      %s244 = smul.addr %s243, 8
      %s245 = scalar_lea.vmem %s0, %s244
      %p246 = pneg %p39
      %p247 = pneg %p36
      %p248 = pneg %p60
      %p249 = pneg %p57
      %p250 = pneg %p81
      %p251 = pneg %p78
      %p252 = pneg %p102
      %p253 = pneg %p99
      %p254 = pneg %p123
      %p255 = pneg %p120
      %p256 = pneg %p144
      %p257 = pneg %p141
      %p258 = pneg %p165
      %p259 = pneg %p162
      %p260 = pneg %p191
      %p261 = pneg %p188
      %p262 = scmp.lt.s32.totalorder %s18, 1
      %s263 = scalar_select %p262, %s18, 1
      %s264 = smul.addr %s263, 8
      %s265 = scalar_lea.vmem %s7, %s264
      %p266 = scmp.lt.s32.totalorder %s18, 1
      %s267 = scalar_select %p266, %s18, 1
      %s268 = smul.addr %s267, 8
      %s269 = scalar_lea.vmem %s0, %s268
      %p270 = scmp.lt.s32.totalorder %s18, 1
      %s271 = scalar_select %p270, %s18, 1
      %s272 = smul.addr %s271, 8
      %s273 = scalar_lea.vmem %s7, %s272
      %v274 = vld [vmem:[%s269] sm:$0xff]
      %v275 = vld [vmem:[%s1] sm:$0xff]
      %v276 = vld [vmem:[%s1 + $0x8] sm:$0xff]
      %v277 = vld [vmem:[%s1 + $0x10] sm:$0xff]
      %v278 = vld [vmem:[%s1 + $0x18] sm:$0xff]
      %v279 = vld [vmem:[%s1 + $0x20] sm:$0xff]
      %v280 = vld [vmem:[%s1 + $0x28] sm:$0xff]
      %v281 = vld [vmem:[%s1 + $0x30] sm:$0xff]
      %v282 = vld [vmem:[%s1 + $0x38] sm:$0xff]
      %v283 = vld [vmem:[%s1 + $0x40] sm:$0xff]
      %v284 = vld [vmem:[%s1 + $0x48] sm:$0xff]
      %v285 = vld [vmem:[%s1 + $0x50] sm:$0xff]
      %v286 = vld [vmem:[%s1 + $0x58] sm:$0xff]
      %v287 = vld [vmem:[%s1 + $0x60] sm:$0xff]
      %v288 = vld [vmem:[%s1 + $0x68] sm:$0xff]
      %v289 = vld [vmem:[%s1 + $0x70] sm:$0xff]
      %v290 = vld [vmem:[%s1 + $0x78] sm:$0xff]
      %v291 = vld [vmem:[%s1 + $0x80] sm:$0xff]
      %v292 = vld [vmem:[%s1 + $0x88] sm:$0xff]
      %v293 = vld [vmem:[%s1 + $0x90] sm:$0xff]
      %v294 = vld [vmem:[%s1 + $0x98] sm:$0xff]
      %v295 = vld [vmem:[%s1 + $0xa0] sm:$0xff]
      %v296 = vld [vmem:[%s1 + $0xa8] sm:$0xff]
      %v297 = vld [vmem:[%s1 + $0xb0] sm:$0xff]
      %v298 = vld [vmem:[%s1 + $0xb8] sm:$0xff]
      %v299 = vld [vmem:[%s1 + $0xc0] sm:$0xff]
      %v300 = vld [vmem:[%s1 + $0xc8] sm:$0xff]
      %v301 = vld [vmem:[%s1 + $0xd0] sm:$0xff]
      %v302 = vld [vmem:[%s1 + $0xd8] sm:$0xff]
      %v303 = vld [vmem:[%s1 + $0xe0] sm:$0xff]
      %v304 = vld [vmem:[%s1 + $0xe8] sm:$0xff]
      %v305 = vld [vmem:[%s1 + $0xf0] sm:$0xff]
      %v306 = vld [vmem:[%s1 + $0xf8] sm:$0xff]
      %v307 = vld [vmem:[%s2] sm:$0x3]
      %v309 = vlaneseq
      %v310 = vshrl.u32 %v309, 7
      %v311 = vsub.s32 0, %v310
      %v312 = vrot.slane %v307, %v311
      %v313 = vlaneseq
      %v314 = vshrl.u32 %v313, 7
      %v315 = vsub.s32 1, %v314
      %v316 = vrot.slane %v307, %v315
      %319 = vmatprep.subr.mxu0 %v306
      %320 = vmatpush1.msra.mxu0 %v305
      %321 = vmatprep.subr.mxu0 %v304
      %322 = vmatpush1.msra.mxu0 %v303
      %323 = vmatprep.subr.mxu0 %v302
      %324 = vmatpush1.msra.mxu0 %v301
      %325 = vmatprep.subr.mxu0 %v300
      %326 = vmatpush1.msra.mxu0 %v299
      %327 = vmatprep.subr.mxu0 %v298
      %328 = vmatpush1.msra.mxu0 %v297
      %329 = vmatprep.subr.mxu0 %v296
      %330 = vmatpush1.msra.mxu0 %v295
      %331 = vmatprep.subr.mxu0 %v294
      %332 = vmatpush1.msra.mxu0 %v293
      %333 = vmatprep.subr.mxu0 %v292
      %334 = vmatpush1.msra.mxu0 %v291
      %335 = vmatprep.subr.mxu0 %v290
      %336 = vmatpush1.msra.mxu0 %v289
      %337 = vmatprep.subr.mxu0 %v288
      %338 = vmatpush1.msra.mxu0 %v287
      %339 = vmatprep.subr.mxu0 %v286
      %340 = vmatpush1.msra.mxu0 %v285
      %341 = vmatprep.subr.mxu0 %v284
      %342 = vmatpush1.msra.mxu0 %v283
      %343 = vmatprep.subr.mxu0 %v282
      %344 = vmatpush1.msra.mxu0 %v281
      %345 = vmatprep.subr.mxu0 %v280
      %346 = vmatpush1.msra.mxu0 %v279
      %347 = vmatprep.subr.mxu0 %v278
      %348 = vmatpush1.msra.mxu0 %v277
      %349 = vmatprep.subr.mxu0 %v276
      %350 = vmatpush1.msra.mxu0 %v275
      %351 = vmatprep.subr.mxu0 0.0
      %352 = vmatpush2.msra.mxu0 0.0
      %353 = vmatprep.subr.mxu0 0.0
      %354 = vmatpush2.msra.mxu0 0.0
      %355 = vmatprep.subr.mxu0 0.0
      %356 = vmatpush2.msra.mxu0 0.0
      %357 = vmatprep.subr.mxu0 0.0
      %358 = vmatpush2.msra.mxu0 0.0
      %359 = vmatprep.subr.mxu0 0.0
      %360 = vmatpush2.msra.mxu0 0.0
      %361 = vmatprep.subr.mxu0 0.0
      %362 = vmatpush2.msra.mxu0 0.0
      %363 = vmatprep.subr.mxu0 0.0
      %364 = vmatpush2.msra.mxu0 0.0
      %365 = vmatprep.subr.mxu0 0.0
      %366 = vmatpush2.msra.mxu0 0.0
      %367 = vmatprep.subr.mxu0 0.0
      %368 = vmatpush2.msra.mxu0 0.0
      %369 = vmatprep.subr.mxu0 0.0
      %370 = vmatpush2.msra.mxu0 0.0
      %371 = vmatprep.subr.mxu0 0.0
      %372 = vmatpush2.msra.mxu0 0.0
      %373 = vmatprep.subr.mxu0 0.0
      %374 = vmatpush2.msra.mxu0 0.0
      %375 = vmatprep.subr.mxu0 0.0
      %376 = vmatpush2.msra.mxu0 0.0
      %377 = vmatprep.subr.mxu0 0.0
      %378 = vmatpush2.msra.mxu0 0.0
      %379 = vmatprep.subr.mxu0 0.0
      %380 = vmatpush2.msra.mxu0 0.0
      %381 = vmatprep.subr.mxu0 0.0
      %382 = vmatpush2.msra.mxu0 0.0
      %383 = vmatprep.mubr.f32.mxu0 0.0
      %384 = vmatmul.mubr.f32.gmra.mxu0 %v274
      %v385 = vpop.f32.mrf.mxu0
      %v386 = vadd.f32 %v312, %v385
      %v387 = vpop.f32.mrf.mxu0
      %v388 = vadd.f32 %v316, %v387
      %389 = vdwg.mxu0
      %v390 = vmax.f32 %v386, 0.0
      %v391 = vmax.f32 %v388, 0.0
      %v392 = vld [vmem:[%s3] sm:$0xff]
      %v393 = vld [vmem:[%s3 + $0x8] sm:$0xff]
      %v394 = vld [vmem:[%s3 + $0x10] sm:$0xff]
      %v395 = vld [vmem:[%s3 + $0x18] sm:$0xff]
      %v396 = vld [vmem:[%s3 + $0x20] sm:$0xff]
      %v397 = vld [vmem:[%s3 + $0x28] sm:$0xff]
      %v398 = vld [vmem:[%s3 + $0x30] sm:$0xff]
      %v399 = vld [vmem:[%s3 + $0x38] sm:$0xff]
      %v400 = vld [vmem:[%s3 + $0x40] sm:$0xff]
      %v401 = vld [vmem:[%s3 + $0x48] sm:$0xff]
      %v402 = vld [vmem:[%s3 + $0x50] sm:$0xff]
      %v403 = vld [vmem:[%s3 + $0x58] sm:$0xff]
      %v404 = vld [vmem:[%s3 + $0x60] sm:$0xff]
      %v405 = vld [vmem:[%s3 + $0x68] sm:$0xff]
      %v406 = vld [vmem:[%s3 + $0x70] sm:$0xff]
      %v407 = vld [vmem:[%s3 + $0x78] sm:$0xff]
      %v408 = vld [vmem:[%s3 + $0x80] sm:$0xff]
      %v409 = vld [vmem:[%s3 + $0x88] sm:$0xff]
      %v410 = vld [vmem:[%s3 + $0x90] sm:$0xff]
      %v411 = vld [vmem:[%s3 + $0x98] sm:$0xff]
      %v412 = vld [vmem:[%s3 + $0xa0] sm:$0xff]
      %v413 = vld [vmem:[%s3 + $0xa8] sm:$0xff]
      %v414 = vld [vmem:[%s3 + $0xb0] sm:$0xff]
      %v415 = vld [vmem:[%s3 + $0xb8] sm:$0xff]
      %v416 = vld [vmem:[%s3 + $0xc0] sm:$0xff]
      %v417 = vld [vmem:[%s3 + $0xc8] sm:$0xff]
      %v418 = vld [vmem:[%s3 + $0xd0] sm:$0xff]
      %v419 = vld [vmem:[%s3 + $0xd8] sm:$0xff]
      %v420 = vld [vmem:[%s3 + $0xe0] sm:$0xff]
      %v421 = vld [vmem:[%s3 + $0xe8] sm:$0xff]
      %v422 = vld [vmem:[%s3 + $0xf0] sm:$0xff]
      %v423 = vld [vmem:[%s3 + $0xf8] sm:$0xff]
      %v424 = vld [vmem:[%s4] sm:$0x1]
      %v426 = vlaneseq
      %v427 = vshrl.u32 %v426, 7
      %v428 = vsub.s32 0, %v427
      %v429 = vrot.slane %v424, %v428
      %431 = vmatprep.subr.mxu0 0.0
      %432 = vmatpush1.msra.mxu0 %v407
      %433 = vmatprep.subr.mxu0 0.0
      %434 = vmatpush1.msra.mxu0 %v406
      %435 = vmatprep.subr.mxu0 0.0
      %436 = vmatpush1.msra.mxu0 %v405
      %437 = vmatprep.subr.mxu0 0.0
      %438 = vmatpush1.msra.mxu0 %v404
      %439 = vmatprep.subr.mxu0 0.0
      %440 = vmatpush1.msra.mxu0 %v403
      %441 = vmatprep.subr.mxu0 0.0
      %442 = vmatpush1.msra.mxu0 %v402
      %443 = vmatprep.subr.mxu0 0.0
      %444 = vmatpush1.msra.mxu0 %v401
      %445 = vmatprep.subr.mxu0 0.0
      %446 = vmatpush1.msra.mxu0 %v400
      %447 = vmatprep.subr.mxu0 0.0
      %448 = vmatpush1.msra.mxu0 %v399
      %449 = vmatprep.subr.mxu0 0.0
      %450 = vmatpush1.msra.mxu0 %v398
      %451 = vmatprep.subr.mxu0 0.0
      %452 = vmatpush1.msra.mxu0 %v397
      %453 = vmatprep.subr.mxu0 0.0
      %454 = vmatpush1.msra.mxu0 %v396
      %455 = vmatprep.subr.mxu0 0.0
      %456 = vmatpush1.msra.mxu0 %v395
      %457 = vmatprep.subr.mxu0 0.0
      %458 = vmatpush1.msra.mxu0 %v394
      %459 = vmatprep.subr.mxu0 0.0
      %460 = vmatpush1.msra.mxu0 %v393
      %461 = vmatprep.subr.mxu0 0.0
      %462 = vmatpush1.msra.mxu0 %v392
      %463 = vmatprep.subr.mxu0 0.0
      %464 = vmatpush2.msra.mxu0 %v423
      %465 = vmatprep.subr.mxu0 0.0
      %466 = vmatpush2.msra.mxu0 %v422
      %467 = vmatprep.subr.mxu0 0.0
      %468 = vmatpush2.msra.mxu0 %v421
      %469 = vmatprep.subr.mxu0 0.0
      %470 = vmatpush2.msra.mxu0 %v420
      %471 = vmatprep.subr.mxu0 0.0
      %472 = vmatpush2.msra.mxu0 %v419
      %473 = vmatprep.subr.mxu0 0.0
      %474 = vmatpush2.msra.mxu0 %v418
      %475 = vmatprep.subr.mxu0 0.0
      %476 = vmatpush2.msra.mxu0 %v417
      %477 = vmatprep.subr.mxu0 0.0
      %478 = vmatpush2.msra.mxu0 %v416
      %479 = vmatprep.subr.mxu0 0.0
      %480 = vmatpush2.msra.mxu0 %v415
      %481 = vmatprep.subr.mxu0 0.0
      %482 = vmatpush2.msra.mxu0 %v414
      %483 = vmatprep.subr.mxu0 0.0
      %484 = vmatpush2.msra.mxu0 %v413
      %485 = vmatprep.subr.mxu0 0.0
      %486 = vmatpush2.msra.mxu0 %v412
      %487 = vmatprep.subr.mxu0 0.0
      %488 = vmatpush2.msra.mxu0 %v411
      %489 = vmatprep.subr.mxu0 0.0
      %490 = vmatpush2.msra.mxu0 %v410
      %491 = vmatprep.subr.mxu0 0.0
      %492 = vmatpush2.msra.mxu0 %v409
      %493 = vmatprep.subr.mxu0 0.0
      %494 = vmatpush2.msra.mxu0 %v408
      %495 = vmatprep.mubr.f32.mxu0 %v391
      %496 = vmatmul.mubr.f32.gmra.mxu0 %v390
      %v497 = vpop.f32.mrf.mxu0
      %v498 = vadd.f32 %v429, %v497
      %v499 = vpop.f32.mrf.mxu0
      %500 = vdwg.mxu0
      %v501 = vadd.f32 %v274, %v498
      %v502 = vld [vmem:[%s5] sm:$0x1]
      %v503 = vld [vmem:[%s6] sm:$0x1]
      %504 = vadd.xlane.f32.xlu0 %v501
      %v505 = vpop.xlane.xlu0 %504
      %v506 = vrcp.pop 128.0
      %v507 = vmul.f32 %v505, %v506
      %v508 = vsub.f32 %v501, %v507
      %v509 = vmul.f32 %v508, %v508
      %510 = vadd.xlane.f32.xlu0 %v509
      %v511 = vpop.xlane.xlu0 %510
      %v512 = vmul.f32 %v511, %v506
      %v513 = vadd.f32 %v512, 1e-05
      %v514 = vrsqrt.pop %v513
      %v515 = vmul.f32 %v508, %v514
      %v517 = vlaneseq
      %v518 = vshrl.u32 %v517, 7
      %v519 = vsub.s32 0, %v518
      %v520 = vrot.slane %v502, %v519
      %v522 = vmul.f32 %v515, %v520
      %v524 = vlaneseq
      %v525 = vshrl.u32 %v524, 7
      %v526 = vsub.s32 0, %v525
      %v527 = vrot.slane %v503, %v526
      %v529 = vadd.f32 %v522, %v527
      %530 = vst [vmem:[%s273] sm:$0xff] %v529
      %p531 = scmp.lt.s32.totalorder %s18, 1
      %s532 = scalar_select %p531, %s18, 1
      %s533 = smul.addr %s532, 8
      %s534 = scalar_lea.vmem %s7, %s533
      // Predicated region
      $region49: #{encoder_forward.13} parent=47 // pred_check
        %p535 = pneg %p188
      $region50: #{encoder_forward.13} parent=47 // pred_check_branch
        %537 = sbr.rel (%p535) target = $region52
      $region51: #{encoder_forward.13} parent=47 // pred_region
        _
      $region52: #{encoder_forward.13} parent=47 // pred_fallthru
        _
    $region48: #{encoder_forward.13} parent=5 // pred_fallthru
      _
    %p538 = scmp.le.s32.totalorder 2, %s13
    // Predicated region
    $region53: #{encoder_forward.13} parent=5 // pred_check
      %p539 = pneg %p538
    $region54: #{encoder_forward.13} parent=5 // pred_check_branch
      %541 = sbr.rel (%p539) target = $region56
    $region55: #{encoder_forward.13} parent=5 // pred_region
      %s542 = ssub.s32 %s13, 2
      // Predicated region
      $region57: #{encoder_forward.13} parent=55 // pred_check
        %p543 = pneg %p194
      $region58: #{encoder_forward.13} parent=55 // pred_check_branch
        %545 = sbr.rel (%p543) target = $region60
      $region59: #{encoder_forward.13} parent=55 // pred_region
        %p546 = scmp.lt.s32.totalorder %s19, 1
        %s547 = scalar_select %p546, %s19, 1
        %s548 = smul.addr %s547, 8
        %s549 = scalar_lea.vmem %s7, %s548
      $region60: #{encoder_forward.13} parent=55 // pred_fallthru
        _
    $region56: #{encoder_forward.13} parent=5 // pred_fallthru
      _
  $region6: #{encoder_forward.13} parent=0 // loop_footer
    %s17 = sadd.s32 1, %s13
  $region7: #{encoder_forward.13} parent=0 // loop_footer_branch
    %12 = sbr.rel target = $region3
  $region8: #{encoder_forward.13} parent=0 // loop_exit
    _

// kernel: encoder_forward.17
$region0: #{encoder_forward.17}
  #allocation0 [shape = 'u32[]', space=smem, size = 0x4, offset = 0x4, fixed_abs, tag = 'smem constant byte address 0x4 - core index']
  #allocation1 [shape = 'u32[144,128]{1,0:T(1,128)}', space=vmem, size = 0x12000, scoped, tag = 'internal scratch']
  %s0 = inlined_call_operand.vmem [shape: f32[16,128], index: 0, kind: input, shape index: {}]
  %s1 = inlined_call_operand.vmem [shape: f32[128,256], index: 1, kind: input, shape index: {}]
  %s2 = inlined_call_operand.vmem [shape: f32[1,256], index: 2, kind: input, shape index: {}]
  %s3 = inlined_call_operand.vmem [shape: f32[256,128], index: 3, kind: input, shape index: {}]
  %s4 = inlined_call_operand.vmem [shape: f32[1,128], index: 4, kind: input, shape index: {}]
  %s5 = inlined_call_operand.vmem [shape: f32[1,128], index: 5, kind: input, shape index: {}]
  %s6 = inlined_call_operand.vmem [shape: f32[1,128], index: 6, kind: input, shape index: {}]
  %s7 = inlined_call_operand.hbm [shape: f32[16,128], index: 7, kind: output, shape index: {}]
  %s8 = sld [smem:[#allocation0]]
  $region61: #{encoder_forward.17} parent=0
    _
  %s10 = ssub.s32 1, %s8
  %s11 = scalar_select 0, %s10, %s8
  $region1: #{encoder_forward.17} parent=0
    #allocation2 [shape = 'u8[8192]{0}', space=vmem, size = 0x2000, scoped, tag = 'output window, operand 0']
    #allocation3 [shape = 's32[2]{0}', space=sflag, size = 0x8, scoped, tag = 'scoped memory for encoder_forward.17']
    %12 = vsyncpa [#allocation3], 0
    %s13 = scalar_lea.sflag [#allocation3], 1
    %14 = vsyncpa %s13, 0
    loop: start=0, step=1, limit=4
    $region2: #{encoder_forward.17} parent=1 // loop_pre_header
      _
    $region3: #{encoder_forward.17} parent=1 // loop_header
      %s16 = sphi 0, %s20
      %p17 = scmp.ge.s32.totalorder %s16, 4
      %s26 = sphi 0, %s28
      %s29 = sphi 0, %s26
      %s30 = sphi 0, %s29
      %s46 = sphi 0, %s30
      %s50 = sphi 0, %s50
      %s52 = sphi 0, %s50
      %s53 = sphi 0, %s52
      %s67 = sphi 0, %s53
      %s71 = sphi 0, %s71
      %s73 = sphi 0, %s71
      %s74 = sphi 0, %s73
      %s88 = sphi 0, %s74
      %s92 = sphi 0, %s92
      %s94 = sphi 0, %s92
      %s95 = sphi 0, %s94
      %s109 = sphi 0, %s95
      %s113 = sphi 0, %s113
      %s115 = sphi 0, %s113
      %s116 = sphi 0, %s115
      %s130 = sphi 0, %s116
      %s134 = sphi 0, %s134
      %s136 = sphi 0, %s134
      %s137 = sphi 0, %s136
      %s151 = sphi 0, %s137
      %s155 = sphi 0, %s155
      %s157 = sphi 0, %s155
      %s158 = sphi 0, %s157
      %s172 = sphi 0, %s158
      %s178 = sphi 0, %s180
      %s181 = sphi 0, %s178
      %s182 = sphi 0, %s181
      %s198 = sphi 0, %s182
    $region4: #{encoder_forward.17} parent=1 // loop_header_branch
      %19 = sbr.rel (%p17) target = $region8
    $region5: #{encoder_forward.17} parent=1 // loop_body
      %s21 = ssub.s32 %s16, 1
      %s22 = ssub.s32 %s16, 2
      %s23 = sadd.s32 %s16, 1
      %s24 = ssub.s32 %s16, %s23
      %p25 = scmp.eq.s32.totalorder %s24, 0
      %s27 = sadd.s32 %s26, 1
      %s28 = scalar_select %p25, %s26, %s27
      %p31 = pneg %p25
      %p32 = scmp.eq.s32.totalorder %s16, 1
      %p33 = por %p31, %p32
      %p34 = scmp.ne.s32.totalorder %s26, %s29
      %p35 = scmp.eq.s32.totalorder %s16, 0
      %p36 = por %p34, %p35
      %p37 = scmp.ne.s32.totalorder %s26, %s29
      %p38 = scmp.eq.s32.totalorder %s21, 1
      %p39 = por %p37, %p38
      %p40 = scmp.ne.s32.totalorder %s29, %s30
      %p41 = scmp.eq.s32.totalorder %s21, 0
      %p42 = por %p40, %p41
      %p43 = scmp.ne.s32.totalorder %s29, %s30
      %p44 = scmp.eq.s32.totalorder %s22, 1
      %p45 = por %p43, %p44
      %p47 = scmp.ne.s32.totalorder %s30, %s46
      %p48 = scmp.eq.s32.totalorder %s22, 0
      %p49 = por %p47, %p48
      %s51 = sadd.s32 %s50, 1
      %p54 = scmp.eq.s32.totalorder %s16, 1
      %p55 = scmp.ne.s32.totalorder %s50, %s52
      %p56 = scmp.eq.s32.totalorder %s16, 0
      %p57 = por %p55, %p56
      %p58 = scmp.ne.s32.totalorder %s50, %s52
      %p59 = scmp.eq.s32.totalorder %s21, 1
      %p60 = por %p58, %p59
      %p61 = scmp.ne.s32.totalorder %s52, %s53
      %p62 = scmp.eq.s32.totalorder %s21, 0
      %p63 = por %p61, %p62
      %p64 = scmp.ne.s32.totalorder %s52, %s53
      %p65 = scmp.eq.s32.totalorder %s22, 1
      %p66 = por %p64, %p65
      %p68 = scmp.ne.s32.totalorder %s53, %s67
      %p69 = scmp.eq.s32.totalorder %s22, 0
      %p70 = por %p68, %p69
      %s72 = sadd.s32 %s71, 1
      %p75 = scmp.eq.s32.totalorder %s16, 1
      %p76 = scmp.ne.s32.totalorder %s71, %s73
      %p77 = scmp.eq.s32.totalorder %s16, 0
      %p78 = por %p76, %p77
      %p79 = scmp.ne.s32.totalorder %s71, %s73
      %p80 = scmp.eq.s32.totalorder %s21, 1
      %p81 = por %p79, %p80
      %p82 = scmp.ne.s32.totalorder %s73, %s74
      %p83 = scmp.eq.s32.totalorder %s21, 0
      %p84 = por %p82, %p83
      %p85 = scmp.ne.s32.totalorder %s73, %s74
      %p86 = scmp.eq.s32.totalorder %s22, 1
      %p87 = por %p85, %p86
      %p89 = scmp.ne.s32.totalorder %s74, %s88
      %p90 = scmp.eq.s32.totalorder %s22, 0
      %p91 = por %p89, %p90
      %s93 = sadd.s32 %s92, 1
      %p96 = scmp.eq.s32.totalorder %s16, 1
      %p97 = scmp.ne.s32.totalorder %s92, %s94
      %p98 = scmp.eq.s32.totalorder %s16, 0
      %p99 = por %p97, %p98
      %p100 = scmp.ne.s32.totalorder %s92, %s94
      %p101 = scmp.eq.s32.totalorder %s21, 1
      %p102 = por %p100, %p101
      %p103 = scmp.ne.s32.totalorder %s94, %s95
      %p104 = scmp.eq.s32.totalorder %s21, 0
      %p105 = por %p103, %p104
      %p106 = scmp.ne.s32.totalorder %s94, %s95
      %p107 = scmp.eq.s32.totalorder %s22, 1
      %p108 = por %p106, %p107
      %p110 = scmp.ne.s32.totalorder %s95, %s109
      %p111 = scmp.eq.s32.totalorder %s22, 0
      %p112 = por %p110, %p111
      %s114 = sadd.s32 %s113, 1
      %p117 = scmp.eq.s32.totalorder %s16, 1
      %p118 = scmp.ne.s32.totalorder %s113, %s115
      %p119 = scmp.eq.s32.totalorder %s16, 0
      %p120 = por %p118, %p119
      %p121 = scmp.ne.s32.totalorder %s113, %s115
      %p122 = scmp.eq.s32.totalorder %s21, 1
      %p123 = por %p121, %p122
      %p124 = scmp.ne.s32.totalorder %s115, %s116
      %p125 = scmp.eq.s32.totalorder %s21, 0
      %p126 = por %p124, %p125
      %p127 = scmp.ne.s32.totalorder %s115, %s116
      %p128 = scmp.eq.s32.totalorder %s22, 1
      %p129 = por %p127, %p128
      %p131 = scmp.ne.s32.totalorder %s116, %s130
      %p132 = scmp.eq.s32.totalorder %s22, 0
      %p133 = por %p131, %p132
      %s135 = sadd.s32 %s134, 1
      %p138 = scmp.eq.s32.totalorder %s16, 1
      %p139 = scmp.ne.s32.totalorder %s134, %s136
      %p140 = scmp.eq.s32.totalorder %s16, 0
      %p141 = por %p139, %p140
      %p142 = scmp.ne.s32.totalorder %s134, %s136
      %p143 = scmp.eq.s32.totalorder %s21, 1
      %p144 = por %p142, %p143
      %p145 = scmp.ne.s32.totalorder %s136, %s137
      %p146 = scmp.eq.s32.totalorder %s21, 0
      %p147 = por %p145, %p146
      %p148 = scmp.ne.s32.totalorder %s136, %s137
      %p149 = scmp.eq.s32.totalorder %s22, 1
      %p150 = por %p148, %p149
      %p152 = scmp.ne.s32.totalorder %s137, %s151
      %p153 = scmp.eq.s32.totalorder %s22, 0
      %p154 = por %p152, %p153
      %s156 = sadd.s32 %s155, 1
      %p159 = scmp.eq.s32.totalorder %s16, 1
      %p160 = scmp.ne.s32.totalorder %s155, %s157
      %p161 = scmp.eq.s32.totalorder %s16, 0
      %p162 = por %p160, %p161
      %p163 = scmp.ne.s32.totalorder %s155, %s157
      %p164 = scmp.eq.s32.totalorder %s21, 1
      %p165 = por %p163, %p164
      %p166 = scmp.ne.s32.totalorder %s157, %s158
      %p167 = scmp.eq.s32.totalorder %s21, 0
      %p168 = por %p166, %p167
      %p169 = scmp.ne.s32.totalorder %s157, %s158
      %p170 = scmp.eq.s32.totalorder %s22, 1
      %p171 = por %p169, %p170
      %p173 = scmp.ne.s32.totalorder %s158, %s172
      %p174 = scmp.eq.s32.totalorder %s22, 0
      %p175 = por %p173, %p174
      %s176 = ssub.s32 %s16, %s23
      %p177 = scmp.eq.s32.totalorder %s176, 0
      %s179 = sadd.s32 %s178, 1
      %s180 = scalar_select %p177, %s178, %s179
      %p183 = pneg %p177
      %p184 = scmp.eq.s32.totalorder %s16, 1
      %p185 = por %p183, %p184
      %p186 = scmp.ne.s32.totalorder %s178, %s181
      %p187 = scmp.eq.s32.totalorder %s16, 0
      %p188 = por %p186, %p187
      %p189 = scmp.ne.s32.totalorder %s178, %s181
      %p190 = scmp.eq.s32.totalorder %s21, 1
      %p191 = por %p189, %p190
      %p192 = scmp.ne.s32.totalorder %s181, %s182
      %p193 = scmp.eq.s32.totalorder %s21, 0
      %p194 = por %p192, %p193
      %p195 = scmp.ne.s32.totalorder %s181, %s182
      %p196 = scmp.eq.s32.totalorder %s22, 1
      %p197 = por %p195, %p196
      %p199 = scmp.ne.s32.totalorder %s182, %s198
      %p200 = scmp.eq.s32.totalorder %s22, 0
      %p201 = por %p199, %p200
      %p202 = scmp.le.s32.totalorder 1, %s16
      %p203 = scmp.lt.s32.totalorder %s16, 3
      %p204 = pnand %p202, %p203
      %p205 = pneg %p204
      // Predicated region
      $region9: #{encoder_forward.17} parent=5 // pred_check
        _
      $region10: #{encoder_forward.17} parent=5 // pred_check_branch
        %207 = sbr.rel (%p204) target = $region12
      $region11: #{encoder_forward.17} parent=5 // pred_region
        %s208 = ssub.s32 %s16, 1
        // Predicated region
        $region13: #{encoder_forward.17} parent=11 // pred_check
          %p209 = pneg %p63
        $region14: #{encoder_forward.17} parent=11 // pred_check_branch
          %211 = sbr.rel (%p209) target = $region16
        $region15: #{encoder_forward.17} parent=11 // pred_region
          _
        $region16: #{encoder_forward.17} parent=11 // pred_fallthru
          _
        // Predicated region
        $region17: #{encoder_forward.17} parent=11 // pred_check
          %p212 = pneg %p84
        $region18: #{encoder_forward.17} parent=11 // pred_check_branch
          %214 = sbr.rel (%p212) target = $region20
        $region19: #{encoder_forward.17} parent=11 // pred_region
          _
        $region20: #{encoder_forward.17} parent=11 // pred_fallthru
          _
        // Predicated region
        $region21: #{encoder_forward.17} parent=11 // pred_check
          %p215 = pneg %p105
        $region22: #{encoder_forward.17} parent=11 // pred_check_branch
          %217 = sbr.rel (%p215) target = $region24
        $region23: #{encoder_forward.17} parent=11 // pred_region
          _
        $region24: #{encoder_forward.17} parent=11 // pred_fallthru
          _
        // Predicated region
        $region25: #{encoder_forward.17} parent=11 // pred_check
          %p218 = pneg %p126
        $region26: #{encoder_forward.17} parent=11 // pred_check_branch
          %220 = sbr.rel (%p218) target = $region28
        $region27: #{encoder_forward.17} parent=11 // pred_region
          _
        $region28: #{encoder_forward.17} parent=11 // pred_fallthru
          _
        // Predicated region
        $region29: #{encoder_forward.17} parent=11 // pred_check
          %p221 = pneg %p147
        $region30: #{encoder_forward.17} parent=11 // pred_check_branch
          %223 = sbr.rel (%p221) target = $region32
        $region31: #{encoder_forward.17} parent=11 // pred_region
          _
        $region32: #{encoder_forward.17} parent=11 // pred_fallthru
          _
        // Predicated region
        $region33: #{encoder_forward.17} parent=11 // pred_check
          %p224 = pneg %p168
        $region34: #{encoder_forward.17} parent=11 // pred_check_branch
          %226 = sbr.rel (%p224) target = $region36
        $region35: #{encoder_forward.17} parent=11 // pred_region
          _
        $region36: #{encoder_forward.17} parent=11 // pred_fallthru
          _
      $region12: #{encoder_forward.17} parent=5 // pred_fallthru
        _
      %p227 = scmp.lt.s32.totalorder %s16, 2
      // Predicated region
      $region37: #{encoder_forward.17} parent=5 // pred_check
        %p228 = pneg %p227
      $region38: #{encoder_forward.17} parent=5 // pred_check_branch
        %230 = sbr.rel (%p228) target = $region40
      $region39: #{encoder_forward.17} parent=5 // pred_region
        // Predicated region
        $region41: #{encoder_forward.17} parent=39 // pred_check
          %p231 = pneg %p36
        $region42: #{encoder_forward.17} parent=39 // pred_check_branch
          %233 = sbr.rel (%p231) target = $region44
        $region43: #{encoder_forward.17} parent=39 // pred_region
          %p234 = scmp.lt.s32.totalorder %s16, 1
          %s235 = scalar_select %p234, %s16, 1
          %s236 = smul.addr %s235, 8
          %s237 = scalar_lea.vmem %s0, %s236
        $region44: #{encoder_forward.17} parent=39 // pred_fallthru
          _
      $region40: #{encoder_forward.17} parent=5 // pred_fallthru
        _
      %p238 = scmp.le.s32.totalorder 1, %s16
      %p239 = scmp.lt.s32.totalorder %s16, 3
      %p240 = pnand %p238, %p239
      %p241 = pneg %p240
      // Predicated region
      $region45: #{encoder_forward.17} parent=5 // pred_check
        _
      $region46: #{encoder_forward.17} parent=5 // pred_check_branch
        %243 = sbr.rel (%p240) target = $region48
      $region47: #{encoder_forward.17} parent=5 // pred_region
        %s244 = ssub.s32 %s16, 1
        %p245 = scmp.lt.s32.totalorder %s21, 1
        %s246 = scalar_select %p245, %s21, 1
        %s247 = smul.addr %s246, 8
        %s248 = scalar_lea.vmem %s0, %s247
        %p249 = pneg %p42
        %p250 = pneg %p39
        %p251 = pneg %p63
        %p252 = pneg %p60
        %p253 = pneg %p84
        %p254 = pneg %p81
        %p255 = pneg %p105
        %p256 = pneg %p102
        %p257 = pneg %p126
        %p258 = pneg %p123
        %p259 = pneg %p147
        %p260 = pneg %p144
        %p261 = pneg %p168
        %p262 = pneg %p165
        %p263 = pneg %p194
        %p264 = pneg %p191
        %s265 = sand.u32 %s181, 1
        %s266 = scalar_lea.sflag [#allocation3], %s265
        %s267 = sand.u32 %s181, 1
        %s268 = smul.addr %s267, 8
        %s269 = scalar_lea.vmem [#allocation2], %s268
        %p270 = scmp.lt.s32.totalorder %s21, 1
        %s271 = scalar_select %p270, %s21, 1
        %s272 = smul.addr %s271, 8
        %s273 = scalar_lea.vmem %s0, %s272
        %v274 = vld [vmem:[%s273] sm:$0xff]
        %v275 = vld [vmem:[%s1] sm:$0xff]
        %v276 = vld [vmem:[%s1 + $0x8] sm:$0xff]
        %v277 = vld [vmem:[%s1 + $0x10] sm:$0xff]
        %v278 = vld [vmem:[%s1 + $0x18] sm:$0xff]
        %v279 = vld [vmem:[%s1 + $0x20] sm:$0xff]
        %v280 = vld [vmem:[%s1 + $0x28] sm:$0xff]
        %v281 = vld [vmem:[%s1 + $0x30] sm:$0xff]
        %v282 = vld [vmem:[%s1 + $0x38] sm:$0xff]
        %v283 = vld [vmem:[%s1 + $0x40] sm:$0xff]
        %v284 = vld [vmem:[%s1 + $0x48] sm:$0xff]
        %v285 = vld [vmem:[%s1 + $0x50] sm:$0xff]
        %v286 = vld [vmem:[%s1 + $0x58] sm:$0xff]
        %v287 = vld [vmem:[%s1 + $0x60] sm:$0xff]
        %v288 = vld [vmem:[%s1 + $0x68] sm:$0xff]
        %v289 = vld [vmem:[%s1 + $0x70] sm:$0xff]
        %v290 = vld [vmem:[%s1 + $0x78] sm:$0xff]
        %v291 = vld [vmem:[%s1 + $0x80] sm:$0xff]
        %v292 = vld [vmem:[%s1 + $0x88] sm:$0xff]
        %v293 = vld [vmem:[%s1 + $0x90] sm:$0xff]
        %v294 = vld [vmem:[%s1 + $0x98] sm:$0xff]
        %v295 = vld [vmem:[%s1 + $0xa0] sm:$0xff]
        %v296 = vld [vmem:[%s1 + $0xa8] sm:$0xff]
        %v297 = vld [vmem:[%s1 + $0xb0] sm:$0xff]
        %v298 = vld [vmem:[%s1 + $0xb8] sm:$0xff]
        %v299 = vld [vmem:[%s1 + $0xc0] sm:$0xff]
        %v300 = vld [vmem:[%s1 + $0xc8] sm:$0xff]
        %v301 = vld [vmem:[%s1 + $0xd0] sm:$0xff]
        %v302 = vld [vmem:[%s1 + $0xd8] sm:$0xff]
        %v303 = vld [vmem:[%s1 + $0xe0] sm:$0xff]
        %v304 = vld [vmem:[%s1 + $0xe8] sm:$0xff]
        %v305 = vld [vmem:[%s1 + $0xf0] sm:$0xff]
        %v306 = vld [vmem:[%s1 + $0xf8] sm:$0xff]
        %v307 = vld [vmem:[%s2] sm:$0x3]
        %v309 = vlaneseq
        %v310 = vshrl.u32 %v309, 7
        %v311 = vsub.s32 0, %v310
        %v312 = vrot.slane %v307, %v311
        %v313 = vlaneseq
        %v314 = vshrl.u32 %v313, 7
        %v315 = vsub.s32 1, %v314
        %v316 = vrot.slane %v307, %v315
        %319 = vmatprep.subr.mxu0 %v306
        %320 = vmatpush1.msra.mxu0 %v305
        %321 = vmatprep.subr.mxu0 %v304
        %322 = vmatpush1.msra.mxu0 %v303
        %323 = vmatprep.subr.mxu0 %v302
        %324 = vmatpush1.msra.mxu0 %v301
        %325 = vmatprep.subr.mxu0 %v300
        %326 = vmatpush1.msra.mxu0 %v299
        %327 = vmatprep.subr.mxu0 %v298
        %328 = vmatpush1.msra.mxu0 %v297
        %329 = vmatprep.subr.mxu0 %v296
        %330 = vmatpush1.msra.mxu0 %v295
        %331 = vmatprep.subr.mxu0 %v294
        %332 = vmatpush1.msra.mxu0 %v293
        %333 = vmatprep.subr.mxu0 %v292
        %334 = vmatpush1.msra.mxu0 %v291
        %335 = vmatprep.subr.mxu0 %v290
        %336 = vmatpush1.msra.mxu0 %v289
        %337 = vmatprep.subr.mxu0 %v288
        %338 = vmatpush1.msra.mxu0 %v287
        %339 = vmatprep.subr.mxu0 %v286
        %340 = vmatpush1.msra.mxu0 %v285
        %341 = vmatprep.subr.mxu0 %v284
        %342 = vmatpush1.msra.mxu0 %v283
        %343 = vmatprep.subr.mxu0 %v282
        %344 = vmatpush1.msra.mxu0 %v281
        %345 = vmatprep.subr.mxu0 %v280
        %346 = vmatpush1.msra.mxu0 %v279
        %347 = vmatprep.subr.mxu0 %v278
        %348 = vmatpush1.msra.mxu0 %v277
        %349 = vmatprep.subr.mxu0 %v276
        %350 = vmatpush1.msra.mxu0 %v275
        %351 = vmatprep.subr.mxu0 0.0
        %352 = vmatpush2.msra.mxu0 0.0
        %353 = vmatprep.subr.mxu0 0.0
        %354 = vmatpush2.msra.mxu0 0.0
        %355 = vmatprep.subr.mxu0 0.0
        %356 = vmatpush2.msra.mxu0 0.0
        %357 = vmatprep.subr.mxu0 0.0
        %358 = vmatpush2.msra.mxu0 0.0
        %359 = vmatprep.subr.mxu0 0.0
        %360 = vmatpush2.msra.mxu0 0.0
        %361 = vmatprep.subr.mxu0 0.0
        %362 = vmatpush2.msra.mxu0 0.0
        %363 = vmatprep.subr.mxu0 0.0
        %364 = vmatpush2.msra.mxu0 0.0
        %365 = vmatprep.subr.mxu0 0.0
        %366 = vmatpush2.msra.mxu0 0.0
        %367 = vmatprep.subr.mxu0 0.0
        %368 = vmatpush2.msra.mxu0 0.0
        %369 = vmatprep.subr.mxu0 0.0
        %370 = vmatpush2.msra.mxu0 0.0
        %371 = vmatprep.subr.mxu0 0.0
        %372 = vmatpush2.msra.mxu0 0.0
        %373 = vmatprep.subr.mxu0 0.0
        %374 = vmatpush2.msra.mxu0 0.0
        %375 = vmatprep.subr.mxu0 0.0
        %376 = vmatpush2.msra.mxu0 0.0
        %377 = vmatprep.subr.mxu0 0.0
        %378 = vmatpush2.msra.mxu0 0.0
        %379 = vmatprep.subr.mxu0 0.0
        %380 = vmatpush2.msra.mxu0 0.0
        %381 = vmatprep.subr.mxu0 0.0
        %382 = vmatpush2.msra.mxu0 0.0
        %383 = vmatprep.mubr.f32.mxu0 0.0
        %384 = vmatmul.mubr.f32.gmra.mxu0 %v274
        %v385 = vpop.f32.mrf.mxu0
        %v386 = vadd.f32 %v312, %v385
        %v387 = vpop.f32.mrf.mxu0
        %v388 = vadd.f32 %v316, %v387
        %389 = vdwg.mxu0
        %v390 = vmax.f32 %v386, 0.0
        %v391 = vmax.f32 %v388, 0.0
        %v392 = vld [vmem:[%s3] sm:$0xff]
        %v393 = vld [vmem:[%s3 + $0x8] sm:$0xff]
        %v394 = vld [vmem:[%s3 + $0x10] sm:$0xff]
        %v395 = vld [vmem:[%s3 + $0x18] sm:$0xff]
        %v396 = vld [vmem:[%s3 + $0x20] sm:$0xff]
        %v397 = vld [vmem:[%s3 + $0x28] sm:$0xff]
        %v398 = vld [vmem:[%s3 + $0x30] sm:$0xff]
        %v399 = vld [vmem:[%s3 + $0x38] sm:$0xff]
        %v400 = vld [vmem:[%s3 + $0x40] sm:$0xff]
        %v401 = vld [vmem:[%s3 + $0x48] sm:$0xff]
        %v402 = vld [vmem:[%s3 + $0x50] sm:$0xff]
        %v403 = vld [vmem:[%s3 + $0x58] sm:$0xff]
        %v404 = vld [vmem:[%s3 + $0x60] sm:$0xff]
        %v405 = vld [vmem:[%s3 + $0x68] sm:$0xff]
        %v406 = vld [vmem:[%s3 + $0x70] sm:$0xff]
        %v407 = vld [vmem:[%s3 + $0x78] sm:$0xff]
        %v408 = vld [vmem:[%s3 + $0x80] sm:$0xff]
        %v409 = vld [vmem:[%s3 + $0x88] sm:$0xff]
        %v410 = vld [vmem:[%s3 + $0x90] sm:$0xff]
        %v411 = vld [vmem:[%s3 + $0x98] sm:$0xff]
        %v412 = vld [vmem:[%s3 + $0xa0] sm:$0xff]
        %v413 = vld [vmem:[%s3 + $0xa8] sm:$0xff]
        %v414 = vld [vmem:[%s3 + $0xb0] sm:$0xff]
        %v415 = vld [vmem:[%s3 + $0xb8] sm:$0xff]
        %v416 = vld [vmem:[%s3 + $0xc0] sm:$0xff]
        %v417 = vld [vmem:[%s3 + $0xc8] sm:$0xff]
        %v418 = vld [vmem:[%s3 + $0xd0] sm:$0xff]
        %v419 = vld [vmem:[%s3 + $0xd8] sm:$0xff]
        %v420 = vld [vmem:[%s3 + $0xe0] sm:$0xff]
        %v421 = vld [vmem:[%s3 + $0xe8] sm:$0xff]
        %v422 = vld [vmem:[%s3 + $0xf0] sm:$0xff]
        %v423 = vld [vmem:[%s3 + $0xf8] sm:$0xff]
        %v424 = vld [vmem:[%s4] sm:$0x1]
        %v426 = vlaneseq
        %v427 = vshrl.u32 %v426, 7
        %v428 = vsub.s32 0, %v427
        %v429 = vrot.slane %v424, %v428
        %431 = vmatprep.subr.mxu0 0.0
        %432 = vmatpush1.msra.mxu0 %v407
        %433 = vmatprep.subr.mxu0 0.0
        %434 = vmatpush1.msra.mxu0 %v406
        %435 = vmatprep.subr.mxu0 0.0
        %436 = vmatpush1.msra.mxu0 %v405
        %437 = vmatprep.subr.mxu0 0.0
        %438 = vmatpush1.msra.mxu0 %v404
        %439 = vmatprep.subr.mxu0 0.0
        %440 = vmatpush1.msra.mxu0 %v403
        %441 = vmatprep.subr.mxu0 0.0
        %442 = vmatpush1.msra.mxu0 %v402
        %443 = vmatprep.subr.mxu0 0.0
        %444 = vmatpush1.msra.mxu0 %v401
        %445 = vmatprep.subr.mxu0 0.0
        %446 = vmatpush1.msra.mxu0 %v400
        %447 = vmatprep.subr.mxu0 0.0
        %448 = vmatpush1.msra.mxu0 %v399
        %449 = vmatprep.subr.mxu0 0.0
        %450 = vmatpush1.msra.mxu0 %v398
        %451 = vmatprep.subr.mxu0 0.0
        %452 = vmatpush1.msra.mxu0 %v397
        %453 = vmatprep.subr.mxu0 0.0
        %454 = vmatpush1.msra.mxu0 %v396
        %455 = vmatprep.subr.mxu0 0.0
        %456 = vmatpush1.msra.mxu0 %v395
        %457 = vmatprep.subr.mxu0 0.0
        %458 = vmatpush1.msra.mxu0 %v394
        %459 = vmatprep.subr.mxu0 0.0
        %460 = vmatpush1.msra.mxu0 %v393
        %461 = vmatprep.subr.mxu0 0.0
        %462 = vmatpush1.msra.mxu0 %v392
        %463 = vmatprep.subr.mxu0 0.0
        %464 = vmatpush2.msra.mxu0 %v423
        %465 = vmatprep.subr.mxu0 0.0
        %466 = vmatpush2.msra.mxu0 %v422
        %467 = vmatprep.subr.mxu0 0.0
        %468 = vmatpush2.msra.mxu0 %v421
        %469 = vmatprep.subr.mxu0 0.0
        %470 = vmatpush2.msra.mxu0 %v420
        %471 = vmatprep.subr.mxu0 0.0
        %472 = vmatpush2.msra.mxu0 %v419
        %473 = vmatprep.subr.mxu0 0.0
        %474 = vmatpush2.msra.mxu0 %v418
        %475 = vmatprep.subr.mxu0 0.0
        %476 = vmatpush2.msra.mxu0 %v417
        %477 = vmatprep.subr.mxu0 0.0
        %478 = vmatpush2.msra.mxu0 %v416
        %479 = vmatprep.subr.mxu0 0.0
        %480 = vmatpush2.msra.mxu0 %v415
        %481 = vmatprep.subr.mxu0 0.0
        %482 = vmatpush2.msra.mxu0 %v414
        %483 = vmatprep.subr.mxu0 0.0
        %484 = vmatpush2.msra.mxu0 %v413
        %485 = vmatprep.subr.mxu0 0.0
        %486 = vmatpush2.msra.mxu0 %v412
        %487 = vmatprep.subr.mxu0 0.0
        %488 = vmatpush2.msra.mxu0 %v411
        %489 = vmatprep.subr.mxu0 0.0
        %490 = vmatpush2.msra.mxu0 %v410
        %491 = vmatprep.subr.mxu0 0.0
        %492 = vmatpush2.msra.mxu0 %v409
        %493 = vmatprep.subr.mxu0 0.0
        %494 = vmatpush2.msra.mxu0 %v408
        %495 = vmatprep.mubr.f32.mxu0 %v391
        %496 = vmatmul.mubr.f32.gmra.mxu0 %v390
        %v497 = vpop.f32.mrf.mxu0
        %v498 = vadd.f32 %v429, %v497
        %v499 = vpop.f32.mrf.mxu0
        %500 = vdwg.mxu0
        %v501 = vadd.f32 %v274, %v498
        %v502 = vld [vmem:[%s5] sm:$0x1]
        %v503 = vld [vmem:[%s6] sm:$0x1]
        %504 = vadd.xlane.f32.xlu0 %v501
        %v505 = vpop.xlane.xlu0 %504
        %v506 = vrcp.pop 128.0
        %v507 = vmul.f32 %v505, %v506
        %v508 = vsub.f32 %v501, %v507
        %v509 = vmul.f32 %v508, %v508
        %510 = vadd.xlane.f32.xlu0 %v509
        %v511 = vpop.xlane.xlu0 %510
        %v512 = vmul.f32 %v511, %v506
        %v513 = vadd.f32 %v512, 1e-05
        %v514 = vrsqrt.pop %v513
        %v515 = vmul.f32 %v508, %v514
        %v517 = vlaneseq
        %v518 = vshrl.u32 %v517, 7
        %v519 = vsub.s32 0, %v518
        %v520 = vrot.slane %v502, %v519
        %v522 = vmul.f32 %v515, %v520
        %v524 = vlaneseq
        %v525 = vshrl.u32 %v524, 7
        %v526 = vsub.s32 0, %v525
        %v527 = vrot.slane %v503, %v526
        %v529 = vadd.f32 %v522, %v527
        %530 = vst [vmem:[%s269] sm:$0xff] %v529
        %s531 = sand.u32 %s181, 1
        %s532 = scalar_lea.sflag [#allocation3], %s531
        %s533 = sand.u32 %s181, 1
        %s534 = smul.addr %s533, 8
        %s535 = scalar_lea.vmem [#allocation2], %s534
        // Predicated region
        $region49: #{encoder_forward.17} parent=47 // pred_check
          %p536 = pneg %p191
        $region50: #{encoder_forward.17} parent=47 // pred_check_branch
          %538 = sbr.rel (%p536) target = $region52
        $region51: #{encoder_forward.17} parent=47 // pred_region
          %s540 = ssub.s32 128, 128
          %541 = vsyncadd %s532, %s540
          %s542 = smul.addr %s21, 128
          %s543 = scalar_lea.hbm %s7, %s542
          %s545 = sshll.u32 %s535, 4
          %s546 = int_to_ptr.vmem [resolvable:$true] %s545
          %548 = dma.vmem_to_hbm [thread:$0]  %s546, 128, %s543, %s532
        $region52: #{encoder_forward.17} parent=47 // pred_fallthru
          _
      $region48: #{encoder_forward.17} parent=5 // pred_fallthru
        _
      %p549 = scmp.le.s32.totalorder 2, %s16
      // Predicated region
      $region53: #{encoder_forward.17} parent=5 // pred_check
        %p550 = pneg %p549
      $region54: #{encoder_forward.17} parent=5 // pred_check_branch
        %552 = sbr.rel (%p550) target = $region56
      $region55: #{encoder_forward.17} parent=5 // pred_region
        %s553 = ssub.s32 %s16, 2
        // Predicated region
        $region57: #{encoder_forward.17} parent=55 // pred_check
          %p554 = pneg %p197
        $region58: #{encoder_forward.17} parent=55 // pred_check_branch
          %556 = sbr.rel (%p554) target = $region60
        $region59: #{encoder_forward.17} parent=55 // pred_region
          %s557 = sand.u32 %s182, 1
          %s558 = scalar_lea.sflag [#allocation3], %s557
          %s559 = sand.u32 %s182, 1
          %s560 = smul.addr %s559, 8
          %s561 = scalar_lea.vmem [#allocation2], %s560
          %562 = dma.done %s558, 128
        $region60: #{encoder_forward.17} parent=55 // pred_fallthru
          _
      $region56: #{encoder_forward.17} parent=5 // pred_fallthru
        _
    $region6: #{encoder_forward.17} parent=1 // loop_footer
      %s20 = sadd.s32 1, %s16
    $region7: #{encoder_forward.17} parent=1 // loop_footer_branch
      %15 = sbr.rel target = $region3
    $region8: #{encoder_forward.17} parent=1 // loop_exit
      _
    %563 = vsyncpa [#allocation3], 1
    %s564 = scalar_lea.sflag [#allocation3], 1
    %565 = vsyncpa %s564, 1

</llo_original>
